<compile_context>
chip_gen: v5e
topology: v5e:2x2
jax: 0.10.0
libtpu: 0.0.40
codegen_flags: <defaults>
</compile_context>

<pallas_src>
import math
from functools import partial

import jax
import jax.numpy as jnp
from jax.experimental import pallas as pl
from jax.experimental.pallas import tpu as pltpu

EPS = 1e-5
_VMEM_LIMIT = 32 * 1024 * 1024  # within scoped-VMEM budgets of v5e/v6e/v7x


def _compiler_params():
    return pltpu.CompilerParams(
        dimension_semantics=("parallel",),   # batch tiles -> both TCs on v7x
        vmem_limit_bytes=_VMEM_LIMIT,
    )


# --------------------------------- kernels -----------------------------------

def _affine_conv3x3_relu_stats_kernel(x_ref, scale_ref, shift_ref, w_ref, b_ref,
                                      h_ref, sum_ref, sq_ref, pad_ref, patch_ref):
    """Per batch tile: y = relu(conv3x3(x*scale + shift) + b), plus per-tile
    per-channel sum / sum-of-squares (single-pass BatchNorm statistics).
    The conv is one im2col matmul: (H*W, 9*Cin) @ (9*Cin, Cout)."""
    _, H, W, Cin = x_ref.shape
    Hp, Wp = H + 2, W + 2
    Cout = w_ref.shape[1]

    # zero only the 1-pixel halo ring (interior is fully overwritten below)
    zrow = jnp.zeros((1, Wp, Cin), jnp.float32)
    zcol = jnp.zeros((Hp, 1, Cin), jnp.float32)
    pad_ref[0:1, :, :] = zrow
    pad_ref[Hp - 1:Hp, :, :] = zrow
    pad_ref[:, 0:1, :] = zcol
    pad_ref[:, Wp - 1:Wp, :] = zcol
    # fuse the previous stage's BatchNorm affine into the interior tile write
    pad_ref[1:H + 1, 1:W + 1, :] = x_ref[0] * scale_ref[...] + shift_ref[...]

    # build the im2col patch operand once; column order (dy, dx, cin) matches
    # the wrapper-side w.reshape(9*Cin, Cout)
    for t in range(9):
        dy, dx = divmod(t, 3)
        patch_ref[:, t * Cin:(t + 1) * Cin] = (
            pad_ref[dy:dy + H, dx:dx + W, :].reshape(H * W, Cin))

    h = jnp.dot(patch_ref[...], w_ref[...], preferred_element_type=jnp.float32)
    h = jnp.maximum(h + b_ref[...], 0.0)
    h_ref[0] = h.reshape(H, W, Cout)

    # single-pass BN stats while h is still live
    sum_ref[0] = jnp.sum(h, axis=0, keepdims=True)
    sq_ref[0] = jnp.sum(h * h, axis=0, keepdims=True)


def _bn_affine_kernel(x_ref, scale_ref, shift_ref, out_ref):
    """Identity transform path: BN2 affine on lane-dense (H, W*C) tiles."""
    out_ref[0] = x_ref[0] * scale_ref[...] + shift_ref[...]


def _bn_upconv_kernel(x_ref, scale_ref, shift_ref, wt_ref, bt_ref, out_ref):
    """Up path: BN2 affine + ConvTranspose2d(k=2,s=2) as one matmul
    (H*W, C) @ (C, 4*Coh); output columns are (ky, kx, c)-packed."""
    _, H, W, C = x_ref.shape
    h = x_ref[0].reshape(H * W, C) * scale_ref[...] + shift_ref[...]
    out_ref[0] = (jnp.dot(h, wt_ref[...], preferred_element_type=jnp.float32)
                  + bt_ref[...])


# ------------------------------ stage wrappers --------------------------------

def _conv_stage(src, scale, shift, w_mat, b):
    """relu(conv3x3(affine(src))) over a batch-parallel pipelined grid.
    Returns (activation, per-tile channel sums, per-tile channel sum-of-squares)."""
    N, H, W, Cin = src.shape
    Cout = w_mat.shape[1]
    return pl.pallas_call(
        _affine_conv3x3_relu_stats_kernel,
        grid=(N,),
        in_specs=[
            pl.BlockSpec((1, H, W, Cin), lambda i: (i, 0, 0, 0)),
            pl.BlockSpec((1, Cin), lambda i: (0, 0)),
            pl.BlockSpec((1, Cin), lambda i: (0, 0)),
            pl.BlockSpec((9 * Cin, Cout), lambda i: (0, 0)),
            pl.BlockSpec((1, Cout), lambda i: (0, 0)),
        ],
        out_specs=[
            pl.BlockSpec((1, H, W, Cout), lambda i: (i, 0, 0, 0)),
            pl.BlockSpec((1, 1, Cout), lambda i: (i, 0, 0)),
            pl.BlockSpec((1, 1, Cout), lambda i: (i, 0, 0)),
        ],
        out_shape=[
            jax.ShapeDtypeStruct((N, H, W, Cout), jnp.float32),
            jax.ShapeDtypeStruct((N, 1, Cout), jnp.float32),
            jax.ShapeDtypeStruct((N, 1, Cout), jnp.float32),
        ],
        scratch_shapes=[
            pltpu.VMEM((H + 2, W + 2, Cin), jnp.float32),  # padded activation tile
            pltpu.VMEM((H * W, 9 * Cin), jnp.float32),     # im2col patch operand
        ],
        compiler_params=_compiler_params(),
    )(src, scale, shift, w_mat, b)


def _affine_stage(x_wc, scale_wc, shift_wc):
    N, H, WC = x_wc.shape
    return pl.pallas_call(
        _bn_affine_kernel,
        grid=(N,),
        in_specs=[
            pl.BlockSpec((1, H, WC), lambda i: (i, 0, 0)),
            pl.BlockSpec((1, WC), lambda i: (0, 0)),
            pl.BlockSpec((1, WC), lambda i: (0, 0)),
        ],
        out_specs=pl.BlockSpec((1, H, WC), lambda i: (i, 0, 0)),
        out_shape=jax.ShapeDtypeStruct((N, H, WC), jnp.float32),
        compiler_params=_compiler_params(),
    )(x_wc, scale_wc, shift_wc)


def _upconv_stage(h2, scale, shift, wt_mat, bt_mat):
    N, H, W, C = h2.shape
    Kout = wt_mat.shape[1]  # 4 * Coh, (ky, kx, c)-packed
    return pl.pallas_call(
        _bn_upconv_kernel,
        grid=(N,),
        in_specs=[
            pl.BlockSpec((1, H, W, C), lambda i: (i, 0, 0, 0)),
            pl.BlockSpec((1, C), lambda i: (0, 0)),
            pl.BlockSpec((1, C), lambda i: (0, 0)),
            pl.BlockSpec((C, Kout), lambda i: (0, 0)),
            pl.BlockSpec((1, Kout), lambda i: (0, 0)),
        ],
        out_specs=pl.BlockSpec((1, H * W, Kout), lambda i: (i, 0, 0)),
        out_shape=jax.ShapeDtypeStruct((N, H * W, Kout), jnp.float32),
        compiler_params=_compiler_params(),
    )(h2, scale, shift, wt_mat, bt_mat)


def _bn_scale_shift(part_sum, part_sq, gamma, beta, count):
    """Reduce per-tile partial sums to the training-mode BN affine (tiny (1,C) op)."""
    s = jnp.sum(part_sum, axis=0)        # (1, C)
    ss = jnp.sum(part_sq, axis=0)        # (1, C)
    mean = s / count
    var = ss / count - mean * mean       # biased variance (training-mode BN)
    scale = gamma * jax.lax.rsqrt(var + EPS)
    shift = beta - mean * scale
    return scale, shift


# --------------------------------- wrapper ------------------------------------

@partial(jax.jit, static_argnames=("up",))
def block_forward(x_nchw, params, *, up):
    N, Cin, H, W = x_nchw.shape
    Cout = params["w1"].shape[-1]
    x = jnp.transpose(x_nchw, (0, 2, 3, 1)).astype(jnp.float32)   # NCHW -> NHWC, no pad

    w1m = params["w1"].reshape(9 * Cin, Cout)
    w2m = params["w2"].reshape(9 * Cout, Cout)
    count = float(N * H * W)

    # stage 1: conv1 + ReLU (+ BN1 partial stats)
    ones = jnp.ones((1, Cin), jnp.float32)
    zeros = jnp.zeros((1, Cin), jnp.float32)
    h1, s1, q1 = _conv_stage(x, ones, zeros, w1m, params["b1"])
    scale1, shift1 = _bn_scale_shift(s1, q1, params["g1"], params["be1"], count)

    # stage 2: BN1 affine fused into conv2 + ReLU (+ BN2 partial stats)
    h2, s2, q2 = _conv_stage(h1, scale1, shift1, w2m, params["b2"])
    scale2, shift2 = _bn_scale_shift(s2, q2, params["g2"], params["be2"], count)

    if not up:
        # stage 3 (identity transform): BN2 affine on lane-dense (H, W*C) tiles
        out = _affine_stage(h2.reshape(N, H, W * Cout),
                            jnp.tile(scale2, (1, W)), jnp.tile(shift2, (1, W)))
        out = out.reshape(N, H, W, Cout)
        return jnp.transpose(out, (0, 3, 1, 2))                   # NHWC -> NCHW

    # stage 3 (up transform): BN2 affine + ConvTranspose2d(k=2, s=2)
    Coh = params["wt"].shape[-1]
    wt_mat = jnp.transpose(params["wt"], (2, 0, 1, 3)).reshape(Cout, 4 * Coh)
    bt_mat = jnp.tile(params["bt"], (1, 4))
    out = _upconv_stage(h2, scale2, shift2, wt_mat, bt_mat)       # (N, H*W, 4*Coh)
    out = out.reshape(N, H, W, 2, 2, Coh)                         # (n, y, x, ky, kx, c)
    out = jnp.transpose(out, (0, 5, 1, 3, 2, 4))                  # (n, c, y, ky, x, kx)
    return out.reshape(N, Coh, 2 * H, 2 * W)                      # NCHW


# --------------------------- params & pure-JAX ref ----------------------------

def init_params(key, in_ch, out_ch, up):
    ks = jax.random.split(key, 6)
    p = {
        "w1": jax.random.normal(ks[0], (3, 3, in_ch, out_ch), jnp.float32)
              / math.sqrt(in_ch * 9),
        "b1": 0.1 * jax.random.normal(ks[1], (1, out_ch), jnp.float32),
        "g1": jnp.ones((1, out_ch), jnp.float32),
        "be1": jnp.zeros((1, out_ch), jnp.float32),
        "w2": jax.random.normal(ks[2], (3, 3, out_ch, out_ch), jnp.float32)
              / math.sqrt(out_ch * 9),
        "b2": 0.1 * jax.random.normal(ks[3], (1, out_ch), jnp.float32),
        "g2": jnp.ones((1, out_ch), jnp.float32),
        "be2": jnp.zeros((1, out_ch), jnp.float32),
    }
    if up:
        p["wt"] = jax.random.normal(ks[4], (2, 2, out_ch, out_ch // 2), jnp.float32) \
                  / math.sqrt(out_ch * 4)
        p["bt"] = 0.1 * jax.random.normal(ks[5], (1, out_ch // 2), jnp.float32)
    return p


def ref_forward(x_nchw, p, up):
    x = jnp.transpose(x_nchw, (0, 2, 3, 1)).astype(jnp.float32)

    def conv(h, w, b):
        dn = jax.lax.conv_dimension_numbers(h.shape, w.shape, ("NHWC", "HWIO", "NHWC"))
        return jax.lax.conv_general_dilated(h, w, (1, 1), "SAME",
                                            dimension_numbers=dn) + b.reshape(1, 1, 1, -1)

    def bn(h, g, be):
        mean = h.mean(axis=(0, 1, 2), keepdims=True)
        var = ((h - mean) ** 2).mean(axis=(0, 1, 2), keepdims=True)
        return (h - mean) / jnp.sqrt(var + EPS) * g.reshape(1, 1, 1, -1) + be.reshape(1, 1, 1, -1)

    h = bn(jax.nn.relu(conv(x, p["w1"], p["b1"])), p["g1"], p["be1"])
    h = bn(jax.nn.relu(conv(h, p["w2"], p["b2"])), p["g2"], p["be2"])
    if up:
        N, H, W, C = h.shape
        Coh = p["wt"].shape[-1]
        y = jnp.einsum("nhwc,klcd->nhkwld", h, p["wt"]).reshape(N, 2 * H, 2 * W, Coh)
        h = y + p["bt"].reshape(1, 1, 1, -1)
    return jnp.transpose(h, (0, 3, 1, 2))


# ----------------------------------- main -------------------------------------

if __name__ == "__main__":
    key = jax.random.PRNGKey(0)
    kx, kp = jax.random.split(key)
    N, in_ch, out_ch, H, W = 2, 4, 8, 16, 16
    x = jax.random.normal(kx, (N, in_ch, H, W), jnp.float32)

    ok = True
    for up in (False, True):
        params = init_params(kp, in_ch, out_ch, up)
        out = jax.block_until_ready(block_forward(x, params, up=up))
        ref = ref_forward(x, params, up)
        good = (out.shape == ref.shape and
                bool(jnp.allclose(out, ref, atol=1e-4, rtol=1e-4)))
        if not good:
            ok = False
            err = (float(jnp.max(jnp.abs(out - ref)))
                   if out.shape == ref.shape else float("nan"))
            print(f"MISMATCH up={up}: shape={out.shape} vs {ref.shape}, max abs err={err}")

    if ok:
        print("KERNEL_OK")
</pallas_src>

<mosaic_0001>
module attributes {stable_mosaic.version = 11 : i64} {
  func.func @_affine_conv3x3_relu_stats_kernel(%arg0: i32, %arg1: memref<1x16x16x4xf32, #tpu.memory_space<vmem>>, %arg2: memref<1x4xf32, #tpu.memory_space<vmem>>, %arg3: memref<1x4xf32, #tpu.memory_space<vmem>>, %arg4: memref<36x8xf32, #tpu.memory_space<vmem>>, %arg5: memref<1x8xf32, #tpu.memory_space<vmem>>, %arg6: memref<1x16x16x8xf32, #tpu.memory_space<vmem>>, %arg7: memref<1x1x8xf32, #tpu.memory_space<vmem>>, %arg8: memref<1x1x8xf32, #tpu.memory_space<vmem>>, %arg9: memref<18x18x4xf32, #tpu.memory_space<vmem>>, %arg10: memref<256x36xf32, #tpu.memory_space<vmem>>) attributes {dimension_semantics = [#tpu.dimension_semantics<parallel>], iteration_bounds = array<i64: 2>, scalar_prefetch = 0 : i64, scratch_operands = 2 : i64, tpu.core_type = #tpu.core_type<tc>, window_params = [{transform_indices = @transform_0, window_bounds = array<i64: 1, 16, 16, 4>}, {pipeline_mode = #tpu.pipeline_mode<synchronous>, transform_indices = @transform_1, window_bounds = array<i64: 1, 4>}, {pipeline_mode = #tpu.pipeline_mode<synchronous>, transform_indices = @transform_2, window_bounds = array<i64: 1, 4>}, {pipeline_mode = #tpu.pipeline_mode<synchronous>, transform_indices = @transform_3, window_bounds = array<i64: 36, 8>}, {pipeline_mode = #tpu.pipeline_mode<synchronous>, transform_indices = @transform_4, window_bounds = array<i64: 1, 8>}, {transform_indices = @transform_5, window_bounds = array<i64: 1, 16, 16, 8>}, {transform_indices = @transform_6, window_bounds = array<i64: 1, 1, 8>}, {transform_indices = @transform_7, window_bounds = array<i64: 1, 1, 8>}]} {
    %cst = arith.constant 0.000000e+00 : f32
    %0 = vector.broadcast %cst : f32 to vector<1x18x4xf32>
    %cst_0 = arith.constant 0.000000e+00 : f32
    %1 = vector.broadcast %cst_0 : f32 to vector<18x1x4xf32>
    %c0 = arith.constant 0 : index
    %c0_1 = arith.constant 0 : index
    %c0_2 = arith.constant 0 : index
    %2 = vector.load %arg9[%c0, %c0_1, %c0_2] : memref<18x18x4xf32, #tpu.memory_space<vmem>>, vector<1x18x4xf32>
    tpu.vector_store %arg9[%c0, %c0_1, %c0_2], %0 {strides = array<i32>} : memref<18x18x4xf32, #tpu.memory_space<vmem>>, vector<1x18x4xf32>,
    %c17 = arith.constant 17 : index
    %c0_3 = arith.constant 0 : index
    %c0_4 = arith.constant 0 : index
    %3 = vector.load %arg9[%c17, %c0_3, %c0_4] : memref<18x18x4xf32, #tpu.memory_space<vmem>>, vector<1x18x4xf32>
    tpu.vector_store %arg9[%c17, %c0_3, %c0_4], %0 {strides = array<i32>} : memref<18x18x4xf32, #tpu.memory_space<vmem>>, vector<1x18x4xf32>,
    %c0_5 = arith.constant 0 : index
    %c0_6 = arith.constant 0 : index
    %c0_7 = arith.constant 0 : index
    %4 = vector.load %arg9[%c0_5, %c0_6, %c0_7] : memref<18x18x4xf32, #tpu.memory_space<vmem>>, vector<18x1x4xf32>
    tpu.vector_store %arg9[%c0_5, %c0_6, %c0_7], %1 {strides = array<i32>} : memref<18x18x4xf32, #tpu.memory_space<vmem>>, vector<18x1x4xf32>,
    %c0_8 = arith.constant 0 : index
    %c17_9 = arith.constant 17 : index
    %c0_10 = arith.constant 0 : index
    %5 = vector.load %arg9[%c0_8, %c17_9, %c0_10] : memref<18x18x4xf32, #tpu.memory_space<vmem>>, vector<18x1x4xf32>
    tpu.vector_store %arg9[%c0_8, %c17_9, %c0_10], %1 {strides = array<i32>} : memref<18x18x4xf32, #tpu.memory_space<vmem>>, vector<18x1x4xf32>,
    %c0_11 = arith.constant 0 : index
    %c0_12 = arith.constant 0 : index
    %c0_13 = arith.constant 0 : index
    %c0_14 = arith.constant 0 : index
    %6 = vector.load %arg1[%c0_11, %c0_12, %c0_13, %c0_14] : memref<1x16x16x4xf32, #tpu.memory_space<vmem>>, vector<1x16x16x4xf32>
    %7 = vector.shape_cast %6 : vector<1x16x16x4xf32> to vector<16x16x4xf32>
    %c0_15 = arith.constant 0 : index
    %c0_16 = arith.constant 0 : index
    %8 = vector.load %arg2[%c0_15, %c0_16] : memref<1x4xf32, #tpu.memory_space<vmem>>, vector<1x4xf32>
    %9 = vector.shape_cast %8 : vector<1x4xf32> to vector<1x1x4xf32>
    %10 = vector.broadcast %9 : vector<1x1x4xf32> to vector<16x16x4xf32>
    %11 = arith.mulf %7, %10 : vector<16x16x4xf32>
    %c0_17 = arith.constant 0 : index
    %c0_18 = arith.constant 0 : index
    %12 = vector.load %arg3[%c0_17, %c0_18] : memref<1x4xf32, #tpu.memory_space<vmem>>, vector<1x4xf32>
    %13 = vector.shape_cast %12 : vector<1x4xf32> to vector<1x1x4xf32>
    %14 = vector.broadcast %13 : vector<1x1x4xf32> to vector<16x16x4xf32>
    %15 = arith.addf %11, %14 : vector<16x16x4xf32>
    %c1 = arith.constant 1 : index
    %c1_19 = arith.constant 1 : index
    %c0_20 = arith.constant 0 : index
    %16 = vector.load %arg9[%c1, %c1_19, %c0_20] : memref<18x18x4xf32, #tpu.memory_space<vmem>>, vector<16x16x4xf32>
    tpu.vector_store %arg9[%c1, %c1_19, %c0_20], %15 {strides = array<i32>} : memref<18x18x4xf32, #tpu.memory_space<vmem>>, vector<16x16x4xf32>,
    %c0_21 = arith.constant 0 : index
    %c0_22 = arith.constant 0 : index
    %c0_23 = arith.constant 0 : index
    %17 = vector.load %arg9[%c0_21, %c0_22, %c0_23] : memref<18x18x4xf32, #tpu.memory_space<vmem>>, vector<16x16x4xf32>
    %18 = vector.shape_cast %17 : vector<16x16x4xf32> to vector<256x4xf32>
    %c0_24 = arith.constant 0 : index
    %c0_25 = arith.constant 0 : index
    %19 = vector.load %arg10[%c0_24, %c0_25] : memref<256x36xf32, #tpu.memory_space<vmem>>, vector<256x4xf32>
    tpu.vector_store %arg10[%c0_24, %c0_25], %18 {strides = array<i32>} : memref<256x36xf32, #tpu.memory_space<vmem>>, vector<256x4xf32>,
    %c0_26 = arith.constant 0 : index
    %c1_27 = arith.constant 1 : index
    %c0_28 = arith.constant 0 : index
    %20 = vector.load %arg9[%c0_26, %c1_27, %c0_28] : memref<18x18x4xf32, #tpu.memory_space<vmem>>, vector<16x16x4xf32>
    %21 = vector.shape_cast %20 : vector<16x16x4xf32> to vector<256x4xf32>
    %c0_29 = arith.constant 0 : index
    %c4 = arith.constant 4 : index
    %22 = vector.load %arg10[%c0_29, %c4] : memref<256x36xf32, #tpu.memory_space<vmem>>, vector<256x4xf32>
    tpu.vector_store %arg10[%c0_29, %c4], %21 {strides = array<i32>} : memref<256x36xf32, #tpu.memory_space<vmem>>, vector<256x4xf32>,
    %c0_30 = arith.constant 0 : index
    %c2 = arith.constant 2 : index
    %c0_31 = arith.constant 0 : index
    %23 = vector.load %arg9[%c0_30, %c2, %c0_31] : memref<18x18x4xf32, #tpu.memory_space<vmem>>, vector<16x16x4xf32>
    %24 = vector.shape_cast %23 : vector<16x16x4xf32> to vector<256x4xf32>
    %c0_32 = arith.constant 0 : index
    %c8 = arith.constant 8 : index
    %25 = vector.load %arg10[%c0_32, %c8] : memref<256x36xf32, #tpu.memory_space<vmem>>, vector<256x4xf32>
    tpu.vector_store %arg10[%c0_32, %c8], %24 {strides = array<i32>} : memref<256x36xf32, #tpu.memory_space<vmem>>, vector<256x4xf32>,
    %c1_33 = arith.constant 1 : index
    %c0_34 = arith.constant 0 : index
    %c0_35 = arith.constant 0 : index
    %26 = vector.load %arg9[%c1_33, %c0_34, %c0_35] : memref<18x18x4xf32, #tpu.memory_space<vmem>>, vector<16x16x4xf32>
    %27 = vector.shape_cast %26 : vector<16x16x4xf32> to vector<256x4xf32>
    %c0_36 = arith.constant 0 : index
    %c12 = arith.constant 12 : index
    %28 = vector.load %arg10[%c0_36, %c12] : memref<256x36xf32, #tpu.memory_space<vmem>>, vector<256x4xf32>
    tpu.vector_store %arg10[%c0_36, %c12], %27 {strides = array<i32>} : memref<256x36xf32, #tpu.memory_space<vmem>>, vector<256x4xf32>,
    %c1_37 = arith.constant 1 : index
    %c1_38 = arith.constant 1 : index
    %c0_39 = arith.constant 0 : index
    %29 = vector.load %arg9[%c1_37, %c1_38, %c0_39] : memref<18x18x4xf32, #tpu.memory_space<vmem>>, vector<16x16x4xf32>
    %30 = vector.shape_cast %29 : vector<16x16x4xf32> to vector<256x4xf32>
    %c0_40 = arith.constant 0 : index
    %c16 = arith.constant 16 : index
    %31 = vector.load %arg10[%c0_40, %c16] : memref<256x36xf32, #tpu.memory_space<vmem>>, vector<256x4xf32>
    tpu.vector_store %arg10[%c0_40, %c16], %30 {strides = array<i32>} : memref<256x36xf32, #tpu.memory_space<vmem>>, vector<256x4xf32>,
    %c1_41 = arith.constant 1 : index
    %c2_42 = arith.constant 2 : index
    %c0_43 = arith.constant 0 : index
    %32 = vector.load %arg9[%c1_41, %c2_42, %c0_43] : memref<18x18x4xf32, #tpu.memory_space<vmem>>, vector<16x16x4xf32>
    %33 = vector.shape_cast %32 : vector<16x16x4xf32> to vector<256x4xf32>
    %c0_44 = arith.constant 0 : index
    %c20 = arith.constant 20 : index
    %34 = vector.load %arg10[%c0_44, %c20] : memref<256x36xf32, #tpu.memory_space<vmem>>, vector<256x4xf32>
    tpu.vector_store %arg10[%c0_44, %c20], %33 {strides = array<i32>} : memref<256x36xf32, #tpu.memory_space<vmem>>, vector<256x4xf32>,
    %c2_45 = arith.constant 2 : index
    %c0_46 = arith.constant 0 : index
    %c0_47 = arith.constant 0 : index
    %35 = vector.load %arg9[%c2_45, %c0_46, %c0_47] : memref<18x18x4xf32, #tpu.memory_space<vmem>>, vector<16x16x4xf32>
    %36 = vector.shape_cast %35 : vector<16x16x4xf32> to vector<256x4xf32>
    %c0_48 = arith.constant 0 : index
    %c24 = arith.constant 24 : index
    %37 = vector.load %arg10[%c0_48, %c24] : memref<256x36xf32, #tpu.memory_space<vmem>>, vector<256x4xf32>
    tpu.vector_store %arg10[%c0_48, %c24], %36 {strides = array<i32>} : memref<256x36xf32, #tpu.memory_space<vmem>>, vector<256x4xf32>,
    %c2_49 = arith.constant 2 : index
    %c1_50 = arith.constant 1 : index
    %c0_51 = arith.constant 0 : index
    %38 = vector.load %arg9[%c2_49, %c1_50, %c0_51] : memref<18x18x4xf32, #tpu.memory_space<vmem>>, vector<16x16x4xf32>
    %39 = vector.shape_cast %38 : vector<16x16x4xf32> to vector<256x4xf32>
    %c0_52 = arith.constant 0 : index
    %c28 = arith.constant 28 : index
    %40 = vector.load %arg10[%c0_52, %c28] : memref<256x36xf32, #tpu.memory_space<vmem>>, vector<256x4xf32>
    tpu.vector_store %arg10[%c0_52, %c28], %39 {strides = array<i32>} : memref<256x36xf32, #tpu.memory_space<vmem>>, vector<256x4xf32>,
    %c2_53 = arith.constant 2 : index
    %c2_54 = arith.constant 2 : index
    %c0_55 = arith.constant 0 : index
    %41 = vector.load %arg9[%c2_53, %c2_54, %c0_55] : memref<18x18x4xf32, #tpu.memory_space<vmem>>, vector<16x16x4xf32>
    %42 = vector.shape_cast %41 : vector<16x16x4xf32> to vector<256x4xf32>
    %c0_56 = arith.constant 0 : index
    %c32 = arith.constant 32 : index
    %43 = vector.load %arg10[%c0_56, %c32] : memref<256x36xf32, #tpu.memory_space<vmem>>, vector<256x4xf32>
    tpu.vector_store %arg10[%c0_56, %c32], %42 {strides = array<i32>} : memref<256x36xf32, #tpu.memory_space<vmem>>, vector<256x4xf32>,
    %c0_57 = arith.constant 0 : index
    %c0_58 = arith.constant 0 : index
    %44 = vector.load %arg10[%c0_57, %c0_58] : memref<256x36xf32, #tpu.memory_space<vmem>>, vector<256x36xf32>
    %c0_59 = arith.constant 0 : index
    %c0_60 = arith.constant 0 : index
    %45 = vector.load %arg4[%c0_59, %c0_60] : memref<36x8xf32, #tpu.memory_space<vmem>>, vector<36x8xf32>
    %cst_61 = arith.constant dense<0.000000e+00> : vector<256x8xf32>
    %46 = tpu.matmul %44, %45, %cst_61 {dimension_numbers = #tpu.dot_dimension_numbers<[1], [0], [0], [1], [0, 0, 1, 1], [], []>} : vector<256x36xf32>, vector<36x8xf32>, vector<256x8xf32> -> vector<256x8xf32>
    %c0_62 = arith.constant 0 : index
    %c0_63 = arith.constant 0 : index
    %47 = vector.load %arg5[%c0_62, %c0_63] : memref<1x8xf32, #tpu.memory_space<vmem>>, vector<1x8xf32>
    %48 = vector.broadcast %47 : vector<1x8xf32> to vector<256x8xf32>
    %49 = arith.addf %46, %48 : vector<256x8xf32>
    %cst_64 = arith.constant 0.000000e+00 : f32
    %50 = vector.broadcast %cst_64 : f32 to vector<256x8xf32>
    %51 = arith.maximumf %49, %50 : vector<256x8xf32>
    %52 = vector.shape_cast %51 : vector<256x8xf32> to vector<16x16x8xf32>
    %c0_65 = arith.constant 0 : index
    %c0_66 = arith.constant 0 : index
    %c0_67 = arith.constant 0 : index
    %c0_68 = arith.constant 0 : index
    %53 = vector.load %arg6[%c0_65, %c0_66, %c0_67, %c0_68] : memref<1x16x16x8xf32, #tpu.memory_space<vmem>>, vector<1x16x16x8xf32>
    %54 = vector.shape_cast %53 : vector<1x16x16x8xf32> to vector<16x16x8xf32>
    %55 = vector.shape_cast %52 : vector<16x16x8xf32> to vector<1x16x16x8xf32>
    tpu.vector_store %arg6[%c0_65, %c0_66, %c0_67, %c0_68], %55 {strides = array<i32>} : memref<1x16x16x8xf32, #tpu.memory_space<vmem>>, vector<1x16x16x8xf32>,
    %cst_69 = arith.constant dense<0.000000e+00> : vector<8xf32>
    %56 = vector.multi_reduction <add>, %51, %cst_69 [0] : vector<256x8xf32> to vector<8xf32>
    %57 = vector.shape_cast %56 : vector<8xf32> to vector<1x8xf32>
    %c0_70 = arith.constant 0 : index
    %c0_71 = arith.constant 0 : index
    %c0_72 = arith.constant 0 : index
    %58 = vector.load %arg7[%c0_70, %c0_71, %c0_72] : memref<1x1x8xf32, #tpu.memory_space<vmem>>, vector<1x1x8xf32>
    %59 = vector.shape_cast %58 : vector<1x1x8xf32> to vector<1x8xf32>
    %60 = vector.shape_cast %57 : vector<1x8xf32> to vector<1x1x8xf32>
    tpu.vector_store %arg7[%c0_70, %c0_71, %c0_72], %60 {strides = array<i32>} : memref<1x1x8xf32, #tpu.memory_space<vmem>>, vector<1x1x8xf32>,
    %61 = arith.mulf %51, %51 : vector<256x8xf32>
    %cst_73 = arith.constant dense<0.000000e+00> : vector<8xf32>
    %62 = vector.multi_reduction <add>, %61, %cst_73 [0] : vector<256x8xf32> to vector<8xf32>
    %63 = vector.shape_cast %62 : vector<8xf32> to vector<1x8xf32>
    %c0_74 = arith.constant 0 : index
    %c0_75 = arith.constant 0 : index
    %c0_76 = arith.constant 0 : index
    %64 = vector.load %arg8[%c0_74, %c0_75, %c0_76] : memref<1x1x8xf32, #tpu.memory_space<vmem>>, vector<1x1x8xf32>
    %65 = vector.shape_cast %64 : vector<1x1x8xf32> to vector<1x8xf32>
    %66 = vector.shape_cast %63 : vector<1x8xf32> to vector<1x1x8xf32>
    tpu.vector_store %arg8[%c0_74, %c0_75, %c0_76], %66 {strides = array<i32>} : memref<1x1x8xf32, #tpu.memory_space<vmem>>, vector<1x1x8xf32>,
    return
  }
  func.func @transform_0(%arg0: i32) -> (i32, i32, i32, i32) {
    %c0_i32 = arith.constant 0 : i32
    %c0_i32_0 = arith.constant 0 : i32
    %c0_i32_1 = arith.constant 0 : i32
    %c0_i32_2 = arith.constant 0 : i32
    return %arg0, %c0_i32, %c0_i32_0, %c0_i32_1 : i32, i32, i32, i32
  }
  func.func @transform_1(%arg0: i32) -> (i32, i32) {
    %c0_i32 = arith.constant 0 : i32
    %c0_i32_0 = arith.constant 0 : i32
    %c0_i32_1 = arith.constant 0 : i32
    return %c0_i32, %c0_i32_0 : i32, i32
  }
  func.func @transform_2(%arg0: i32) -> (i32, i32) {
    %c0_i32 = arith.constant 0 : i32
    %c0_i32_0 = arith.constant 0 : i32
    %c0_i32_1 = arith.constant 0 : i32
    return %c0_i32, %c0_i32_0 : i32, i32
  }
  func.func @transform_3(%arg0: i32) -> (i32, i32) {
    %c0_i32 = arith.constant 0 : i32
    %c0_i32_0 = arith.constant 0 : i32
    %c0_i32_1 = arith.constant 0 : i32
    return %c0_i32, %c0_i32_0 : i32, i32
  }
  func.func @transform_4(%arg0: i32) -> (i32, i32) {
    %c0_i32 = arith.constant 0 : i32
    %c0_i32_0 = arith.constant 0 : i32
    %c0_i32_1 = arith.constant 0 : i32
    return %c0_i32, %c0_i32_0 : i32, i32
  }
  func.func @transform_5(%arg0: i32) -> (i32, i32, i32, i32) {
    %c0_i32 = arith.constant 0 : i32
    %c0_i32_0 = arith.constant 0 : i32
    %c0_i32_1 = arith.constant 0 : i32
    %c0_i32_2 = arith.constant 0 : i32
    return %arg0, %c0_i32, %c0_i32_0, %c0_i32_1 : i32, i32, i32, i32
  }
  func.func @transform_6(%arg0: i32) -> (i32, i32, i32) {
    %c0_i32 = arith.constant 0 : i32
    %c0_i32_0 = arith.constant 0 : i32
    %c0_i32_1 = arith.constant 0 : i32
    return %arg0, %c0_i32, %c0_i32_0 : i32, i32, i32
  }
  func.func @transform_7(%arg0: i32) -> (i32, i32, i32) {
    %c0_i32 = arith.constant 0 : i32
    %c0_i32_0 = arith.constant 0 : i32
    %c0_i32_1 = arith.constant 0 : i32
    return %arg0, %c0_i32, %c0_i32_0 : i32, i32, i32
  }
}

module attributes {stable_mosaic.version = 11 : i64} {
  func.func @_affine_conv3x3_relu_stats_kernel(%arg0: i32, %arg1: memref<1x16x16x8xf32, #tpu.memory_space<vmem>>, %arg2: memref<1x8xf32, #tpu.memory_space<vmem>>, %arg3: memref<1x8xf32, #tpu.memory_space<vmem>>, %arg4: memref<72x8xf32, #tpu.memory_space<vmem>>, %arg5: memref<1x8xf32, #tpu.memory_space<vmem>>, %arg6: memref<1x16x16x8xf32, #tpu.memory_space<vmem>>, %arg7: memref<1x1x8xf32, #tpu.memory_space<vmem>>, %arg8: memref<1x1x8xf32, #tpu.memory_space<vmem>>, %arg9: memref<18x18x8xf32, #tpu.memory_space<vmem>>, %arg10: memref<256x72xf32, #tpu.memory_space<vmem>>) attributes {dimension_semantics = [#tpu.dimension_semantics<parallel>], iteration_bounds = array<i64: 2>, scalar_prefetch = 0 : i64, scratch_operands = 2 : i64, tpu.core_type = #tpu.core_type<tc>, window_params = [{transform_indices = @transform_0, window_bounds = array<i64: 1, 16, 16, 8>}, {pipeline_mode = #tpu.pipeline_mode<synchronous>, transform_indices = @transform_1, window_bounds = array<i64: 1, 8>}, {pipeline_mode = #tpu.pipeline_mode<synchronous>, transform_indices = @transform_2, window_bounds = array<i64: 1, 8>}, {pipeline_mode = #tpu.pipeline_mode<synchronous>, transform_indices = @transform_3, window_bounds = array<i64: 72, 8>}, {pipeline_mode = #tpu.pipeline_mode<synchronous>, transform_indices = @transform_4, window_bounds = array<i64: 1, 8>}, {transform_indices = @transform_5, window_bounds = array<i64: 1, 16, 16, 8>}, {transform_indices = @transform_6, window_bounds = array<i64: 1, 1, 8>}, {transform_indices = @transform_7, window_bounds = array<i64: 1, 1, 8>}]} {
    %cst = arith.constant 0.000000e+00 : f32
    %0 = vector.broadcast %cst : f32 to vector<1x18x8xf32>
    %cst_0 = arith.constant 0.000000e+00 : f32
    %1 = vector.broadcast %cst_0 : f32 to vector<18x1x8xf32>
    %c0 = arith.constant 0 : index
    %c0_1 = arith.constant 0 : index
    %c0_2 = arith.constant 0 : index
    %2 = vector.load %arg9[%c0, %c0_1, %c0_2] : memref<18x18x8xf32, #tpu.memory_space<vmem>>, vector<1x18x8xf32>
    tpu.vector_store %arg9[%c0, %c0_1, %c0_2], %0 {strides = array<i32>} : memref<18x18x8xf32, #tpu.memory_space<vmem>>, vector<1x18x8xf32>,
    %c17 = arith.constant 17 : index
    %c0_3 = arith.constant 0 : index
    %c0_4 = arith.constant 0 : index
    %3 = vector.load %arg9[%c17, %c0_3, %c0_4] : memref<18x18x8xf32, #tpu.memory_space<vmem>>, vector<1x18x8xf32>
    tpu.vector_store %arg9[%c17, %c0_3, %c0_4], %0 {strides = array<i32>} : memref<18x18x8xf32, #tpu.memory_space<vmem>>, vector<1x18x8xf32>,
    %c0_5 = arith.constant 0 : index
    %c0_6 = arith.constant 0 : index
    %c0_7 = arith.constant 0 : index
    %4 = vector.load %arg9[%c0_5, %c0_6, %c0_7] : memref<18x18x8xf32, #tpu.memory_space<vmem>>, vector<18x1x8xf32>
    tpu.vector_store %arg9[%c0_5, %c0_6, %c0_7], %1 {strides = array<i32>} : memref<18x18x8xf32, #tpu.memory_space<vmem>>, vector<18x1x8xf32>,
    %c0_8 = arith.constant 0 : index
    %c17_9 = arith.constant 17 : index
    %c0_10 = arith.constant 0 : index
    %5 = vector.load %arg9[%c0_8, %c17_9, %c0_10] : memref<18x18x8xf32, #tpu.memory_space<vmem>>, vector<18x1x8xf32>
    tpu.vector_store %arg9[%c0_8, %c17_9, %c0_10], %1 {strides = array<i32>} : memref<18x18x8xf32, #tpu.memory_space<vmem>>, vector<18x1x8xf32>,
    %c0_11 = arith.constant 0 : index
    %c0_12 = arith.constant 0 : index
    %c0_13 = arith.constant 0 : index
    %c0_14 = arith.constant 0 : index
    %6 = vector.load %arg1[%c0_11, %c0_12, %c0_13, %c0_14] : memref<1x16x16x8xf32, #tpu.memory_space<vmem>>, vector<1x16x16x8xf32>
    %7 = vector.shape_cast %6 : vector<1x16x16x8xf32> to vector<16x16x8xf32>
    %c0_15 = arith.constant 0 : index
    %c0_16 = arith.constant 0 : index
    %8 = vector.load %arg2[%c0_15, %c0_16] : memref<1x8xf32, #tpu.memory_space<vmem>>, vector<1x8xf32>
    %9 = vector.shape_cast %8 : vector<1x8xf32> to vector<1x1x8xf32>
    %10 = vector.broadcast %9 : vector<1x1x8xf32> to vector<16x16x8xf32>
    %11 = arith.mulf %7, %10 : vector<16x16x8xf32>
    %c0_17 = arith.constant 0 : index
    %c0_18 = arith.constant 0 : index
    %12 = vector.load %arg3[%c0_17, %c0_18] : memref<1x8xf32, #tpu.memory_space<vmem>>, vector<1x8xf32>
    %13 = vector.shape_cast %12 : vector<1x8xf32> to vector<1x1x8xf32>
    %14 = vector.broadcast %13 : vector<1x1x8xf32> to vector<16x16x8xf32>
    %15 = arith.addf %11, %14 : vector<16x16x8xf32>
    %c1 = arith.constant 1 : index
    %c1_19 = arith.constant 1 : index
    %c0_20 = arith.constant 0 : index
    %16 = vector.load %arg9[%c1, %c1_19, %c0_20] : memref<18x18x8xf32, #tpu.memory_space<vmem>>, vector<16x16x8xf32>
    tpu.vector_store %arg9[%c1, %c1_19, %c0_20], %15 {strides = array<i32>} : memref<18x18x8xf32, #tpu.memory_space<vmem>>, vector<16x16x8xf32>,
    %c0_21 = arith.constant 0 : index
    %c0_22 = arith.constant 0 : index
    %c0_23 = arith.constant 0 : index
    %17 = vector.load %arg9[%c0_21, %c0_22, %c0_23] : memref<18x18x8xf32, #tpu.memory_space<vmem>>, vector<16x16x8xf32>
    %18 = vector.shape_cast %17 : vector<16x16x8xf32> to vector<256x8xf32>
    %c0_24 = arith.constant 0 : index
    %c0_25 = arith.constant 0 : index
    %19 = vector.load %arg10[%c0_24, %c0_25] : memref<256x72xf32, #tpu.memory_space<vmem>>, vector<256x8xf32>
    tpu.vector_store %arg10[%c0_24, %c0_25], %18 {strides = array<i32>} : memref<256x72xf32, #tpu.memory_space<vmem>>, vector<256x8xf32>,
    %c0_26 = arith.constant 0 : index
    %c1_27 = arith.constant 1 : index
    %c0_28 = arith.constant 0 : index
    %20 = vector.load %arg9[%c0_26, %c1_27, %c0_28] : memref<18x18x8xf32, #tpu.memory_space<vmem>>, vector<16x16x8xf32>
    %21 = vector.shape_cast %20 : vector<16x16x8xf32> to vector<256x8xf32>
    %c0_29 = arith.constant 0 : index
    %c8 = arith.constant 8 : index
    %22 = vector.load %arg10[%c0_29, %c8] : memref<256x72xf32, #tpu.memory_space<vmem>>, vector<256x8xf32>
    tpu.vector_store %arg10[%c0_29, %c8], %21 {strides = array<i32>} : memref<256x72xf32, #tpu.memory_space<vmem>>, vector<256x8xf32>,
    %c0_30 = arith.constant 0 : index
    %c2 = arith.constant 2 : index
    %c0_31 = arith.constant 0 : index
    %23 = vector.load %arg9[%c0_30, %c2, %c0_31] : memref<18x18x8xf32, #tpu.memory_space<vmem>>, vector<16x16x8xf32>
    %24 = vector.shape_cast %23 : vector<16x16x8xf32> to vector<256x8xf32>
    %c0_32 = arith.constant 0 : index
    %c16 = arith.constant 16 : index
    %25 = vector.load %arg10[%c0_32, %c16] : memref<256x72xf32, #tpu.memory_space<vmem>>, vector<256x8xf32>
    tpu.vector_store %arg10[%c0_32, %c16], %24 {strides = array<i32>} : memref<256x72xf32, #tpu.memory_space<vmem>>, vector<256x8xf32>,
    %c1_33 = arith.constant 1 : index
    %c0_34 = arith.constant 0 : index
    %c0_35 = arith.constant 0 : index
    %26 = vector.load %arg9[%c1_33, %c0_34, %c0_35] : memref<18x18x8xf32, #tpu.memory_space<vmem>>, vector<16x16x8xf32>
    %27 = vector.shape_cast %26 : vector<16x16x8xf32> to vector<256x8xf32>
    %c0_36 = arith.constant 0 : index
    %c24 = arith.constant 24 : index
    %28 = vector.load %arg10[%c0_36, %c24] : memref<256x72xf32, #tpu.memory_space<vmem>>, vector<256x8xf32>
    tpu.vector_store %arg10[%c0_36, %c24], %27 {strides = array<i32>} : memref<256x72xf32, #tpu.memory_space<vmem>>, vector<256x8xf32>,
    %c1_37 = arith.constant 1 : index
    %c1_38 = arith.constant 1 : index
    %c0_39 = arith.constant 0 : index
    %29 = vector.load %arg9[%c1_37, %c1_38, %c0_39] : memref<18x18x8xf32, #tpu.memory_space<vmem>>, vector<16x16x8xf32>
    %30 = vector.shape_cast %29 : vector<16x16x8xf32> to vector<256x8xf32>
    %c0_40 = arith.constant 0 : index
    %c32 = arith.constant 32 : index
    %31 = vector.load %arg10[%c0_40, %c32] : memref<256x72xf32, #tpu.memory_space<vmem>>, vector<256x8xf32>
    tpu.vector_store %arg10[%c0_40, %c32], %30 {strides = array<i32>} : memref<256x72xf32, #tpu.memory_space<vmem>>, vector<256x8xf32>,
    %c1_41 = arith.constant 1 : index
    %c2_42 = arith.constant 2 : index
    %c0_43 = arith.constant 0 : index
    %32 = vector.load %arg9[%c1_41, %c2_42, %c0_43] : memref<18x18x8xf32, #tpu.memory_space<vmem>>, vector<16x16x8xf32>
    %33 = vector.shape_cast %32 : vector<16x16x8xf32> to vector<256x8xf32>
    %c0_44 = arith.constant 0 : index
    %c40 = arith.constant 40 : index
    %34 = vector.load %arg10[%c0_44, %c40] : memref<256x72xf32, #tpu.memory_space<vmem>>, vector<256x8xf32>
    tpu.vector_store %arg10[%c0_44, %c40], %33 {strides = array<i32>} : memref<256x72xf32, #tpu.memory_space<vmem>>, vector<256x8xf32>,
    %c2_45 = arith.constant 2 : index
    %c0_46 = arith.constant 0 : index
    %c0_47 = arith.constant 0 : index
    %35 = vector.load %arg9[%c2_45, %c0_46, %c0_47] : memref<18x18x8xf32, #tpu.memory_space<vmem>>, vector<16x16x8xf32>
    %36 = vector.shape_cast %35 : vector<16x16x8xf32> to vector<256x8xf32>
    %c0_48 = arith.constant 0 : index
    %c48 = arith.constant 48 : index
    %37 = vector.load %arg10[%c0_48, %c48] : memref<256x72xf32, #tpu.memory_space<vmem>>, vector<256x8xf32>
    tpu.vector_store %arg10[%c0_48, %c48], %36 {strides = array<i32>} : memref<256x72xf32, #tpu.memory_space<vmem>>, vector<256x8xf32>,
    %c2_49 = arith.constant 2 : index
    %c1_50 = arith.constant 1 : index
    %c0_51 = arith.constant 0 : index
    %38 = vector.load %arg9[%c2_49, %c1_50, %c0_51] : memref<18x18x8xf32, #tpu.memory_space<vmem>>, vector<16x16x8xf32>
    %39 = vector.shape_cast %38 : vector<16x16x8xf32> to vector<256x8xf32>
    %c0_52 = arith.constant 0 : index
    %c56 = arith.constant 56 : index
    %40 = vector.load %arg10[%c0_52, %c56] : memref<256x72xf32, #tpu.memory_space<vmem>>, vector<256x8xf32>
    tpu.vector_store %arg10[%c0_52, %c56], %39 {strides = array<i32>} : memref<256x72xf32, #tpu.memory_space<vmem>>, vector<256x8xf32>,
    %c2_53 = arith.constant 2 : index
    %c2_54 = arith.constant 2 : index
    %c0_55 = arith.constant 0 : index
    %41 = vector.load %arg9[%c2_53, %c2_54, %c0_55] : memref<18x18x8xf32, #tpu.memory_space<vmem>>, vector<16x16x8xf32>
    %42 = vector.shape_cast %41 : vector<16x16x8xf32> to vector<256x8xf32>
    %c0_56 = arith.constant 0 : index
    %c64 = arith.constant 64 : index
    %43 = vector.load %arg10[%c0_56, %c64] : memref<256x72xf32, #tpu.memory_space<vmem>>, vector<256x8xf32>
    tpu.vector_store %arg10[%c0_56, %c64], %42 {strides = array<i32>} : memref<256x72xf32, #tpu.memory_space<vmem>>, vector<256x8xf32>,
    %c0_57 = arith.constant 0 : index
    %c0_58 = arith.constant 0 : index
    %44 = vector.load %arg10[%c0_57, %c0_58] : memref<256x72xf32, #tpu.memory_space<vmem>>, vector<256x72xf32>
    %c0_59 = arith.constant 0 : index
    %c0_60 = arith.constant 0 : index
    %45 = vector.load %arg4[%c0_59, %c0_60] : memref<72x8xf32, #tpu.memory_space<vmem>>, vector<72x8xf32>
    %cst_61 = arith.constant dense<0.000000e+00> : vector<256x8xf32>
    %46 = tpu.matmul %44, %45, %cst_61 {dimension_numbers = #tpu.dot_dimension_numbers<[1], [0], [0], [1], [0, 0, 1, 1], [], []>} : vector<256x72xf32>, vector<72x8xf32>, vector<256x8xf32> -> vector<256x8xf32>
    %c0_62 = arith.constant 0 : index
    %c0_63 = arith.constant 0 : index
    %47 = vector.load %arg5[%c0_62, %c0_63] : memref<1x8xf32, #tpu.memory_space<vmem>>, vector<1x8xf32>
    %48 = vector.broadcast %47 : vector<1x8xf32> to vector<256x8xf32>
    %49 = arith.addf %46, %48 : vector<256x8xf32>
    %cst_64 = arith.constant 0.000000e+00 : f32
    %50 = vector.broadcast %cst_64 : f32 to vector<256x8xf32>
    %51 = arith.maximumf %49, %50 : vector<256x8xf32>
    %52 = vector.shape_cast %51 : vector<256x8xf32> to vector<16x16x8xf32>
    %c0_65 = arith.constant 0 : index
    %c0_66 = arith.constant 0 : index
    %c0_67 = arith.constant 0 : index
    %c0_68 = arith.constant 0 : index
    %53 = vector.load %arg6[%c0_65, %c0_66, %c0_67, %c0_68] : memref<1x16x16x8xf32, #tpu.memory_space<vmem>>, vector<1x16x16x8xf32>
    %54 = vector.shape_cast %53 : vector<1x16x16x8xf32> to vector<16x16x8xf32>
    %55 = vector.shape_cast %52 : vector<16x16x8xf32> to vector<1x16x16x8xf32>
    tpu.vector_store %arg6[%c0_65, %c0_66, %c0_67, %c0_68], %55 {strides = array<i32>} : memref<1x16x16x8xf32, #tpu.memory_space<vmem>>, vector<1x16x16x8xf32>,
    %cst_69 = arith.constant dense<0.000000e+00> : vector<8xf32>
    %56 = vector.multi_reduction <add>, %51, %cst_69 [0] : vector<256x8xf32> to vector<8xf32>
    %57 = vector.shape_cast %56 : vector<8xf32> to vector<1x8xf32>
    %c0_70 = arith.constant 0 : index
    %c0_71 = arith.constant 0 : index
    %c0_72 = arith.constant 0 : index
    %58 = vector.load %arg7[%c0_70, %c0_71, %c0_72] : memref<1x1x8xf32, #tpu.memory_space<vmem>>, vector<1x1x8xf32>
    %59 = vector.shape_cast %58 : vector<1x1x8xf32> to vector<1x8xf32>
    %60 = vector.shape_cast %57 : vector<1x8xf32> to vector<1x1x8xf32>
    tpu.vector_store %arg7[%c0_70, %c0_71, %c0_72], %60 {strides = array<i32>} : memref<1x1x8xf32, #tpu.memory_space<vmem>>, vector<1x1x8xf32>,
    %61 = arith.mulf %51, %51 : vector<256x8xf32>
    %cst_73 = arith.constant dense<0.000000e+00> : vector<8xf32>
    %62 = vector.multi_reduction <add>, %61, %cst_73 [0] : vector<256x8xf32> to vector<8xf32>
    %63 = vector.shape_cast %62 : vector<8xf32> to vector<1x8xf32>
    %c0_74 = arith.constant 0 : index
    %c0_75 = arith.constant 0 : index
    %c0_76 = arith.constant 0 : index
    %64 = vector.load %arg8[%c0_74, %c0_75, %c0_76] : memref<1x1x8xf32, #tpu.memory_space<vmem>>, vector<1x1x8xf32>
    %65 = vector.shape_cast %64 : vector<1x1x8xf32> to vector<1x8xf32>
    %66 = vector.shape_cast %63 : vector<1x8xf32> to vector<1x1x8xf32>
    tpu.vector_store %arg8[%c0_74, %c0_75, %c0_76], %66 {strides = array<i32>} : memref<1x1x8xf32, #tpu.memory_space<vmem>>, vector<1x1x8xf32>,
    return
  }
  func.func @transform_0(%arg0: i32) -> (i32, i32, i32, i32) {
    %c0_i32 = arith.constant 0 : i32
    %c0_i32_0 = arith.constant 0 : i32
    %c0_i32_1 = arith.constant 0 : i32
    %c0_i32_2 = arith.constant 0 : i32
    return %arg0, %c0_i32, %c0_i32_0, %c0_i32_1 : i32, i32, i32, i32
  }
  func.func @transform_1(%arg0: i32) -> (i32, i32) {
    %c0_i32 = arith.constant 0 : i32
    %c0_i32_0 = arith.constant 0 : i32
    %c0_i32_1 = arith.constant 0 : i32
    return %c0_i32, %c0_i32_0 : i32, i32
  }
  func.func @transform_2(%arg0: i32) -> (i32, i32) {
    %c0_i32 = arith.constant 0 : i32
    %c0_i32_0 = arith.constant 0 : i32
    %c0_i32_1 = arith.constant 0 : i32
    return %c0_i32, %c0_i32_0 : i32, i32
  }
  func.func @transform_3(%arg0: i32) -> (i32, i32) {
    %c0_i32 = arith.constant 0 : i32
    %c0_i32_0 = arith.constant 0 : i32
    %c0_i32_1 = arith.constant 0 : i32
    return %c0_i32, %c0_i32_0 : i32, i32
  }
  func.func @transform_4(%arg0: i32) -> (i32, i32) {
    %c0_i32 = arith.constant 0 : i32
    %c0_i32_0 = arith.constant 0 : i32
    %c0_i32_1 = arith.constant 0 : i32
    return %c0_i32, %c0_i32_0 : i32, i32
  }
  func.func @transform_5(%arg0: i32) -> (i32, i32, i32, i32) {
    %c0_i32 = arith.constant 0 : i32
    %c0_i32_0 = arith.constant 0 : i32
    %c0_i32_1 = arith.constant 0 : i32
    %c0_i32_2 = arith.constant 0 : i32
    return %arg0, %c0_i32, %c0_i32_0, %c0_i32_1 : i32, i32, i32, i32
  }
  func.func @transform_6(%arg0: i32) -> (i32, i32, i32) {
    %c0_i32 = arith.constant 0 : i32
    %c0_i32_0 = arith.constant 0 : i32
    %c0_i32_1 = arith.constant 0 : i32
    return %arg0, %c0_i32, %c0_i32_0 : i32, i32, i32
  }
  func.func @transform_7(%arg0: i32) -> (i32, i32, i32) {
    %c0_i32 = arith.constant 0 : i32
    %c0_i32_0 = arith.constant 0 : i32
    %c0_i32_1 = arith.constant 0 : i32
    return %arg0, %c0_i32, %c0_i32_0 : i32, i32, i32
  }
}

module attributes {stable_mosaic.version = 11 : i64} {
  func.func @_bn_affine_kernel(%arg0: i32, %arg1: memref<1x16x128xf32, #tpu.memory_space<vmem>>, %arg2: memref<1x128xf32, #tpu.memory_space<vmem>>, %arg3: memref<1x128xf32, #tpu.memory_space<vmem>>, %arg4: memref<1x16x128xf32, #tpu.memory_space<vmem>>) attributes {dimension_semantics = [#tpu.dimension_semantics<parallel>], iteration_bounds = array<i64: 2>, scalar_prefetch = 0 : i64, scratch_operands = 0 : i64, tpu.core_type = #tpu.core_type<tc>, window_params = [{transform_indices = @transform_0, window_bounds = array<i64: 1, 16, 128>}, {pipeline_mode = #tpu.pipeline_mode<synchronous>, transform_indices = @transform_1, window_bounds = array<i64: 1, 128>}, {pipeline_mode = #tpu.pipeline_mode<synchronous>, transform_indices = @transform_2, window_bounds = array<i64: 1, 128>}, {transform_indices = @transform_3, window_bounds = array<i64: 1, 16, 128>}]} {
    %c0 = arith.constant 0 : index
    %c0_0 = arith.constant 0 : index
    %c0_1 = arith.constant 0 : index
    %0 = vector.load %arg1[%c0, %c0_0, %c0_1] : memref<1x16x128xf32, #tpu.memory_space<vmem>>, vector<1x16x128xf32>
    %1 = vector.shape_cast %0 : vector<1x16x128xf32> to vector<16x128xf32>
    %c0_2 = arith.constant 0 : index
    %c0_3 = arith.constant 0 : index
    %2 = vector.load %arg2[%c0_2, %c0_3] : memref<1x128xf32, #tpu.memory_space<vmem>>, vector<1x128xf32>
    %3 = vector.broadcast %2 : vector<1x128xf32> to vector<16x128xf32>
    %4 = arith.mulf %1, %3 : vector<16x128xf32>
    %c0_4 = arith.constant 0 : index
    %c0_5 = arith.constant 0 : index
    %5 = vector.load %arg3[%c0_4, %c0_5] : memref<1x128xf32, #tpu.memory_space<vmem>>, vector<1x128xf32>
    %6 = vector.broadcast %5 : vector<1x128xf32> to vector<16x128xf32>
    %7 = arith.addf %4, %6 : vector<16x128xf32>
    %c0_6 = arith.constant 0 : index
    %c0_7 = arith.constant 0 : index
    %c0_8 = arith.constant 0 : index
    %8 = vector.load %arg4[%c0_6, %c0_7, %c0_8] : memref<1x16x128xf32, #tpu.memory_space<vmem>>, vector<1x16x128xf32>
    %9 = vector.shape_cast %8 : vector<1x16x128xf32> to vector<16x128xf32>
    %10 = vector.shape_cast %7 : vector<16x128xf32> to vector<1x16x128xf32>
    tpu.vector_store %arg4[%c0_6, %c0_7, %c0_8], %10 {strides = array<i32>} : memref<1x16x128xf32, #tpu.memory_space<vmem>>, vector<1x16x128xf32>,
    return
  }
  func.func @transform_0(%arg0: i32) -> (i32, i32, i32) {
    %c0_i32 = arith.constant 0 : i32
    %c0_i32_0 = arith.constant 0 : i32
    %c0_i32_1 = arith.constant 0 : i32
    return %arg0, %c0_i32, %c0_i32_0 : i32, i32, i32
  }
  func.func @transform_1(%arg0: i32) -> (i32, i32) {
    %c0_i32 = arith.constant 0 : i32
    %c0_i32_0 = arith.constant 0 : i32
    %c0_i32_1 = arith.constant 0 : i32
    return %c0_i32, %c0_i32_0 : i32, i32
  }
  func.func @transform_2(%arg0: i32) -> (i32, i32) {
    %c0_i32 = arith.constant 0 : i32
    %c0_i32_0 = arith.constant 0 : i32
    %c0_i32_1 = arith.constant 0 : i32
    return %c0_i32, %c0_i32_0 : i32, i32
  }
  func.func @transform_3(%arg0: i32) -> (i32, i32, i32) {
    %c0_i32 = arith.constant 0 : i32
    %c0_i32_0 = arith.constant 0 : i32
    %c0_i32_1 = arith.constant 0 : i32
    return %arg0, %c0_i32, %c0_i32_0 : i32, i32, i32
  }
}

</mosaic_0001>

<llo_original>
// kernel: block_forward.5
$region0: #{block_forward.5}
  #allocation0 [shape = 'u32[]', space=smem, size = 0x4, offset = 0x4, fixed_abs, tag = 'smem constant byte address 0x4 - core index']
  #allocation1 [shape = 'u32[72,128]{1,0:T(1,128)}', space=vmem, size = 0x9000, scoped, tag = 'internal scratch']
  %s0 = inlined_call_operand.vmem [shape: f32[2,16,128], index: 0, kind: input, shape index: {}]
  %s1 = inlined_call_operand.vmem [shape: f32[1,128], index: 1, kind: input, shape index: {}]
  %s2 = inlined_call_operand.vmem [shape: f32[1,128], index: 2, kind: input, shape index: {}]
  %s3 = inlined_call_operand.vmem [shape: f32[2,16,128], index: 3, kind: output, shape index: {}]
  %s4 = sld [smem:[#allocation0]]
  $region45: #{block_forward.5} parent=0
    _
  %s6 = ssub.s32 1, %s4
  %s7 = scalar_select 0, %s6, %s4
  loop: start=0, step=1, limit=4
  $region2: #{block_forward.5} parent=0 // loop_pre_header
    _
  $region3: #{block_forward.5} parent=0 // loop_header
    %s9 = sphi 0, %s13
    %p10 = scmp.ge.s32.totalorder %s9, 4
    %s19 = sphi 0, %s21
    %s22 = sphi 0, %s19
    %s23 = sphi 0, %s22
    %s39 = sphi 0, %s23
    %s43 = sphi 0, %s43
    %s45 = sphi 0, %s43
    %s46 = sphi 0, %s45
    %s60 = sphi 0, %s46
    %s64 = sphi 0, %s64
    %s66 = sphi 0, %s64
    %s67 = sphi 0, %s66
    %s81 = sphi 0, %s67
    %s87 = sphi 0, %s89
    %s90 = sphi 0, %s87
    %s91 = sphi 0, %s90
    %s107 = sphi 0, %s91
  $region4: #{block_forward.5} parent=0 // loop_header_branch
    %12 = sbr.rel (%p10) target = $region8
  $region5: #{block_forward.5} parent=0 // loop_body
    %s14 = ssub.s32 %s9, 1
    %s15 = ssub.s32 %s9, 2
    %s16 = sadd.s32 %s9, 1
    %s17 = ssub.s32 %s9, %s16
    %p18 = scmp.eq.s32.totalorder %s17, 0
    %s20 = sadd.s32 %s19, 1
    %s21 = scalar_select %p18, %s19, %s20
    %p24 = pneg %p18
    %p25 = scmp.eq.s32.totalorder %s9, 1
    %p26 = por %p24, %p25
    %p27 = scmp.ne.s32.totalorder %s19, %s22
    %p28 = scmp.eq.s32.totalorder %s9, 0
    %p29 = por %p27, %p28
    %p30 = scmp.ne.s32.totalorder %s19, %s22
    %p31 = scmp.eq.s32.totalorder %s14, 1
    %p32 = por %p30, %p31
    %p33 = scmp.ne.s32.totalorder %s22, %s23
    %p34 = scmp.eq.s32.totalorder %s14, 0
    %p35 = por %p33, %p34
    %p36 = scmp.ne.s32.totalorder %s22, %s23
    %p37 = scmp.eq.s32.totalorder %s15, 1
    %p38 = por %p36, %p37
    %p40 = scmp.ne.s32.totalorder %s23, %s39
    %p41 = scmp.eq.s32.totalorder %s15, 0
    %p42 = por %p40, %p41
    %s44 = sadd.s32 %s43, 1
    %p47 = scmp.eq.s32.totalorder %s9, 1
    %p48 = scmp.ne.s32.totalorder %s43, %s45
    %p49 = scmp.eq.s32.totalorder %s9, 0
    %p50 = por %p48, %p49
    %p51 = scmp.ne.s32.totalorder %s43, %s45
    %p52 = scmp.eq.s32.totalorder %s14, 1
    %p53 = por %p51, %p52
    %p54 = scmp.ne.s32.totalorder %s45, %s46
    %p55 = scmp.eq.s32.totalorder %s14, 0
    %p56 = por %p54, %p55
    %p57 = scmp.ne.s32.totalorder %s45, %s46
    %p58 = scmp.eq.s32.totalorder %s15, 1
    %p59 = por %p57, %p58
    %p61 = scmp.ne.s32.totalorder %s46, %s60
    %p62 = scmp.eq.s32.totalorder %s15, 0
    %p63 = por %p61, %p62
    %s65 = sadd.s32 %s64, 1
    %p68 = scmp.eq.s32.totalorder %s9, 1
    %p69 = scmp.ne.s32.totalorder %s64, %s66
    %p70 = scmp.eq.s32.totalorder %s9, 0
    %p71 = por %p69, %p70
    %p72 = scmp.ne.s32.totalorder %s64, %s66
    %p73 = scmp.eq.s32.totalorder %s14, 1
    %p74 = por %p72, %p73
    %p75 = scmp.ne.s32.totalorder %s66, %s67
    %p76 = scmp.eq.s32.totalorder %s14, 0
    %p77 = por %p75, %p76
    %p78 = scmp.ne.s32.totalorder %s66, %s67
    %p79 = scmp.eq.s32.totalorder %s15, 1
    %p80 = por %p78, %p79
    %p82 = scmp.ne.s32.totalorder %s67, %s81
    %p83 = scmp.eq.s32.totalorder %s15, 0
    %p84 = por %p82, %p83
    %s85 = ssub.s32 %s9, %s16
    %p86 = scmp.eq.s32.totalorder %s85, 0
    %s88 = sadd.s32 %s87, 1
    %s89 = scalar_select %p86, %s87, %s88
    %p92 = pneg %p86
    %p93 = scmp.eq.s32.totalorder %s9, 1
    %p94 = por %p92, %p93
    %p95 = scmp.ne.s32.totalorder %s87, %s90
    %p96 = scmp.eq.s32.totalorder %s9, 0
    %p97 = por %p95, %p96
    %p98 = scmp.ne.s32.totalorder %s87, %s90
    %p99 = scmp.eq.s32.totalorder %s14, 1
    %p100 = por %p98, %p99
    %p101 = scmp.ne.s32.totalorder %s90, %s91
    %p102 = scmp.eq.s32.totalorder %s14, 0
    %p103 = por %p101, %p102
    %p104 = scmp.ne.s32.totalorder %s90, %s91
    %p105 = scmp.eq.s32.totalorder %s15, 1
    %p106 = por %p104, %p105
    %p108 = scmp.ne.s32.totalorder %s91, %s107
    %p109 = scmp.eq.s32.totalorder %s15, 0
    %p110 = por %p108, %p109
    %p111 = scmp.le.s32.totalorder 1, %s9
    %p112 = scmp.lt.s32.totalorder %s9, 3
    %p113 = pnand %p111, %p112
    %p114 = pneg %p113
    // Predicated region
    $region9: #{block_forward.5} parent=5 // pred_check
      _
    $region10: #{block_forward.5} parent=5 // pred_check_branch
      %116 = sbr.rel (%p113) target = $region12
    $region11: #{block_forward.5} parent=5 // pred_region
      %s117 = ssub.s32 %s9, 1
      // Predicated region
      $region13: #{block_forward.5} parent=11 // pred_check
        %p118 = pneg %p56
      $region14: #{block_forward.5} parent=11 // pred_check_branch
        %120 = sbr.rel (%p118) target = $region16
      $region15: #{block_forward.5} parent=11 // pred_region
        _
      $region16: #{block_forward.5} parent=11 // pred_fallthru
        _
      // Predicated region
      $region17: #{block_forward.5} parent=11 // pred_check
        %p121 = pneg %p77
      $region18: #{block_forward.5} parent=11 // pred_check_branch
        %123 = sbr.rel (%p121) target = $region20
      $region19: #{block_forward.5} parent=11 // pred_region
        _
      $region20: #{block_forward.5} parent=11 // pred_fallthru
        _
    $region12: #{block_forward.5} parent=5 // pred_fallthru
      _
    %p124 = scmp.lt.s32.totalorder %s9, 2
    // Predicated region
    $region21: #{block_forward.5} parent=5 // pred_check
      %p125 = pneg %p124
    $region22: #{block_forward.5} parent=5 // pred_check_branch
      %127 = sbr.rel (%p125) target = $region24
    $region23: #{block_forward.5} parent=5 // pred_region
      // Predicated region
      $region25: #{block_forward.5} parent=23 // pred_check
        %p128 = pneg %p29
      $region26: #{block_forward.5} parent=23 // pred_check_branch
        %130 = sbr.rel (%p128) target = $region28
      $region27: #{block_forward.5} parent=23 // pred_region
        %p131 = scmp.lt.s32.totalorder %s9, 1
        %s132 = scalar_select %p131, %s9, 1
        %s133 = smul.addr %s132, 2
        %s134 = smul.addr %s133, 8
        %s135 = scalar_lea.vmem %s0, %s134
      $region28: #{block_forward.5} parent=23 // pred_fallthru
        _
    $region24: #{block_forward.5} parent=5 // pred_fallthru
      _
    %p136 = scmp.le.s32.totalorder 1, %s9
    %p137 = scmp.lt.s32.totalorder %s9, 3
    %p138 = pnand %p136, %p137
    %p139 = pneg %p138
    // Predicated region
    $region29: #{block_forward.5} parent=5 // pred_check
      _
    $region30: #{block_forward.5} parent=5 // pred_check_branch
      %141 = sbr.rel (%p138) target = $region32
    $region31: #{block_forward.5} parent=5 // pred_region
      %s142 = ssub.s32 %s9, 1
      %p143 = scmp.lt.s32.totalorder %s14, 1
      %s144 = scalar_select %p143, %s14, 1
      %s145 = smul.addr %s144, 2
      %s146 = smul.addr %s145, 8
      %s147 = scalar_lea.vmem %s0, %s146
      %p148 = pneg %p35
      %p149 = pneg %p32
      %p150 = pneg %p56
      %p151 = pneg %p53
      %p152 = pneg %p77
      %p153 = pneg %p74
      %p154 = pneg %p103
      %p155 = pneg %p100
      %p156 = scmp.lt.s32.totalorder %s14, 1
      %s157 = scalar_select %p156, %s14, 1
      %s158 = smul.addr %s157, 2
      %s159 = smul.addr %s158, 8
      %s160 = scalar_lea.vmem %s3, %s159
      %p161 = scmp.lt.s32.totalorder %s14, 1
      %s162 = scalar_select %p161, %s14, 1
      %s163 = smul.addr %s162, 2
      %s164 = smul.addr %s163, 8
      %s165 = scalar_lea.vmem %s0, %s164
      %p166 = scmp.lt.s32.totalorder %s14, 1
      %s167 = scalar_select %p166, %s14, 1
      %s168 = smul.addr %s167, 2
      %s169 = smul.addr %s168, 8
      %s170 = scalar_lea.vmem %s3, %s169
      %v171 = vld [vmem:[%s165] sm:$0xff]
      %v172 = vld [vmem:[%s165 + $0x8] sm:$0xff]
      %v173 = vld [vmem:[%s1] sm:$0x1]
      %v175 = vperm.slane %v173, 0
      %v177 = vmul.f32 %v171, %v175
      %v178 = vmul.f32 %v172, %v175
      %v179 = vld [vmem:[%s2] sm:$0x1]
      %v181 = vperm.slane %v179, 0
      %v183 = vadd.f32 %v177, %v181
      %v184 = vadd.f32 %v178, %v181
      %185 = vst [vmem:[%s170] sm:$0xff] %v183
      %186 = vst [vmem:[%s170 + $0x8] sm:$0xff] %v184
      %p187 = scmp.lt.s32.totalorder %s14, 1
      %s188 = scalar_select %p187, %s14, 1
      %s189 = smul.addr %s188, 2
      %s190 = smul.addr %s189, 8
      %s191 = scalar_lea.vmem %s3, %s190
      // Predicated region
      $region33: #{block_forward.5} parent=31 // pred_check
        %p192 = pneg %p100
      $region34: #{block_forward.5} parent=31 // pred_check_branch
        %194 = sbr.rel (%p192) target = $region36
      $region35: #{block_forward.5} parent=31 // pred_region
        _
      $region36: #{block_forward.5} parent=31 // pred_fallthru
        _
    $region32: #{block_forward.5} parent=5 // pred_fallthru
      _
    %p195 = scmp.le.s32.totalorder 2, %s9
    // Predicated region
    $region37: #{block_forward.5} parent=5 // pred_check
      %p196 = pneg %p195
    $region38: #{block_forward.5} parent=5 // pred_check_branch
      %198 = sbr.rel (%p196) target = $region40
    $region39: #{block_forward.5} parent=5 // pred_region
      %s199 = ssub.s32 %s9, 2
      // Predicated region
      $region41: #{block_forward.5} parent=39 // pred_check
        %p200 = pneg %p106
      $region42: #{block_forward.5} parent=39 // pred_check_branch
        %202 = sbr.rel (%p200) target = $region44
      $region43: #{block_forward.5} parent=39 // pred_region
        %p203 = scmp.lt.s32.totalorder %s15, 1
        %s204 = scalar_select %p203, %s15, 1
        %s205 = smul.addr %s204, 2
        %s206 = smul.addr %s205, 8
        %s207 = scalar_lea.vmem %s3, %s206
      $region44: #{block_forward.5} parent=39 // pred_fallthru
        _
    $region40: #{block_forward.5} parent=5 // pred_fallthru
      _
  $region6: #{block_forward.5} parent=0 // loop_footer
    %s13 = sadd.s32 1, %s9
  $region7: #{block_forward.5} parent=0 // loop_footer_branch
    %8 = sbr.rel target = $region3
  $region8: #{block_forward.5} parent=0 // loop_exit
    _

// kernel: block_forward.3
$region0: #{block_forward.3}
  #allocation0 [shape = 'u32[]', space=smem, size = 0x4, offset = 0x4, fixed_abs, tag = 'smem constant byte address 0x4 - core index']
  #allocation1 [shape = 'u32[72,128]{1,0:T(1,128)}', space=vmem, size = 0x9000, scoped, tag = 'internal scratch']
  #allocation2 [shape = 'f32[18,18,4]{2,1,0:T(8,128)}', space=vmem, size = 0x36000, scoped, tag = 'scratch operand']
  #allocation3 [shape = 'f32[256,36]{1,0:T(8,128)}', space=vmem, size = 0x20000, scoped, tag = 'scratch operand']
  %s0 = inlined_call_operand.vmem [shape: f32[2,16,16,4], index: 0, kind: input, shape index: {}]
  %s1 = inlined_call_operand.vmem [shape: f32[1,4], index: 1, kind: input, shape index: {}]
  %s2 = inlined_call_operand.vmem [shape: f32[1,4], index: 2, kind: input, shape index: {}]
  %s3 = inlined_call_operand.vmem [shape: f32[36,8], index: 3, kind: input, shape index: {}]
  %s4 = inlined_call_operand.vmem [shape: f32[1,8], index: 4, kind: input, shape index: {}]
  %s5 = inlined_call_operand.vmem [shape: f32[2,16,16,8], index: 5, kind: output, shape index: {0}]
  %s6 = inlined_call_operand.vmem [shape: f32[2,1,8], index: 6, kind: output, shape index: {1}]
  %s7 = inlined_call_operand.vmem [shape: f32[2,1,8], index: 7, kind: output, shape index: {2}]
  %8 = xla_tuple %s5, %s6, %s7
  %s9 = sld [smem:[#allocation0]]
  $region69: #{block_forward.3} parent=0
    _
  %s11 = ssub.s32 1, %s9
  %s12 = scalar_select 0, %s11, %s9
  loop: start=0, step=1, limit=4
  $region2: #{block_forward.3} parent=0 // loop_pre_header
    _
  $region3: #{block_forward.3} parent=0 // loop_header
    %s14 = sphi 0, %s18
    %p15 = scmp.ge.s32.totalorder %s14, 4
    %s24 = sphi 0, %s26
    %s27 = sphi 0, %s24
    %s28 = sphi 0, %s27
    %s44 = sphi 0, %s28
    %s48 = sphi 0, %s48
    %s50 = sphi 0, %s48
    %s51 = sphi 0, %s50
    %s65 = sphi 0, %s51
    %s69 = sphi 0, %s69
    %s71 = sphi 0, %s69
    %s72 = sphi 0, %s71
    %s86 = sphi 0, %s72
    %s90 = sphi 0, %s90
    %s92 = sphi 0, %s90
    %s93 = sphi 0, %s92
    %s107 = sphi 0, %s93
    %s111 = sphi 0, %s111
    %s113 = sphi 0, %s111
    %s114 = sphi 0, %s113
    %s128 = sphi 0, %s114
    %s134 = sphi 0, %s136
    %s137 = sphi 0, %s134
    %s138 = sphi 0, %s137
    %s154 = sphi 0, %s138
    %s160 = sphi 0, %s162
    %s163 = sphi 0, %s160
    %s164 = sphi 0, %s163
    %s180 = sphi 0, %s164
    %s186 = sphi 0, %s188
    %s189 = sphi 0, %s186
    %s190 = sphi 0, %s189
    %s206 = sphi 0, %s190
  $region4: #{block_forward.3} parent=0 // loop_header_branch
    %17 = sbr.rel (%p15) target = $region8
  $region5: #{block_forward.3} parent=0 // loop_body
    %s19 = ssub.s32 %s14, 1
    %s20 = ssub.s32 %s14, 2
    %s21 = sadd.s32 %s14, 1
    %s22 = ssub.s32 %s14, %s21
    %p23 = scmp.eq.s32.totalorder %s22, 0
    %s25 = sadd.s32 %s24, 1
    %s26 = scalar_select %p23, %s24, %s25
    %p29 = pneg %p23
    %p30 = scmp.eq.s32.totalorder %s14, 1
    %p31 = por %p29, %p30
    %p32 = scmp.ne.s32.totalorder %s24, %s27
    %p33 = scmp.eq.s32.totalorder %s14, 0
    %p34 = por %p32, %p33
    %p35 = scmp.ne.s32.totalorder %s24, %s27
    %p36 = scmp.eq.s32.totalorder %s19, 1
    %p37 = por %p35, %p36
    %p38 = scmp.ne.s32.totalorder %s27, %s28
    %p39 = scmp.eq.s32.totalorder %s19, 0
    %p40 = por %p38, %p39
    %p41 = scmp.ne.s32.totalorder %s27, %s28
    %p42 = scmp.eq.s32.totalorder %s20, 1
    %p43 = por %p41, %p42
    %p45 = scmp.ne.s32.totalorder %s28, %s44
    %p46 = scmp.eq.s32.totalorder %s20, 0
    %p47 = por %p45, %p46
    %s49 = sadd.s32 %s48, 1
    %p52 = scmp.eq.s32.totalorder %s14, 1
    %p53 = scmp.ne.s32.totalorder %s48, %s50
    %p54 = scmp.eq.s32.totalorder %s14, 0
    %p55 = por %p53, %p54
    %p56 = scmp.ne.s32.totalorder %s48, %s50
    %p57 = scmp.eq.s32.totalorder %s19, 1
    %p58 = por %p56, %p57
    %p59 = scmp.ne.s32.totalorder %s50, %s51
    %p60 = scmp.eq.s32.totalorder %s19, 0
    %p61 = por %p59, %p60
    %p62 = scmp.ne.s32.totalorder %s50, %s51
    %p63 = scmp.eq.s32.totalorder %s20, 1
    %p64 = por %p62, %p63
    %p66 = scmp.ne.s32.totalorder %s51, %s65
    %p67 = scmp.eq.s32.totalorder %s20, 0
    %p68 = por %p66, %p67
    %s70 = sadd.s32 %s69, 1
    %p73 = scmp.eq.s32.totalorder %s14, 1
    %p74 = scmp.ne.s32.totalorder %s69, %s71
    %p75 = scmp.eq.s32.totalorder %s14, 0
    %p76 = por %p74, %p75
    %p77 = scmp.ne.s32.totalorder %s69, %s71
    %p78 = scmp.eq.s32.totalorder %s19, 1
    %p79 = por %p77, %p78
    %p80 = scmp.ne.s32.totalorder %s71, %s72
    %p81 = scmp.eq.s32.totalorder %s19, 0
    %p82 = por %p80, %p81
    %p83 = scmp.ne.s32.totalorder %s71, %s72
    %p84 = scmp.eq.s32.totalorder %s20, 1
    %p85 = por %p83, %p84
    %p87 = scmp.ne.s32.totalorder %s72, %s86
    %p88 = scmp.eq.s32.totalorder %s20, 0
    %p89 = por %p87, %p88
    %s91 = sadd.s32 %s90, 1
    %p94 = scmp.eq.s32.totalorder %s14, 1
    %p95 = scmp.ne.s32.totalorder %s90, %s92
    %p96 = scmp.eq.s32.totalorder %s14, 0
    %p97 = por %p95, %p96
    %p98 = scmp.ne.s32.totalorder %s90, %s92
    %p99 = scmp.eq.s32.totalorder %s19, 1
    %p100 = por %p98, %p99
    %p101 = scmp.ne.s32.totalorder %s92, %s93
    %p102 = scmp.eq.s32.totalorder %s19, 0
    %p103 = por %p101, %p102
    %p104 = scmp.ne.s32.totalorder %s92, %s93
    %p105 = scmp.eq.s32.totalorder %s20, 1
    %p106 = por %p104, %p105
    %p108 = scmp.ne.s32.totalorder %s93, %s107
    %p109 = scmp.eq.s32.totalorder %s20, 0
    %p110 = por %p108, %p109
    %s112 = sadd.s32 %s111, 1
    %p115 = scmp.eq.s32.totalorder %s14, 1
    %p116 = scmp.ne.s32.totalorder %s111, %s113
    %p117 = scmp.eq.s32.totalorder %s14, 0
    %p118 = por %p116, %p117
    %p119 = scmp.ne.s32.totalorder %s111, %s113
    %p120 = scmp.eq.s32.totalorder %s19, 1
    %p121 = por %p119, %p120
    %p122 = scmp.ne.s32.totalorder %s113, %s114
    %p123 = scmp.eq.s32.totalorder %s19, 0
    %p124 = por %p122, %p123
    %p125 = scmp.ne.s32.totalorder %s113, %s114
    %p126 = scmp.eq.s32.totalorder %s20, 1
    %p127 = por %p125, %p126
    %p129 = scmp.ne.s32.totalorder %s114, %s128
    %p130 = scmp.eq.s32.totalorder %s20, 0
    %p131 = por %p129, %p130
    %s132 = ssub.s32 %s14, %s21
    %p133 = scmp.eq.s32.totalorder %s132, 0
    %s135 = sadd.s32 %s134, 1
    %s136 = scalar_select %p133, %s134, %s135
    %p139 = pneg %p133
    %p140 = scmp.eq.s32.totalorder %s14, 1
    %p141 = por %p139, %p140
    %p142 = scmp.ne.s32.totalorder %s134, %s137
    %p143 = scmp.eq.s32.totalorder %s14, 0
    %p144 = por %p142, %p143
    %p145 = scmp.ne.s32.totalorder %s134, %s137
    %p146 = scmp.eq.s32.totalorder %s19, 1
    %p147 = por %p145, %p146
    %p148 = scmp.ne.s32.totalorder %s137, %s138
    %p149 = scmp.eq.s32.totalorder %s19, 0
    %p150 = por %p148, %p149
    %p151 = scmp.ne.s32.totalorder %s137, %s138
    %p152 = scmp.eq.s32.totalorder %s20, 1
    %p153 = por %p151, %p152
    %p155 = scmp.ne.s32.totalorder %s138, %s154
    %p156 = scmp.eq.s32.totalorder %s20, 0
    %p157 = por %p155, %p156
    %s158 = ssub.s32 %s14, %s21
    %p159 = scmp.eq.s32.totalorder %s158, 0
    %s161 = sadd.s32 %s160, 1
    %s162 = scalar_select %p159, %s160, %s161
    %p165 = pneg %p159
    %p166 = scmp.eq.s32.totalorder %s14, 1
    %p167 = por %p165, %p166
    %p168 = scmp.ne.s32.totalorder %s160, %s163
    %p169 = scmp.eq.s32.totalorder %s14, 0
    %p170 = por %p168, %p169
    %p171 = scmp.ne.s32.totalorder %s160, %s163
    %p172 = scmp.eq.s32.totalorder %s19, 1
    %p173 = por %p171, %p172
    %p174 = scmp.ne.s32.totalorder %s163, %s164
    %p175 = scmp.eq.s32.totalorder %s19, 0
    %p176 = por %p174, %p175
    %p177 = scmp.ne.s32.totalorder %s163, %s164
    %p178 = scmp.eq.s32.totalorder %s20, 1
    %p179 = por %p177, %p178
    %p181 = scmp.ne.s32.totalorder %s164, %s180
    %p182 = scmp.eq.s32.totalorder %s20, 0
    %p183 = por %p181, %p182
    %s184 = ssub.s32 %s14, %s21
    %p185 = scmp.eq.s32.totalorder %s184, 0
    %s187 = sadd.s32 %s186, 1
    %s188 = scalar_select %p185, %s186, %s187
    %p191 = pneg %p185
    %p192 = scmp.eq.s32.totalorder %s14, 1
    %p193 = por %p191, %p192
    %p194 = scmp.ne.s32.totalorder %s186, %s189
    %p195 = scmp.eq.s32.totalorder %s14, 0
    %p196 = por %p194, %p195
    %p197 = scmp.ne.s32.totalorder %s186, %s189
    %p198 = scmp.eq.s32.totalorder %s19, 1
    %p199 = por %p197, %p198
    %p200 = scmp.ne.s32.totalorder %s189, %s190
    %p201 = scmp.eq.s32.totalorder %s19, 0
    %p202 = por %p200, %p201
    %p203 = scmp.ne.s32.totalorder %s189, %s190
    %p204 = scmp.eq.s32.totalorder %s20, 1
    %p205 = por %p203, %p204
    %p207 = scmp.ne.s32.totalorder %s190, %s206
    %p208 = scmp.eq.s32.totalorder %s20, 0
    %p209 = por %p207, %p208
    %p210 = scmp.le.s32.totalorder 1, %s14
    %p211 = scmp.lt.s32.totalorder %s14, 3
    %p212 = pnand %p210, %p211
    %p213 = pneg %p212
    // Predicated region
    $region9: #{block_forward.3} parent=5 // pred_check
      _
    $region10: #{block_forward.3} parent=5 // pred_check_branch
      %215 = sbr.rel (%p212) target = $region12
    $region11: #{block_forward.3} parent=5 // pred_region
      %s216 = ssub.s32 %s14, 1
      // Predicated region
      $region13: #{block_forward.3} parent=11 // pred_check
        %p217 = pneg %p61
      $region14: #{block_forward.3} parent=11 // pred_check_branch
        %219 = sbr.rel (%p217) target = $region16
      $region15: #{block_forward.3} parent=11 // pred_region
        _
      $region16: #{block_forward.3} parent=11 // pred_fallthru
        _
      // Predicated region
      $region17: #{block_forward.3} parent=11 // pred_check
        %p220 = pneg %p82
      $region18: #{block_forward.3} parent=11 // pred_check_branch
        %222 = sbr.rel (%p220) target = $region20
      $region19: #{block_forward.3} parent=11 // pred_region
        _
      $region20: #{block_forward.3} parent=11 // pred_fallthru
        _
      // Predicated region
      $region21: #{block_forward.3} parent=11 // pred_check
        %p223 = pneg %p103
      $region22: #{block_forward.3} parent=11 // pred_check_branch
        %225 = sbr.rel (%p223) target = $region24
      $region23: #{block_forward.3} parent=11 // pred_region
        _
      $region24: #{block_forward.3} parent=11 // pred_fallthru
        _
      // Predicated region
      $region25: #{block_forward.3} parent=11 // pred_check
        %p226 = pneg %p124
      $region26: #{block_forward.3} parent=11 // pred_check_branch
        %228 = sbr.rel (%p226) target = $region28
      $region27: #{block_forward.3} parent=11 // pred_region
        _
      $region28: #{block_forward.3} parent=11 // pred_fallthru
        _
    $region12: #{block_forward.3} parent=5 // pred_fallthru
      _
    %p229 = scmp.lt.s32.totalorder %s14, 2
    // Predicated region
    $region29: #{block_forward.3} parent=5 // pred_check
      %p230 = pneg %p229
    $region30: #{block_forward.3} parent=5 // pred_check_branch
      %232 = sbr.rel (%p230) target = $region32
    $region31: #{block_forward.3} parent=5 // pred_region
      // Predicated region
      $region33: #{block_forward.3} parent=31 // pred_check
        %p233 = pneg %p34
      $region34: #{block_forward.3} parent=31 // pred_check_branch
        %235 = sbr.rel (%p233) target = $region36
      $region35: #{block_forward.3} parent=31 // pred_region
        %p236 = scmp.lt.s32.totalorder %s14, 1
        %s237 = scalar_select %p236, %s14, 1
        %s238 = smul.addr %s237, 32
        %s239 = smul.addr %s238, 8
        %s240 = scalar_lea.vmem %s0, %s239
      $region36: #{block_forward.3} parent=31 // pred_fallthru
        _
    $region32: #{block_forward.3} parent=5 // pred_fallthru
      _
    %p241 = scmp.le.s32.totalorder 1, %s14
    %p242 = scmp.lt.s32.totalorder %s14, 3
    %p243 = pnand %p241, %p242
    %p244 = pneg %p243
    // Predicated region
    $region37: #{block_forward.3} parent=5 // pred_check
      _
    $region38: #{block_forward.3} parent=5 // pred_check_branch
      %246 = sbr.rel (%p243) target = $region40
    $region39: #{block_forward.3} parent=5 // pred_region
      %s247 = ssub.s32 %s14, 1
      %p248 = scmp.lt.s32.totalorder %s19, 1
      %s249 = scalar_select %p248, %s19, 1
      %s250 = smul.addr %s249, 32
      %s251 = smul.addr %s250, 8
      %s252 = scalar_lea.vmem %s0, %s251
      %p253 = pneg %p40
      %p254 = pneg %p37
      %p255 = pneg %p61
      %p256 = pneg %p58
      %p257 = pneg %p82
      %p258 = pneg %p79
      %p259 = pneg %p103
      %p260 = pneg %p100
      %p261 = pneg %p124
      %p262 = pneg %p121
      %p263 = pneg %p150
      %p264 = pneg %p147
      %p265 = scmp.lt.s32.totalorder %s19, 1
      %s266 = scalar_select %p265, %s19, 1
      %s267 = smul.addr %s266, 32
      %s268 = smul.addr %s267, 8
      %s269 = scalar_lea.vmem %s5, %s268
      %p270 = pneg %p176
      %p271 = pneg %p173
      %p272 = scmp.lt.s32.totalorder %s19, 1
      %s273 = scalar_select %p272, %s19, 1
      %s274 = scalar_lea.vmem %s6, %s273
      %p275 = pneg %p202
      %p276 = pneg %p199
      %p277 = scmp.lt.s32.totalorder %s19, 1
      %s278 = scalar_select %p277, %s19, 1
      %s279 = scalar_lea.vmem %s7, %s278
      %p280 = scmp.lt.s32.totalorder %s19, 1
      %s281 = scalar_select %p280, %s19, 1
      %s282 = smul.addr %s281, 32
      %s283 = smul.addr %s282, 8
      %s284 = scalar_lea.vmem %s0, %s283
      %p285 = scmp.lt.s32.totalorder %s19, 1
      %s286 = scalar_select %p285, %s19, 1
      %s287 = smul.addr %s286, 32
      %s288 = smul.addr %s287, 8
      %s289 = scalar_lea.vmem %s5, %s288
      %p290 = scmp.lt.s32.totalorder %s19, 1
      %s291 = scalar_select %p290, %s19, 1
      %s292 = scalar_lea.vmem %s6, %s291
      %p293 = scmp.lt.s32.totalorder %s19, 1
      %s294 = scalar_select %p293, %s19, 1
      %s295 = scalar_lea.vmem %s7, %s294
      %vm296 = vcmask 31744
      %297 = vst.msk [vmem:[#allocation2] sm:$0xff] %vm296, 0.0
      %298 = vst.msk [vmem:[#allocation2 + $0x8] sm:$0xff] %vm296, 0.0
      %vm299 = vcmask 25600
      %300 = vst.msk [vmem:[#allocation2 + $0x10] sm:$0x3] %vm299, 0.0
      %s301 = scalar_lea.vmem [#allocation2], 408
      %302 = vst.msk [vmem:[%s301] sm:$0xff] %vm296, 0.0
      %303 = vst.msk [vmem:[%s301 + $0x8] sm:$0xff] %vm296, 0.0
      %304 = vst.msk [vmem:[%s301 + $0x10] sm:$0x3] %vm299, 0.0
      %vm305 = vcmask 24576
      %306 = vst.msk [vmem:[#allocation2] sm:$0x1] %vm305, 0.0
      %307 = vst.msk [vmem:[#allocation2 + $0x18] sm:$0x1] %vm305, 0.0
      %308 = vst.msk [vmem:[#allocation2 + $0x30] sm:$0x1] %vm305, 0.0
      %309 = vst.msk [vmem:[#allocation2 + $0x48] sm:$0x1] %vm305, 0.0
      %310 = vst.msk [vmem:[#allocation2 + $0x60] sm:$0x1] %vm305, 0.0
      %311 = vst.msk [vmem:[#allocation2 + $0x78] sm:$0x1] %vm305, 0.0
      %312 = vst.msk [vmem:[#allocation2 + $0x90] sm:$0x1] %vm305, 0.0
      %313 = vst.msk [vmem:[#allocation2 + $0xa8] sm:$0x1] %vm305, 0.0
      %314 = vst.msk [vmem:[#allocation2 + $0xc0] sm:$0x1] %vm305, 0.0
      %315 = vst.msk [vmem:[#allocation2 + $0xd8] sm:$0x1] %vm305, 0.0
      %316 = vst.msk [vmem:[#allocation2 + $0xf0] sm:$0x1] %vm305, 0.0
      %317 = vst.msk [vmem:[#allocation2 + $0x108] sm:$0x1] %vm305, 0.0
      %318 = vst.msk [vmem:[#allocation2 + $0x120] sm:$0x1] %vm305, 0.0
      %319 = vst.msk [vmem:[#allocation2 + $0x138] sm:$0x1] %vm305, 0.0
      %320 = vst.msk [vmem:[#allocation2 + $0x150] sm:$0x1] %vm305, 0.0
      %321 = vst.msk [vmem:[#allocation2 + $0x168] sm:$0x1] %vm305, 0.0
      %322 = vst.msk [vmem:[#allocation2 + $0x180] sm:$0x1] %vm305, 0.0
      %323 = vst.msk [vmem:[#allocation2 + $0x198] sm:$0x1] %vm305, 0.0
      %324 = vst.msk [vmem:[#allocation2 + $0x11] sm:$0x1] %vm305, 0.0
      %325 = vst.msk [vmem:[#allocation2 + $0x29] sm:$0x1] %vm305, 0.0
      %326 = vst.msk [vmem:[#allocation2 + $0x41] sm:$0x1] %vm305, 0.0
      %327 = vst.msk [vmem:[#allocation2 + $0x59] sm:$0x1] %vm305, 0.0
      %328 = vst.msk [vmem:[#allocation2 + $0x71] sm:$0x1] %vm305, 0.0
      %329 = vst.msk [vmem:[#allocation2 + $0x89] sm:$0x1] %vm305, 0.0
      %330 = vst.msk [vmem:[#allocation2 + $0xa1] sm:$0x1] %vm305, 0.0
      %331 = vst.msk [vmem:[#allocation2 + $0xb9] sm:$0x1] %vm305, 0.0
      %332 = vst.msk [vmem:[#allocation2 + $0xd1] sm:$0x1] %vm305, 0.0
      %333 = vst.msk [vmem:[#allocation2 + $0xe9] sm:$0x1] %vm305, 0.0
      %334 = vst.msk [vmem:[#allocation2 + $0x101] sm:$0x1] %vm305, 0.0
      %335 = vst.msk [vmem:[#allocation2 + $0x119] sm:$0x1] %vm305, 0.0
      %336 = vst.msk [vmem:[#allocation2 + $0x131] sm:$0x1] %vm305, 0.0
      %337 = vst.msk [vmem:[#allocation2 + $0x149] sm:$0x1] %vm305, 0.0
      %338 = vst.msk [vmem:[#allocation2 + $0x161] sm:$0x1] %vm305, 0.0
      %339 = vst.msk [vmem:[#allocation2 + $0x179] sm:$0x1] %vm305, 0.0
      %340 = vst.msk [vmem:[#allocation2 + $0x191] sm:$0x1] %vm305, 0.0
      %341 = vst.msk [vmem:[#allocation2 + $0x1a9] sm:$0x1] %vm305, 0.0
      %v342 = vld [vmem:[%s284] sm:$0xff]
      %v343 = vld [vmem:[%s284 + $0x8] sm:$0xff]
      %v344 = vld [vmem:[%s284 + $0x10] sm:$0xff]
      %v345 = vld [vmem:[%s284 + $0x18] sm:$0xff]
      %v346 = vld [vmem:[%s284 + $0x20] sm:$0xff]
      %v347 = vld [vmem:[%s284 + $0x28] sm:$0xff]
      %v348 = vld [vmem:[%s284 + $0x30] sm:$0xff]
      %v349 = vld [vmem:[%s284 + $0x38] sm:$0xff]
      %v350 = vld [vmem:[%s284 + $0x40] sm:$0xff]
      %v351 = vld [vmem:[%s284 + $0x48] sm:$0xff]
      %v352 = vld [vmem:[%s284 + $0x50] sm:$0xff]
      %v353 = vld [vmem:[%s284 + $0x58] sm:$0xff]
      %v354 = vld [vmem:[%s284 + $0x60] sm:$0xff]
      %v355 = vld [vmem:[%s284 + $0x68] sm:$0xff]
      %v356 = vld [vmem:[%s284 + $0x70] sm:$0xff]
      %v357 = vld [vmem:[%s284 + $0x78] sm:$0xff]
      %v358 = vld [vmem:[%s284 + $0x80] sm:$0xff]
      %v359 = vld [vmem:[%s284 + $0x88] sm:$0xff]
      %v360 = vld [vmem:[%s284 + $0x90] sm:$0xff]
      %v361 = vld [vmem:[%s284 + $0x98] sm:$0xff]
      %v362 = vld [vmem:[%s284 + $0xa0] sm:$0xff]
      %v363 = vld [vmem:[%s284 + $0xa8] sm:$0xff]
      %v364 = vld [vmem:[%s284 + $0xb0] sm:$0xff]
      %v365 = vld [vmem:[%s284 + $0xb8] sm:$0xff]
      %v366 = vld [vmem:[%s284 + $0xc0] sm:$0xff]
      %v367 = vld [vmem:[%s284 + $0xc8] sm:$0xff]
      %v368 = vld [vmem:[%s284 + $0xd0] sm:$0xff]
      %v369 = vld [vmem:[%s284 + $0xd8] sm:$0xff]
      %v370 = vld [vmem:[%s284 + $0xe0] sm:$0xff]
      %v371 = vld [vmem:[%s284 + $0xe8] sm:$0xff]
      %v372 = vld [vmem:[%s284 + $0xf0] sm:$0xff]
      %v373 = vld [vmem:[%s284 + $0xf8] sm:$0xff]
      %v374 = vld [vmem:[%s1] sm:$0x1]
      %v376 = vperm.slane %v374, 0
      %v378 = vmul.f32 %v342, %v376
      %v379 = vmul.f32 %v343, %v376
      %v380 = vmul.f32 %v344, %v376
      %v381 = vmul.f32 %v345, %v376
      %v382 = vmul.f32 %v346, %v376
      %v383 = vmul.f32 %v347, %v376
      %v384 = vmul.f32 %v348, %v376
      %v385 = vmul.f32 %v349, %v376
      %v386 = vmul.f32 %v350, %v376
      %v387 = vmul.f32 %v351, %v376
      %v388 = vmul.f32 %v352, %v376
      %v389 = vmul.f32 %v353, %v376
      %v390 = vmul.f32 %v354, %v376
      %v391 = vmul.f32 %v355, %v376
      %v392 = vmul.f32 %v356, %v376
      %v393 = vmul.f32 %v357, %v376
      %v394 = vmul.f32 %v358, %v376
      %v395 = vmul.f32 %v359, %v376
      %v396 = vmul.f32 %v360, %v376
      %v397 = vmul.f32 %v361, %v376
      %v398 = vmul.f32 %v362, %v376
      %v399 = vmul.f32 %v363, %v376
      %v400 = vmul.f32 %v364, %v376
      %v401 = vmul.f32 %v365, %v376
      %v402 = vmul.f32 %v366, %v376
      %v403 = vmul.f32 %v367, %v376
      %v404 = vmul.f32 %v368, %v376
      %v405 = vmul.f32 %v369, %v376
      %v406 = vmul.f32 %v370, %v376
      %v407 = vmul.f32 %v371, %v376
      %v408 = vmul.f32 %v372, %v376
      %v409 = vmul.f32 %v373, %v376
      %v410 = vld [vmem:[%s2] sm:$0x1]
      %v412 = vperm.slane %v410, 0
      %v414 = vadd.f32 %v378, %v412
      %v415 = vadd.f32 %v379, %v412
      %v416 = vadd.f32 %v380, %v412
      %v417 = vadd.f32 %v381, %v412
      %v418 = vadd.f32 %v382, %v412
      %v419 = vadd.f32 %v383, %v412
      %v420 = vadd.f32 %v384, %v412
      %v421 = vadd.f32 %v385, %v412
      %v422 = vadd.f32 %v386, %v412
      %v423 = vadd.f32 %v387, %v412
      %v424 = vadd.f32 %v388, %v412
      %v425 = vadd.f32 %v389, %v412
      %v426 = vadd.f32 %v390, %v412
      %v427 = vadd.f32 %v391, %v412
      %v428 = vadd.f32 %v392, %v412
      %v429 = vadd.f32 %v393, %v412
      %v430 = vadd.f32 %v394, %v412
      %v431 = vadd.f32 %v395, %v412
      %v432 = vadd.f32 %v396, %v412
      %v433 = vadd.f32 %v397, %v412
      %v434 = vadd.f32 %v398, %v412
      %v435 = vadd.f32 %v399, %v412
      %v436 = vadd.f32 %v400, %v412
      %v437 = vadd.f32 %v401, %v412
      %v438 = vadd.f32 %v402, %v412
      %v439 = vadd.f32 %v403, %v412
      %v440 = vadd.f32 %v404, %v412
      %v441 = vadd.f32 %v405, %v412
      %v442 = vadd.f32 %v406, %v412
      %v443 = vadd.f32 %v407, %v412
      %v444 = vadd.f32 %v408, %v412
      %v445 = vadd.f32 %v409, %v412
      %s446 = scalar_lea.vmem [#allocation2], 24
      %447 = vst.msk [vmem:[%s446 + $0x1] sm:$0xff] %vm296, %v414
      %448 = vst.msk [vmem:[%s446 + $0x9] sm:$0xff] %vm296, %v415
      %449 = vst.msk [vmem:[%s446 + $0x19] sm:$0xff] %vm296, %v416
      %450 = vst.msk [vmem:[%s446 + $0x21] sm:$0xff] %vm296, %v417
      %451 = vst.msk [vmem:[%s446 + $0x31] sm:$0xff] %vm296, %v418
      %452 = vst.msk [vmem:[%s446 + $0x39] sm:$0xff] %vm296, %v419
      %453 = vst.msk [vmem:[%s446 + $0x49] sm:$0xff] %vm296, %v420
      %454 = vst.msk [vmem:[%s446 + $0x51] sm:$0xff] %vm296, %v421
      %455 = vst.msk [vmem:[%s446 + $0x61] sm:$0xff] %vm296, %v422
      %456 = vst.msk [vmem:[%s446 + $0x69] sm:$0xff] %vm296, %v423
      %457 = vst.msk [vmem:[%s446 + $0x79] sm:$0xff] %vm296, %v424
      %458 = vst.msk [vmem:[%s446 + $0x81] sm:$0xff] %vm296, %v425
      %459 = vst.msk [vmem:[%s446 + $0x91] sm:$0xff] %vm296, %v426
      %460 = vst.msk [vmem:[%s446 + $0x99] sm:$0xff] %vm296, %v427
      %461 = vst.msk [vmem:[%s446 + $0xa9] sm:$0xff] %vm296, %v428
      %462 = vst.msk [vmem:[%s446 + $0xb1] sm:$0xff] %vm296, %v429
      %463 = vst.msk [vmem:[%s446 + $0xc1] sm:$0xff] %vm296, %v430
      %464 = vst.msk [vmem:[%s446 + $0xc9] sm:$0xff] %vm296, %v431
      %465 = vst.msk [vmem:[%s446 + $0xd9] sm:$0xff] %vm296, %v432
      %466 = vst.msk [vmem:[%s446 + $0xe1] sm:$0xff] %vm296, %v433
      %467 = vst.msk [vmem:[%s446 + $0xf1] sm:$0xff] %vm296, %v434
      %468 = vst.msk [vmem:[%s446 + $0xf9] sm:$0xff] %vm296, %v435
      %469 = vst.msk [vmem:[%s446 + $0x109] sm:$0xff] %vm296, %v436
      %470 = vst.msk [vmem:[%s446 + $0x111] sm:$0xff] %vm296, %v437
      %471 = vst.msk [vmem:[%s446 + $0x121] sm:$0xff] %vm296, %v438
      %472 = vst.msk [vmem:[%s446 + $0x129] sm:$0xff] %vm296, %v439
      %473 = vst.msk [vmem:[%s446 + $0x139] sm:$0xff] %vm296, %v440
      %474 = vst.msk [vmem:[%s446 + $0x141] sm:$0xff] %vm296, %v441
      %475 = vst.msk [vmem:[%s446 + $0x151] sm:$0xff] %vm296, %v442
      %476 = vst.msk [vmem:[%s446 + $0x159] sm:$0xff] %vm296, %v443
      %477 = vst.msk [vmem:[%s446 + $0x169] sm:$0xff] %vm296, %v444
      %478 = vst.msk [vmem:[%s446 + $0x171] sm:$0xff] %vm296, %v445
      %v479 = vld [vmem:[#allocation2] sm:$0xff]
      %v480 = vld [vmem:[#allocation2 + $0x8] sm:$0xff]
      %v481 = vld [vmem:[#allocation2 + $0x18] sm:$0xff]
      %v482 = vld [vmem:[#allocation2 + $0x20] sm:$0xff]
      %v483 = vld [vmem:[#allocation2 + $0x30] sm:$0xff]
      %v484 = vld [vmem:[#allocation2 + $0x38] sm:$0xff]
      %v485 = vld [vmem:[#allocation2 + $0x48] sm:$0xff]
      %v486 = vld [vmem:[#allocation2 + $0x50] sm:$0xff]
      %v487 = vld [vmem:[#allocation2 + $0x60] sm:$0xff]
      %v488 = vld [vmem:[#allocation2 + $0x68] sm:$0xff]
      %v489 = vld [vmem:[#allocation2 + $0x78] sm:$0xff]
      %v490 = vld [vmem:[#allocation2 + $0x80] sm:$0xff]
      %v491 = vld [vmem:[#allocation2 + $0x90] sm:$0xff]
      %v492 = vld [vmem:[#allocation2 + $0x98] sm:$0xff]
      %v493 = vld [vmem:[#allocation2 + $0xa8] sm:$0xff]
      %v494 = vld [vmem:[#allocation2 + $0xb0] sm:$0xff]
      %v495 = vld [vmem:[#allocation2 + $0xc0] sm:$0xff]
      %v496 = vld [vmem:[#allocation2 + $0xc8] sm:$0xff]
      %v497 = vld [vmem:[#allocation2 + $0xd8] sm:$0xff]
      %v498 = vld [vmem:[#allocation2 + $0xe0] sm:$0xff]
      %v499 = vld [vmem:[#allocation2 + $0xf0] sm:$0xff]
      %v500 = vld [vmem:[#allocation2 + $0xf8] sm:$0xff]
      %v501 = vld [vmem:[#allocation2 + $0x108] sm:$0xff]
      %v502 = vld [vmem:[#allocation2 + $0x110] sm:$0xff]
      %v503 = vld [vmem:[#allocation2 + $0x120] sm:$0xff]
      %v504 = vld [vmem:[#allocation2 + $0x128] sm:$0xff]
      %v505 = vld [vmem:[#allocation2 + $0x138] sm:$0xff]
      %v506 = vld [vmem:[#allocation2 + $0x140] sm:$0xff]
      %v507 = vld [vmem:[#allocation2 + $0x150] sm:$0xff]
      %v508 = vld [vmem:[#allocation2 + $0x158] sm:$0xff]
      %v509 = vld [vmem:[#allocation2 + $0x168] sm:$0xff]
      %v510 = vld [vmem:[#allocation2 + $0x170] sm:$0xff]
      %511 = vst.msk [vmem:[#allocation3] sm:$0xff] %vm296, %v479
      %512 = vst.msk [vmem:[#allocation3 + $0x8] sm:$0xff] %vm296, %v480
      %513 = vst.msk [vmem:[#allocation3 + $0x10] sm:$0xff] %vm296, %v481
      %514 = vst.msk [vmem:[#allocation3 + $0x18] sm:$0xff] %vm296, %v482
      %515 = vst.msk [vmem:[#allocation3 + $0x20] sm:$0xff] %vm296, %v483
      %516 = vst.msk [vmem:[#allocation3 + $0x28] sm:$0xff] %vm296, %v484
      %517 = vst.msk [vmem:[#allocation3 + $0x30] sm:$0xff] %vm296, %v485
      %518 = vst.msk [vmem:[#allocation3 + $0x38] sm:$0xff] %vm296, %v486
      %519 = vst.msk [vmem:[#allocation3 + $0x40] sm:$0xff] %vm296, %v487
      %520 = vst.msk [vmem:[#allocation3 + $0x48] sm:$0xff] %vm296, %v488
      %521 = vst.msk [vmem:[#allocation3 + $0x50] sm:$0xff] %vm296, %v489
      %522 = vst.msk [vmem:[#allocation3 + $0x58] sm:$0xff] %vm296, %v490
      %523 = vst.msk [vmem:[#allocation3 + $0x60] sm:$0xff] %vm296, %v491
      %524 = vst.msk [vmem:[#allocation3 + $0x68] sm:$0xff] %vm296, %v492
      %525 = vst.msk [vmem:[#allocation3 + $0x70] sm:$0xff] %vm296, %v493
      %526 = vst.msk [vmem:[#allocation3 + $0x78] sm:$0xff] %vm296, %v494
      %527 = vst.msk [vmem:[#allocation3 + $0x80] sm:$0xff] %vm296, %v495
      %528 = vst.msk [vmem:[#allocation3 + $0x88] sm:$0xff] %vm296, %v496
      %529 = vst.msk [vmem:[#allocation3 + $0x90] sm:$0xff] %vm296, %v497
      %530 = vst.msk [vmem:[#allocation3 + $0x98] sm:$0xff] %vm296, %v498
      %531 = vst.msk [vmem:[#allocation3 + $0xa0] sm:$0xff] %vm296, %v499
      %532 = vst.msk [vmem:[#allocation3 + $0xa8] sm:$0xff] %vm296, %v500
      %533 = vst.msk [vmem:[#allocation3 + $0xb0] sm:$0xff] %vm296, %v501
      %534 = vst.msk [vmem:[#allocation3 + $0xb8] sm:$0xff] %vm296, %v502
      %535 = vst.msk [vmem:[#allocation3 + $0xc0] sm:$0xff] %vm296, %v503
      %536 = vst.msk [vmem:[#allocation3 + $0xc8] sm:$0xff] %vm296, %v504
      %537 = vst.msk [vmem:[#allocation3 + $0xd0] sm:$0xff] %vm296, %v505
      %538 = vst.msk [vmem:[#allocation3 + $0xd8] sm:$0xff] %vm296, %v506
      %539 = vst.msk [vmem:[#allocation3 + $0xe0] sm:$0xff] %vm296, %v507
      %540 = vst.msk [vmem:[#allocation3 + $0xe8] sm:$0xff] %vm296, %v508
      %541 = vst.msk [vmem:[#allocation3 + $0xf0] sm:$0xff] %vm296, %v509
      %542 = vst.msk [vmem:[#allocation3 + $0xf8] sm:$0xff] %vm296, %v510
      %v543 = vld [vmem:[#allocation2 + $0x1] sm:$0xff]
      %v544 = vld [vmem:[#allocation2 + $0x9] sm:$0xff]
      %v545 = vld [vmem:[#allocation2 + $0x19] sm:$0xff]
      %v546 = vld [vmem:[#allocation2 + $0x21] sm:$0xff]
      %v547 = vld [vmem:[#allocation2 + $0x31] sm:$0xff]
      %v548 = vld [vmem:[#allocation2 + $0x39] sm:$0xff]
      %v549 = vld [vmem:[#allocation2 + $0x49] sm:$0xff]
      %v550 = vld [vmem:[#allocation2 + $0x51] sm:$0xff]
      %v551 = vld [vmem:[#allocation2 + $0x61] sm:$0xff]
      %v552 = vld [vmem:[#allocation2 + $0x69] sm:$0xff]
      %v553 = vld [vmem:[#allocation2 + $0x79] sm:$0xff]
      %v554 = vld [vmem:[#allocation2 + $0x81] sm:$0xff]
      %v555 = vld [vmem:[#allocation2 + $0x91] sm:$0xff]
      %v556 = vld [vmem:[#allocation2 + $0x99] sm:$0xff]
      %v557 = vld [vmem:[#allocation2 + $0xa9] sm:$0xff]
      %v558 = vld [vmem:[#allocation2 + $0xb1] sm:$0xff]
      %v559 = vld [vmem:[#allocation2 + $0xc1] sm:$0xff]
      %v560 = vld [vmem:[#allocation2 + $0xc9] sm:$0xff]
      %v561 = vld [vmem:[#allocation2 + $0xd9] sm:$0xff]
      %v562 = vld [vmem:[#allocation2 + $0xe1] sm:$0xff]
      %v563 = vld [vmem:[#allocation2 + $0xf1] sm:$0xff]
      %v564 = vld [vmem:[#allocation2 + $0xf9] sm:$0xff]
      %v565 = vld [vmem:[#allocation2 + $0x109] sm:$0xff]
      %v566 = vld [vmem:[#allocation2 + $0x111] sm:$0xff]
      %v567 = vld [vmem:[#allocation2 + $0x121] sm:$0xff]
      %v568 = vld [vmem:[#allocation2 + $0x129] sm:$0xff]
      %v569 = vld [vmem:[#allocation2 + $0x139] sm:$0xff]
      %v570 = vld [vmem:[#allocation2 + $0x141] sm:$0xff]
      %v571 = vld [vmem:[#allocation2 + $0x151] sm:$0xff]
      %v572 = vld [vmem:[#allocation2 + $0x159] sm:$0xff]
      %v573 = vld [vmem:[#allocation2 + $0x169] sm:$0xff]
      %v574 = vld [vmem:[#allocation2 + $0x171] sm:$0xff]
      %607 = vrot.lane.b32.xlu0 %v543, 4
      %v608 = vpop.permute.xlu0 %607
      %609 = vrot.lane.b32.xlu0 %v544, 4
      %v610 = vpop.permute.xlu0 %609
      %611 = vrot.lane.b32.xlu0 %v545, 4
      %v612 = vpop.permute.xlu0 %611
      %613 = vrot.lane.b32.xlu0 %v546, 4
      %v614 = vpop.permute.xlu0 %613
      %615 = vrot.lane.b32.xlu0 %v547, 4
      %v616 = vpop.permute.xlu0 %615
      %617 = vrot.lane.b32.xlu0 %v548, 4
      %v618 = vpop.permute.xlu0 %617
      %619 = vrot.lane.b32.xlu0 %v549, 4
      %v620 = vpop.permute.xlu0 %619
      %621 = vrot.lane.b32.xlu0 %v550, 4
      %v622 = vpop.permute.xlu0 %621
      %623 = vrot.lane.b32.xlu0 %v551, 4
      %v624 = vpop.permute.xlu0 %623
      %625 = vrot.lane.b32.xlu0 %v552, 4
      %v626 = vpop.permute.xlu0 %625
      %627 = vrot.lane.b32.xlu0 %v553, 4
      %v628 = vpop.permute.xlu0 %627
      %629 = vrot.lane.b32.xlu0 %v554, 4
      %v630 = vpop.permute.xlu0 %629
      %631 = vrot.lane.b32.xlu0 %v555, 4
      %v632 = vpop.permute.xlu0 %631
      %633 = vrot.lane.b32.xlu0 %v556, 4
      %v634 = vpop.permute.xlu0 %633
      %635 = vrot.lane.b32.xlu0 %v557, 4
      %v636 = vpop.permute.xlu0 %635
      %637 = vrot.lane.b32.xlu0 %v558, 4
      %v638 = vpop.permute.xlu0 %637
      %639 = vrot.lane.b32.xlu0 %v559, 4
      %v640 = vpop.permute.xlu0 %639
      %641 = vrot.lane.b32.xlu0 %v560, 4
      %v642 = vpop.permute.xlu0 %641
      %643 = vrot.lane.b32.xlu0 %v561, 4
      %v644 = vpop.permute.xlu0 %643
      %645 = vrot.lane.b32.xlu0 %v562, 4
      %v646 = vpop.permute.xlu0 %645
      %647 = vrot.lane.b32.xlu0 %v563, 4
      %v648 = vpop.permute.xlu0 %647
      %649 = vrot.lane.b32.xlu0 %v564, 4
      %v650 = vpop.permute.xlu0 %649
      %651 = vrot.lane.b32.xlu0 %v565, 4
      %v652 = vpop.permute.xlu0 %651
      %653 = vrot.lane.b32.xlu0 %v566, 4
      %v654 = vpop.permute.xlu0 %653
      %655 = vrot.lane.b32.xlu0 %v567, 4
      %v656 = vpop.permute.xlu0 %655
      %657 = vrot.lane.b32.xlu0 %v568, 4
      %v658 = vpop.permute.xlu0 %657
      %659 = vrot.lane.b32.xlu0 %v569, 4
      %v660 = vpop.permute.xlu0 %659
      %661 = vrot.lane.b32.xlu0 %v570, 4
      %v662 = vpop.permute.xlu0 %661
      %663 = vrot.lane.b32.xlu0 %v571, 4
      %v664 = vpop.permute.xlu0 %663
      %665 = vrot.lane.b32.xlu0 %v572, 4
      %v666 = vpop.permute.xlu0 %665
      %667 = vrot.lane.b32.xlu0 %v573, 4
      %v668 = vpop.permute.xlu0 %667
      %669 = vrot.lane.b32.xlu0 %v574, 4
      %v670 = vpop.permute.xlu0 %669
      %vm703 = vcmask 64544
      %704 = vst.msk [vmem:[#allocation3] sm:$0xff] %vm703, %v608
      %705 = vst.msk [vmem:[#allocation3 + $0x8] sm:$0xff] %vm703, %v610
      %706 = vst.msk [vmem:[#allocation3 + $0x10] sm:$0xff] %vm703, %v612
      %707 = vst.msk [vmem:[#allocation3 + $0x18] sm:$0xff] %vm703, %v614
      %708 = vst.msk [vmem:[#allocation3 + $0x20] sm:$0xff] %vm703, %v616
      %709 = vst.msk [vmem:[#allocation3 + $0x28] sm:$0xff] %vm703, %v618
      %710 = vst.msk [vmem:[#allocation3 + $0x30] sm:$0xff] %vm703, %v620
      %711 = vst.msk [vmem:[#allocation3 + $0x38] sm:$0xff] %vm703, %v622
      %712 = vst.msk [vmem:[#allocation3 + $0x40] sm:$0xff] %vm703, %v624
      %713 = vst.msk [vmem:[#allocation3 + $0x48] sm:$0xff] %vm703, %v626
      %714 = vst.msk [vmem:[#allocation3 + $0x50] sm:$0xff] %vm703, %v628
      %715 = vst.msk [vmem:[#allocation3 + $0x58] sm:$0xff] %vm703, %v630
      %716 = vst.msk [vmem:[#allocation3 + $0x60] sm:$0xff] %vm703, %v632
      %717 = vst.msk [vmem:[#allocation3 + $0x68] sm:$0xff] %vm703, %v634
      %718 = vst.msk [vmem:[#allocation3 + $0x70] sm:$0xff] %vm703, %v636
      %719 = vst.msk [vmem:[#allocation3 + $0x78] sm:$0xff] %vm703, %v638
      %720 = vst.msk [vmem:[#allocation3 + $0x80] sm:$0xff] %vm703, %v640
      %721 = vst.msk [vmem:[#allocation3 + $0x88] sm:$0xff] %vm703, %v642
      %722 = vst.msk [vmem:[#allocation3 + $0x90] sm:$0xff] %vm703, %v644
      %723 = vst.msk [vmem:[#allocation3 + $0x98] sm:$0xff] %vm703, %v646
      %724 = vst.msk [vmem:[#allocation3 + $0xa0] sm:$0xff] %vm703, %v648
      %725 = vst.msk [vmem:[#allocation3 + $0xa8] sm:$0xff] %vm703, %v650
      %726 = vst.msk [vmem:[#allocation3 + $0xb0] sm:$0xff] %vm703, %v652
      %727 = vst.msk [vmem:[#allocation3 + $0xb8] sm:$0xff] %vm703, %v654
      %728 = vst.msk [vmem:[#allocation3 + $0xc0] sm:$0xff] %vm703, %v656
      %729 = vst.msk [vmem:[#allocation3 + $0xc8] sm:$0xff] %vm703, %v658
      %730 = vst.msk [vmem:[#allocation3 + $0xd0] sm:$0xff] %vm703, %v660
      %731 = vst.msk [vmem:[#allocation3 + $0xd8] sm:$0xff] %vm703, %v662
      %732 = vst.msk [vmem:[#allocation3 + $0xe0] sm:$0xff] %vm703, %v664
      %733 = vst.msk [vmem:[#allocation3 + $0xe8] sm:$0xff] %vm703, %v666
      %734 = vst.msk [vmem:[#allocation3 + $0xf0] sm:$0xff] %vm703, %v668
      %735 = vst.msk [vmem:[#allocation3 + $0xf8] sm:$0xff] %vm703, %v670
      %v736 = vld [vmem:[#allocation2 + $0x2] sm:$0xff]
      %v737 = vld [vmem:[#allocation2 + $0xa] sm:$0xff]
      %v738 = vld [vmem:[#allocation2 + $0x1a] sm:$0xff]
      %v739 = vld [vmem:[#allocation2 + $0x22] sm:$0xff]
      %v740 = vld [vmem:[#allocation2 + $0x32] sm:$0xff]
      %v741 = vld [vmem:[#allocation2 + $0x3a] sm:$0xff]
      %v742 = vld [vmem:[#allocation2 + $0x4a] sm:$0xff]
      %v743 = vld [vmem:[#allocation2 + $0x52] sm:$0xff]
      %v744 = vld [vmem:[#allocation2 + $0x62] sm:$0xff]
      %v745 = vld [vmem:[#allocation2 + $0x6a] sm:$0xff]
      %v746 = vld [vmem:[#allocation2 + $0x7a] sm:$0xff]
      %v747 = vld [vmem:[#allocation2 + $0x82] sm:$0xff]
      %v748 = vld [vmem:[#allocation2 + $0x92] sm:$0xff]
      %v749 = vld [vmem:[#allocation2 + $0x9a] sm:$0xff]
      %v750 = vld [vmem:[#allocation2 + $0xaa] sm:$0xff]
      %v751 = vld [vmem:[#allocation2 + $0xb2] sm:$0xff]
      %v752 = vld [vmem:[#allocation2 + $0xc2] sm:$0xff]
      %v753 = vld [vmem:[#allocation2 + $0xca] sm:$0xff]
      %v754 = vld [vmem:[#allocation2 + $0xda] sm:$0xff]
      %v755 = vld [vmem:[#allocation2 + $0xe2] sm:$0xff]
      %v756 = vld [vmem:[#allocation2 + $0xf2] sm:$0xff]
      %v757 = vld [vmem:[#allocation2 + $0xfa] sm:$0xff]
      %v758 = vld [vmem:[#allocation2 + $0x10a] sm:$0xff]
      %v759 = vld [vmem:[#allocation2 + $0x112] sm:$0xff]
      %v760 = vld [vmem:[#allocation2 + $0x122] sm:$0xff]
      %v761 = vld [vmem:[#allocation2 + $0x12a] sm:$0xff]
      %v762 = vld [vmem:[#allocation2 + $0x13a] sm:$0xff]
      %v763 = vld [vmem:[#allocation2 + $0x142] sm:$0xff]
      %v764 = vld [vmem:[#allocation2 + $0x152] sm:$0xff]
      %v765 = vld [vmem:[#allocation2 + $0x15a] sm:$0xff]
      %v766 = vld [vmem:[#allocation2 + $0x16a] sm:$0xff]
      %v767 = vld [vmem:[#allocation2 + $0x172] sm:$0xff]
      %800 = vrot.lane.b32.xlu0 %v736, 8
      %v801 = vpop.permute.xlu0 %800
      %802 = vrot.lane.b32.xlu0 %v737, 8
      %v803 = vpop.permute.xlu0 %802
      %804 = vrot.lane.b32.xlu0 %v738, 8
      %v805 = vpop.permute.xlu0 %804
      %806 = vrot.lane.b32.xlu0 %v739, 8
      %v807 = vpop.permute.xlu0 %806
      %808 = vrot.lane.b32.xlu0 %v740, 8
      %v809 = vpop.permute.xlu0 %808
      %810 = vrot.lane.b32.xlu0 %v741, 8
      %v811 = vpop.permute.xlu0 %810
      %812 = vrot.lane.b32.xlu0 %v742, 8
      %v813 = vpop.permute.xlu0 %812
      %814 = vrot.lane.b32.xlu0 %v743, 8
      %v815 = vpop.permute.xlu0 %814
      %816 = vrot.lane.b32.xlu0 %v744, 8
      %v817 = vpop.permute.xlu0 %816
      %818 = vrot.lane.b32.xlu0 %v745, 8
      %v819 = vpop.permute.xlu0 %818
      %820 = vrot.lane.b32.xlu0 %v746, 8
      %v821 = vpop.permute.xlu0 %820
      %822 = vrot.lane.b32.xlu0 %v747, 8
      %v823 = vpop.permute.xlu0 %822
      %824 = vrot.lane.b32.xlu0 %v748, 8
      %v825 = vpop.permute.xlu0 %824
      %826 = vrot.lane.b32.xlu0 %v749, 8
      %v827 = vpop.permute.xlu0 %826
      %828 = vrot.lane.b32.xlu0 %v750, 8
      %v829 = vpop.permute.xlu0 %828
      %830 = vrot.lane.b32.xlu0 %v751, 8
      %v831 = vpop.permute.xlu0 %830
      %832 = vrot.lane.b32.xlu0 %v752, 8
      %v833 = vpop.permute.xlu0 %832
      %834 = vrot.lane.b32.xlu0 %v753, 8
      %v835 = vpop.permute.xlu0 %834
      %836 = vrot.lane.b32.xlu0 %v754, 8
      %v837 = vpop.permute.xlu0 %836
      %838 = vrot.lane.b32.xlu0 %v755, 8
      %v839 = vpop.permute.xlu0 %838
      %840 = vrot.lane.b32.xlu0 %v756, 8
      %v841 = vpop.permute.xlu0 %840
      %842 = vrot.lane.b32.xlu0 %v757, 8
      %v843 = vpop.permute.xlu0 %842
      %844 = vrot.lane.b32.xlu0 %v758, 8
      %v845 = vpop.permute.xlu0 %844
      %846 = vrot.lane.b32.xlu0 %v759, 8
      %v847 = vpop.permute.xlu0 %846
      %848 = vrot.lane.b32.xlu0 %v760, 8
      %v849 = vpop.permute.xlu0 %848
      %850 = vrot.lane.b32.xlu0 %v761, 8
      %v851 = vpop.permute.xlu0 %850
      %852 = vrot.lane.b32.xlu0 %v762, 8
      %v853 = vpop.permute.xlu0 %852
      %854 = vrot.lane.b32.xlu0 %v763, 8
      %v855 = vpop.permute.xlu0 %854
      %856 = vrot.lane.b32.xlu0 %v764, 8
      %v857 = vpop.permute.xlu0 %856
      %858 = vrot.lane.b32.xlu0 %v765, 8
      %v859 = vpop.permute.xlu0 %858
      %860 = vrot.lane.b32.xlu0 %v766, 8
      %v861 = vpop.permute.xlu0 %860
      %862 = vrot.lane.b32.xlu0 %v767, 8
      %v863 = vpop.permute.xlu0 %862
      %vm896 = vcmask 97344
      %897 = vst.msk [vmem:[#allocation3] sm:$0xff] %vm896, %v801
      %898 = vst.msk [vmem:[#allocation3 + $0x8] sm:$0xff] %vm896, %v803
      %899 = vst.msk [vmem:[#allocation3 + $0x10] sm:$0xff] %vm896, %v805
      %900 = vst.msk [vmem:[#allocation3 + $0x18] sm:$0xff] %vm896, %v807
      %901 = vst.msk [vmem:[#allocation3 + $0x20] sm:$0xff] %vm896, %v809
      %902 = vst.msk [vmem:[#allocation3 + $0x28] sm:$0xff] %vm896, %v811
      %903 = vst.msk [vmem:[#allocation3 + $0x30] sm:$0xff] %vm896, %v813
      %904 = vst.msk [vmem:[#allocation3 + $0x38] sm:$0xff] %vm896, %v815
      %905 = vst.msk [vmem:[#allocation3 + $0x40] sm:$0xff] %vm896, %v817
      %906 = vst.msk [vmem:[#allocation3 + $0x48] sm:$0xff] %vm896, %v819
      %907 = vst.msk [vmem:[#allocation3 + $0x50] sm:$0xff] %vm896, %v821
      %908 = vst.msk [vmem:[#allocation3 + $0x58] sm:$0xff] %vm896, %v823
      %909 = vst.msk [vmem:[#allocation3 + $0x60] sm:$0xff] %vm896, %v825
      %910 = vst.msk [vmem:[#allocation3 + $0x68] sm:$0xff] %vm896, %v827
      %911 = vst.msk [vmem:[#allocation3 + $0x70] sm:$0xff] %vm896, %v829
      %912 = vst.msk [vmem:[#allocation3 + $0x78] sm:$0xff] %vm896, %v831
      %913 = vst.msk [vmem:[#allocation3 + $0x80] sm:$0xff] %vm896, %v833
      %914 = vst.msk [vmem:[#allocation3 + $0x88] sm:$0xff] %vm896, %v835
      %915 = vst.msk [vmem:[#allocation3 + $0x90] sm:$0xff] %vm896, %v837
      %916 = vst.msk [vmem:[#allocation3 + $0x98] sm:$0xff] %vm896, %v839
      %917 = vst.msk [vmem:[#allocation3 + $0xa0] sm:$0xff] %vm896, %v841
      %918 = vst.msk [vmem:[#allocation3 + $0xa8] sm:$0xff] %vm896, %v843
      %919 = vst.msk [vmem:[#allocation3 + $0xb0] sm:$0xff] %vm896, %v845
      %920 = vst.msk [vmem:[#allocation3 + $0xb8] sm:$0xff] %vm896, %v847
      %921 = vst.msk [vmem:[#allocation3 + $0xc0] sm:$0xff] %vm896, %v849
      %922 = vst.msk [vmem:[#allocation3 + $0xc8] sm:$0xff] %vm896, %v851
      %923 = vst.msk [vmem:[#allocation3 + $0xd0] sm:$0xff] %vm896, %v853
      %924 = vst.msk [vmem:[#allocation3 + $0xd8] sm:$0xff] %vm896, %v855
      %925 = vst.msk [vmem:[#allocation3 + $0xe0] sm:$0xff] %vm896, %v857
      %926 = vst.msk [vmem:[#allocation3 + $0xe8] sm:$0xff] %vm896, %v859
      %927 = vst.msk [vmem:[#allocation3 + $0xf0] sm:$0xff] %vm896, %v861
      %928 = vst.msk [vmem:[#allocation3 + $0xf8] sm:$0xff] %vm896, %v863
      %v929 = vld [vmem:[%s446] sm:$0xff]
      %v930 = vld [vmem:[%s446 + $0x8] sm:$0xff]
      %v931 = vld [vmem:[%s446 + $0x18] sm:$0xff]
      %v932 = vld [vmem:[%s446 + $0x20] sm:$0xff]
      %v933 = vld [vmem:[%s446 + $0x30] sm:$0xff]
      %v934 = vld [vmem:[%s446 + $0x38] sm:$0xff]
      %v935 = vld [vmem:[%s446 + $0x48] sm:$0xff]
      %v936 = vld [vmem:[%s446 + $0x50] sm:$0xff]
      %v937 = vld [vmem:[%s446 + $0x60] sm:$0xff]
      %v938 = vld [vmem:[%s446 + $0x68] sm:$0xff]
      %v939 = vld [vmem:[%s446 + $0x78] sm:$0xff]
      %v940 = vld [vmem:[%s446 + $0x80] sm:$0xff]
      %v941 = vld [vmem:[%s446 + $0x90] sm:$0xff]
      %v942 = vld [vmem:[%s446 + $0x98] sm:$0xff]
      %v943 = vld [vmem:[%s446 + $0xa8] sm:$0xff]
      %v944 = vld [vmem:[%s446 + $0xb0] sm:$0xff]
      %v945 = vld [vmem:[%s446 + $0xc0] sm:$0xff]
      %v946 = vld [vmem:[%s446 + $0xc8] sm:$0xff]
      %v947 = vld [vmem:[%s446 + $0xd8] sm:$0xff]
      %v948 = vld [vmem:[%s446 + $0xe0] sm:$0xff]
      %v949 = vld [vmem:[%s446 + $0xf0] sm:$0xff]
      %v950 = vld [vmem:[%s446 + $0xf8] sm:$0xff]
      %v951 = vld [vmem:[%s446 + $0x108] sm:$0xff]
      %v952 = vld [vmem:[%s446 + $0x110] sm:$0xff]
      %v953 = vld [vmem:[%s446 + $0x120] sm:$0xff]
      %v954 = vld [vmem:[%s446 + $0x128] sm:$0xff]
      %v955 = vld [vmem:[%s446 + $0x138] sm:$0xff]
      %v956 = vld [vmem:[%s446 + $0x140] sm:$0xff]
      %v957 = vld [vmem:[%s446 + $0x150] sm:$0xff]
      %v958 = vld [vmem:[%s446 + $0x158] sm:$0xff]
      %v959 = vld [vmem:[%s446 + $0x168] sm:$0xff]
      %v960 = vld [vmem:[%s446 + $0x170] sm:$0xff]
      %993 = vrot.lane.b32.xlu0 %v929, 12
      %v994 = vpop.permute.xlu0 %993
      %995 = vrot.lane.b32.xlu0 %v930, 12
      %v996 = vpop.permute.xlu0 %995
      %997 = vrot.lane.b32.xlu0 %v931, 12
      %v998 = vpop.permute.xlu0 %997
      %999 = vrot.lane.b32.xlu0 %v932, 12
      %v1000 = vpop.permute.xlu0 %999
      %1001 = vrot.lane.b32.xlu0 %v933, 12
      %v1002 = vpop.permute.xlu0 %1001
      %1003 = vrot.lane.b32.xlu0 %v934, 12
      %v1004 = vpop.permute.xlu0 %1003
      %1005 = vrot.lane.b32.xlu0 %v935, 12
      %v1006 = vpop.permute.xlu0 %1005
      %1007 = vrot.lane.b32.xlu0 %v936, 12
      %v1008 = vpop.permute.xlu0 %1007
      %1009 = vrot.lane.b32.xlu0 %v937, 12
      %v1010 = vpop.permute.xlu0 %1009
      %1011 = vrot.lane.b32.xlu0 %v938, 12
      %v1012 = vpop.permute.xlu0 %1011
      %1013 = vrot.lane.b32.xlu0 %v939, 12
      %v1014 = vpop.permute.xlu0 %1013
      %1015 = vrot.lane.b32.xlu0 %v940, 12
      %v1016 = vpop.permute.xlu0 %1015
      %1017 = vrot.lane.b32.xlu0 %v941, 12
      %v1018 = vpop.permute.xlu0 %1017
      %1019 = vrot.lane.b32.xlu0 %v942, 12
      %v1020 = vpop.permute.xlu0 %1019
      %1021 = vrot.lane.b32.xlu0 %v943, 12
      %v1022 = vpop.permute.xlu0 %1021
      %1023 = vrot.lane.b32.xlu0 %v944, 12
      %v1024 = vpop.permute.xlu0 %1023
      %1025 = vrot.lane.b32.xlu0 %v945, 12
      %v1026 = vpop.permute.xlu0 %1025
      %1027 = vrot.lane.b32.xlu0 %v946, 12
      %v1028 = vpop.permute.xlu0 %1027
      %1029 = vrot.lane.b32.xlu0 %v947, 12
      %v1030 = vpop.permute.xlu0 %1029
      %1031 = vrot.lane.b32.xlu0 %v948, 12
      %v1032 = vpop.permute.xlu0 %1031
      %1033 = vrot.lane.b32.xlu0 %v949, 12
      %v1034 = vpop.permute.xlu0 %1033
      %1035 = vrot.lane.b32.xlu0 %v950, 12
      %v1036 = vpop.permute.xlu0 %1035
      %1037 = vrot.lane.b32.xlu0 %v951, 12
      %v1038 = vpop.permute.xlu0 %1037
      %1039 = vrot.lane.b32.xlu0 %v952, 12
      %v1040 = vpop.permute.xlu0 %1039
      %1041 = vrot.lane.b32.xlu0 %v953, 12
      %v1042 = vpop.permute.xlu0 %1041
      %1043 = vrot.lane.b32.xlu0 %v954, 12
      %v1044 = vpop.permute.xlu0 %1043
      %1045 = vrot.lane.b32.xlu0 %v955, 12
      %v1046 = vpop.permute.xlu0 %1045
      %1047 = vrot.lane.b32.xlu0 %v956, 12
      %v1048 = vpop.permute.xlu0 %1047
      %1049 = vrot.lane.b32.xlu0 %v957, 12
      %v1050 = vpop.permute.xlu0 %1049
      %1051 = vrot.lane.b32.xlu0 %v958, 12
      %v1052 = vpop.permute.xlu0 %1051
      %1053 = vrot.lane.b32.xlu0 %v959, 12
      %v1054 = vpop.permute.xlu0 %1053
      %1055 = vrot.lane.b32.xlu0 %v960, 12
      %v1056 = vpop.permute.xlu0 %1055
      %vm1089 = vcmask 130144
      %1090 = vst.msk [vmem:[#allocation3] sm:$0xff] %vm1089, %v994
      %1091 = vst.msk [vmem:[#allocation3 + $0x8] sm:$0xff] %vm1089, %v996
      %1092 = vst.msk [vmem:[#allocation3 + $0x10] sm:$0xff] %vm1089, %v998
      %1093 = vst.msk [vmem:[#allocation3 + $0x18] sm:$0xff] %vm1089, %v1000
      %1094 = vst.msk [vmem:[#allocation3 + $0x20] sm:$0xff] %vm1089, %v1002
      %1095 = vst.msk [vmem:[#allocation3 + $0x28] sm:$0xff] %vm1089, %v1004
      %1096 = vst.msk [vmem:[#allocation3 + $0x30] sm:$0xff] %vm1089, %v1006
      %1097 = vst.msk [vmem:[#allocation3 + $0x38] sm:$0xff] %vm1089, %v1008
      %1098 = vst.msk [vmem:[#allocation3 + $0x40] sm:$0xff] %vm1089, %v1010
      %1099 = vst.msk [vmem:[#allocation3 + $0x48] sm:$0xff] %vm1089, %v1012
      %1100 = vst.msk [vmem:[#allocation3 + $0x50] sm:$0xff] %vm1089, %v1014
      %1101 = vst.msk [vmem:[#allocation3 + $0x58] sm:$0xff] %vm1089, %v1016
      %1102 = vst.msk [vmem:[#allocation3 + $0x60] sm:$0xff] %vm1089, %v1018
      %1103 = vst.msk [vmem:[#allocation3 + $0x68] sm:$0xff] %vm1089, %v1020
      %1104 = vst.msk [vmem:[#allocation3 + $0x70] sm:$0xff] %vm1089, %v1022
      %1105 = vst.msk [vmem:[#allocation3 + $0x78] sm:$0xff] %vm1089, %v1024
      %1106 = vst.msk [vmem:[#allocation3 + $0x80] sm:$0xff] %vm1089, %v1026
      %1107 = vst.msk [vmem:[#allocation3 + $0x88] sm:$0xff] %vm1089, %v1028
      %1108 = vst.msk [vmem:[#allocation3 + $0x90] sm:$0xff] %vm1089, %v1030
      %1109 = vst.msk [vmem:[#allocation3 + $0x98] sm:$0xff] %vm1089, %v1032
      %1110 = vst.msk [vmem:[#allocation3 + $0xa0] sm:$0xff] %vm1089, %v1034
      %1111 = vst.msk [vmem:[#allocation3 + $0xa8] sm:$0xff] %vm1089, %v1036
      %1112 = vst.msk [vmem:[#allocation3 + $0xb0] sm:$0xff] %vm1089, %v1038
      %1113 = vst.msk [vmem:[#allocation3 + $0xb8] sm:$0xff] %vm1089, %v1040
      %1114 = vst.msk [vmem:[#allocation3 + $0xc0] sm:$0xff] %vm1089, %v1042
      %1115 = vst.msk [vmem:[#allocation3 + $0xc8] sm:$0xff] %vm1089, %v1044
      %1116 = vst.msk [vmem:[#allocation3 + $0xd0] sm:$0xff] %vm1089, %v1046
      %1117 = vst.msk [vmem:[#allocation3 + $0xd8] sm:$0xff] %vm1089, %v1048
      %1118 = vst.msk [vmem:[#allocation3 + $0xe0] sm:$0xff] %vm1089, %v1050
      %1119 = vst.msk [vmem:[#allocation3 + $0xe8] sm:$0xff] %vm1089, %v1052
      %1120 = vst.msk [vmem:[#allocation3 + $0xf0] sm:$0xff] %vm1089, %v1054
      %1121 = vst.msk [vmem:[#allocation3 + $0xf8] sm:$0xff] %vm1089, %v1056
      %v1122 = vld [vmem:[%s446 + $0x1] sm:$0xff]
      %v1123 = vld [vmem:[%s446 + $0x9] sm:$0xff]
      %v1124 = vld [vmem:[%s446 + $0x19] sm:$0xff]
      %v1125 = vld [vmem:[%s446 + $0x21] sm:$0xff]
      %v1126 = vld [vmem:[%s446 + $0x31] sm:$0xff]
      %v1127 = vld [vmem:[%s446 + $0x39] sm:$0xff]
      %v1128 = vld [vmem:[%s446 + $0x49] sm:$0xff]
      %v1129 = vld [vmem:[%s446 + $0x51] sm:$0xff]
      %v1130 = vld [vmem:[%s446 + $0x61] sm:$0xff]
      %v1131 = vld [vmem:[%s446 + $0x69] sm:$0xff]
      %v1132 = vld [vmem:[%s446 + $0x79] sm:$0xff]
      %v1133 = vld [vmem:[%s446 + $0x81] sm:$0xff]
      %v1134 = vld [vmem:[%s446 + $0x91] sm:$0xff]
      %v1135 = vld [vmem:[%s446 + $0x99] sm:$0xff]
      %v1136 = vld [vmem:[%s446 + $0xa9] sm:$0xff]
      %v1137 = vld [vmem:[%s446 + $0xb1] sm:$0xff]
      %v1138 = vld [vmem:[%s446 + $0xc1] sm:$0xff]
      %v1139 = vld [vmem:[%s446 + $0xc9] sm:$0xff]
      %v1140 = vld [vmem:[%s446 + $0xd9] sm:$0xff]
      %v1141 = vld [vmem:[%s446 + $0xe1] sm:$0xff]
      %v1142 = vld [vmem:[%s446 + $0xf1] sm:$0xff]
      %v1143 = vld [vmem:[%s446 + $0xf9] sm:$0xff]
      %v1144 = vld [vmem:[%s446 + $0x109] sm:$0xff]
      %v1145 = vld [vmem:[%s446 + $0x111] sm:$0xff]
      %v1146 = vld [vmem:[%s446 + $0x121] sm:$0xff]
      %v1147 = vld [vmem:[%s446 + $0x129] sm:$0xff]
      %v1148 = vld [vmem:[%s446 + $0x139] sm:$0xff]
      %v1149 = vld [vmem:[%s446 + $0x141] sm:$0xff]
      %v1150 = vld [vmem:[%s446 + $0x151] sm:$0xff]
      %v1151 = vld [vmem:[%s446 + $0x159] sm:$0xff]
      %v1152 = vld [vmem:[%s446 + $0x169] sm:$0xff]
      %v1153 = vld [vmem:[%s446 + $0x171] sm:$0xff]
      %1186 = vrot.lane.b32.xlu0 %v1122, 16
      %v1187 = vpop.permute.xlu0 %1186
      %1188 = vrot.lane.b32.xlu0 %v1123, 16
      %v1189 = vpop.permute.xlu0 %1188
      %1190 = vrot.lane.b32.xlu0 %v1124, 16
      %v1191 = vpop.permute.xlu0 %1190
      %1192 = vrot.lane.b32.xlu0 %v1125, 16
      %v1193 = vpop.permute.xlu0 %1192
      %1194 = vrot.lane.b32.xlu0 %v1126, 16
      %v1195 = vpop.permute.xlu0 %1194
      %1196 = vrot.lane.b32.xlu0 %v1127, 16
      %v1197 = vpop.permute.xlu0 %1196
      %1198 = vrot.lane.b32.xlu0 %v1128, 16
      %v1199 = vpop.permute.xlu0 %1198
      %1200 = vrot.lane.b32.xlu0 %v1129, 16
      %v1201 = vpop.permute.xlu0 %1200
      %1202 = vrot.lane.b32.xlu0 %v1130, 16
      %v1203 = vpop.permute.xlu0 %1202
      %1204 = vrot.lane.b32.xlu0 %v1131, 16
      %v1205 = vpop.permute.xlu0 %1204
      %1206 = vrot.lane.b32.xlu0 %v1132, 16
      %v1207 = vpop.permute.xlu0 %1206
      %1208 = vrot.lane.b32.xlu0 %v1133, 16
      %v1209 = vpop.permute.xlu0 %1208
      %1210 = vrot.lane.b32.xlu0 %v1134, 16
      %v1211 = vpop.permute.xlu0 %1210
      %1212 = vrot.lane.b32.xlu0 %v1135, 16
      %v1213 = vpop.permute.xlu0 %1212
      %1214 = vrot.lane.b32.xlu0 %v1136, 16
      %v1215 = vpop.permute.xlu0 %1214
      %1216 = vrot.lane.b32.xlu0 %v1137, 16
      %v1217 = vpop.permute.xlu0 %1216
      %1218 = vrot.lane.b32.xlu0 %v1138, 16
      %v1219 = vpop.permute.xlu0 %1218
      %1220 = vrot.lane.b32.xlu0 %v1139, 16
      %v1221 = vpop.permute.xlu0 %1220
      %1222 = vrot.lane.b32.xlu0 %v1140, 16
      %v1223 = vpop.permute.xlu0 %1222
      %1224 = vrot.lane.b32.xlu0 %v1141, 16
      %v1225 = vpop.permute.xlu0 %1224
      %1226 = vrot.lane.b32.xlu0 %v1142, 16
      %v1227 = vpop.permute.xlu0 %1226
      %1228 = vrot.lane.b32.xlu0 %v1143, 16
      %v1229 = vpop.permute.xlu0 %1228
      %1230 = vrot.lane.b32.xlu0 %v1144, 16
      %v1231 = vpop.permute.xlu0 %1230
      %1232 = vrot.lane.b32.xlu0 %v1145, 16
      %v1233 = vpop.permute.xlu0 %1232
      %1234 = vrot.lane.b32.xlu0 %v1146, 16
      %v1235 = vpop.permute.xlu0 %1234
      %1236 = vrot.lane.b32.xlu0 %v1147, 16
      %v1237 = vpop.permute.xlu0 %1236
      %1238 = vrot.lane.b32.xlu0 %v1148, 16
      %v1239 = vpop.permute.xlu0 %1238
      %1240 = vrot.lane.b32.xlu0 %v1149, 16
      %v1241 = vpop.permute.xlu0 %1240
      %1242 = vrot.lane.b32.xlu0 %v1150, 16
      %v1243 = vpop.permute.xlu0 %1242
      %1244 = vrot.lane.b32.xlu0 %v1151, 16
      %v1245 = vpop.permute.xlu0 %1244
      %1246 = vrot.lane.b32.xlu0 %v1152, 16
      %v1247 = vpop.permute.xlu0 %1246
      %1248 = vrot.lane.b32.xlu0 %v1153, 16
      %v1249 = vpop.permute.xlu0 %1248
      %vm1282 = vcmask 162944
      %1283 = vst.msk [vmem:[#allocation3] sm:$0xff] %vm1282, %v1187
      %1284 = vst.msk [vmem:[#allocation3 + $0x8] sm:$0xff] %vm1282, %v1189
      %1285 = vst.msk [vmem:[#allocation3 + $0x10] sm:$0xff] %vm1282, %v1191
      %1286 = vst.msk [vmem:[#allocation3 + $0x18] sm:$0xff] %vm1282, %v1193
      %1287 = vst.msk [vmem:[#allocation3 + $0x20] sm:$0xff] %vm1282, %v1195
      %1288 = vst.msk [vmem:[#allocation3 + $0x28] sm:$0xff] %vm1282, %v1197
      %1289 = vst.msk [vmem:[#allocation3 + $0x30] sm:$0xff] %vm1282, %v1199
      %1290 = vst.msk [vmem:[#allocation3 + $0x38] sm:$0xff] %vm1282, %v1201
      %1291 = vst.msk [vmem:[#allocation3 + $0x40] sm:$0xff] %vm1282, %v1203
      %1292 = vst.msk [vmem:[#allocation3 + $0x48] sm:$0xff] %vm1282, %v1205
      %1293 = vst.msk [vmem:[#allocation3 + $0x50] sm:$0xff] %vm1282, %v1207
      %1294 = vst.msk [vmem:[#allocation3 + $0x58] sm:$0xff] %vm1282, %v1209
      %1295 = vst.msk [vmem:[#allocation3 + $0x60] sm:$0xff] %vm1282, %v1211
      %1296 = vst.msk [vmem:[#allocation3 + $0x68] sm:$0xff] %vm1282, %v1213
      %1297 = vst.msk [vmem:[#allocation3 + $0x70] sm:$0xff] %vm1282, %v1215
      %1298 = vst.msk [vmem:[#allocation3 + $0x78] sm:$0xff] %vm1282, %v1217
      %1299 = vst.msk [vmem:[#allocation3 + $0x80] sm:$0xff] %vm1282, %v1219
      %1300 = vst.msk [vmem:[#allocation3 + $0x88] sm:$0xff] %vm1282, %v1221
      %1301 = vst.msk [vmem:[#allocation3 + $0x90] sm:$0xff] %vm1282, %v1223
      %1302 = vst.msk [vmem:[#allocation3 + $0x98] sm:$0xff] %vm1282, %v1225
      %1303 = vst.msk [vmem:[#allocation3 + $0xa0] sm:$0xff] %vm1282, %v1227
      %1304 = vst.msk [vmem:[#allocation3 + $0xa8] sm:$0xff] %vm1282, %v1229
      %1305 = vst.msk [vmem:[#allocation3 + $0xb0] sm:$0xff] %vm1282, %v1231
      %1306 = vst.msk [vmem:[#allocation3 + $0xb8] sm:$0xff] %vm1282, %v1233
      %1307 = vst.msk [vmem:[#allocation3 + $0xc0] sm:$0xff] %vm1282, %v1235
      %1308 = vst.msk [vmem:[#allocation3 + $0xc8] sm:$0xff] %vm1282, %v1237
      %1309 = vst.msk [vmem:[#allocation3 + $0xd0] sm:$0xff] %vm1282, %v1239
      %1310 = vst.msk [vmem:[#allocation3 + $0xd8] sm:$0xff] %vm1282, %v1241
      %1311 = vst.msk [vmem:[#allocation3 + $0xe0] sm:$0xff] %vm1282, %v1243
      %1312 = vst.msk [vmem:[#allocation3 + $0xe8] sm:$0xff] %vm1282, %v1245
      %1313 = vst.msk [vmem:[#allocation3 + $0xf0] sm:$0xff] %vm1282, %v1247
      %1314 = vst.msk [vmem:[#allocation3 + $0xf8] sm:$0xff] %vm1282, %v1249
      %v1315 = vld [vmem:[%s446 + $0x2] sm:$0xff]
      %v1316 = vld [vmem:[%s446 + $0xa] sm:$0xff]
      %v1317 = vld [vmem:[%s446 + $0x1a] sm:$0xff]
      %v1318 = vld [vmem:[%s446 + $0x22] sm:$0xff]
      %v1319 = vld [vmem:[%s446 + $0x32] sm:$0xff]
      %v1320 = vld [vmem:[%s446 + $0x3a] sm:$0xff]
      %v1321 = vld [vmem:[%s446 + $0x4a] sm:$0xff]
      %v1322 = vld [vmem:[%s446 + $0x52] sm:$0xff]
      %v1323 = vld [vmem:[%s446 + $0x62] sm:$0xff]
      %v1324 = vld [vmem:[%s446 + $0x6a] sm:$0xff]
      %v1325 = vld [vmem:[%s446 + $0x7a] sm:$0xff]
      %v1326 = vld [vmem:[%s446 + $0x82] sm:$0xff]
      %v1327 = vld [vmem:[%s446 + $0x92] sm:$0xff]
      %v1328 = vld [vmem:[%s446 + $0x9a] sm:$0xff]
      %v1329 = vld [vmem:[%s446 + $0xaa] sm:$0xff]
      %v1330 = vld [vmem:[%s446 + $0xb2] sm:$0xff]
      %v1331 = vld [vmem:[%s446 + $0xc2] sm:$0xff]
      %v1332 = vld [vmem:[%s446 + $0xca] sm:$0xff]
      %v1333 = vld [vmem:[%s446 + $0xda] sm:$0xff]
      %v1334 = vld [vmem:[%s446 + $0xe2] sm:$0xff]
      %v1335 = vld [vmem:[%s446 + $0xf2] sm:$0xff]
      %v1336 = vld [vmem:[%s446 + $0xfa] sm:$0xff]
      %v1337 = vld [vmem:[%s446 + $0x10a] sm:$0xff]
      %v1338 = vld [vmem:[%s446 + $0x112] sm:$0xff]
      %v1339 = vld [vmem:[%s446 + $0x122] sm:$0xff]
      %v1340 = vld [vmem:[%s446 + $0x12a] sm:$0xff]
      %v1341 = vld [vmem:[%s446 + $0x13a] sm:$0xff]
      %v1342 = vld [vmem:[%s446 + $0x142] sm:$0xff]
      %v1343 = vld [vmem:[%s446 + $0x152] sm:$0xff]
      %v1344 = vld [vmem:[%s446 + $0x15a] sm:$0xff]
      %v1345 = vld [vmem:[%s446 + $0x16a] sm:$0xff]
      %v1346 = vld [vmem:[%s446 + $0x172] sm:$0xff]
      %1379 = vrot.lane.b32.xlu0 %v1315, 20
      %v1380 = vpop.permute.xlu0 %1379
      %1381 = vrot.lane.b32.xlu0 %v1316, 20
      %v1382 = vpop.permute.xlu0 %1381
      %1383 = vrot.lane.b32.xlu0 %v1317, 20
      %v1384 = vpop.permute.xlu0 %1383
      %1385 = vrot.lane.b32.xlu0 %v1318, 20
      %v1386 = vpop.permute.xlu0 %1385
      %1387 = vrot.lane.b32.xlu0 %v1319, 20
      %v1388 = vpop.permute.xlu0 %1387
      %1389 = vrot.lane.b32.xlu0 %v1320, 20
      %v1390 = vpop.permute.xlu0 %1389
      %1391 = vrot.lane.b32.xlu0 %v1321, 20
      %v1392 = vpop.permute.xlu0 %1391
      %1393 = vrot.lane.b32.xlu0 %v1322, 20
      %v1394 = vpop.permute.xlu0 %1393
      %1395 = vrot.lane.b32.xlu0 %v1323, 20
      %v1396 = vpop.permute.xlu0 %1395
      %1397 = vrot.lane.b32.xlu0 %v1324, 20
      %v1398 = vpop.permute.xlu0 %1397
      %1399 = vrot.lane.b32.xlu0 %v1325, 20
      %v1400 = vpop.permute.xlu0 %1399
      %1401 = vrot.lane.b32.xlu0 %v1326, 20
      %v1402 = vpop.permute.xlu0 %1401
      %1403 = vrot.lane.b32.xlu0 %v1327, 20
      %v1404 = vpop.permute.xlu0 %1403
      %1405 = vrot.lane.b32.xlu0 %v1328, 20
      %v1406 = vpop.permute.xlu0 %1405
      %1407 = vrot.lane.b32.xlu0 %v1329, 20
      %v1408 = vpop.permute.xlu0 %1407
      %1409 = vrot.lane.b32.xlu0 %v1330, 20
      %v1410 = vpop.permute.xlu0 %1409
      %1411 = vrot.lane.b32.xlu0 %v1331, 20
      %v1412 = vpop.permute.xlu0 %1411
      %1413 = vrot.lane.b32.xlu0 %v1332, 20
      %v1414 = vpop.permute.xlu0 %1413
      %1415 = vrot.lane.b32.xlu0 %v1333, 20
      %v1416 = vpop.permute.xlu0 %1415
      %1417 = vrot.lane.b32.xlu0 %v1334, 20
      %v1418 = vpop.permute.xlu0 %1417
      %1419 = vrot.lane.b32.xlu0 %v1335, 20
      %v1420 = vpop.permute.xlu0 %1419
      %1421 = vrot.lane.b32.xlu0 %v1336, 20
      %v1422 = vpop.permute.xlu0 %1421
      %1423 = vrot.lane.b32.xlu0 %v1337, 20
      %v1424 = vpop.permute.xlu0 %1423
      %1425 = vrot.lane.b32.xlu0 %v1338, 20
      %v1426 = vpop.permute.xlu0 %1425
      %1427 = vrot.lane.b32.xlu0 %v1339, 20
      %v1428 = vpop.permute.xlu0 %1427
      %1429 = vrot.lane.b32.xlu0 %v1340, 20
      %v1430 = vpop.permute.xlu0 %1429
      %1431 = vrot.lane.b32.xlu0 %v1341, 20
      %v1432 = vpop.permute.xlu0 %1431
      %1433 = vrot.lane.b32.xlu0 %v1342, 20
      %v1434 = vpop.permute.xlu0 %1433
      %1435 = vrot.lane.b32.xlu0 %v1343, 20
      %v1436 = vpop.permute.xlu0 %1435
      %1437 = vrot.lane.b32.xlu0 %v1344, 20
      %v1438 = vpop.permute.xlu0 %1437
      %1439 = vrot.lane.b32.xlu0 %v1345, 20
      %v1440 = vpop.permute.xlu0 %1439
      %1441 = vrot.lane.b32.xlu0 %v1346, 20
      %v1442 = vpop.permute.xlu0 %1441
      %vm1475 = vcmask 195744
      %1476 = vst.msk [vmem:[#allocation3] sm:$0xff] %vm1475, %v1380
      %1477 = vst.msk [vmem:[#allocation3 + $0x8] sm:$0xff] %vm1475, %v1382
      %1478 = vst.msk [vmem:[#allocation3 + $0x10] sm:$0xff] %vm1475, %v1384
      %1479 = vst.msk [vmem:[#allocation3 + $0x18] sm:$0xff] %vm1475, %v1386
      %1480 = vst.msk [vmem:[#allocation3 + $0x20] sm:$0xff] %vm1475, %v1388
      %1481 = vst.msk [vmem:[#allocation3 + $0x28] sm:$0xff] %vm1475, %v1390
      %1482 = vst.msk [vmem:[#allocation3 + $0x30] sm:$0xff] %vm1475, %v1392
      %1483 = vst.msk [vmem:[#allocation3 + $0x38] sm:$0xff] %vm1475, %v1394
      %1484 = vst.msk [vmem:[#allocation3 + $0x40] sm:$0xff] %vm1475, %v1396
      %1485 = vst.msk [vmem:[#allocation3 + $0x48] sm:$0xff] %vm1475, %v1398
      %1486 = vst.msk [vmem:[#allocation3 + $0x50] sm:$0xff] %vm1475, %v1400
      %1487 = vst.msk [vmem:[#allocation3 + $0x58] sm:$0xff] %vm1475, %v1402
      %1488 = vst.msk [vmem:[#allocation3 + $0x60] sm:$0xff] %vm1475, %v1404
      %1489 = vst.msk [vmem:[#allocation3 + $0x68] sm:$0xff] %vm1475, %v1406
      %1490 = vst.msk [vmem:[#allocation3 + $0x70] sm:$0xff] %vm1475, %v1408
      %1491 = vst.msk [vmem:[#allocation3 + $0x78] sm:$0xff] %vm1475, %v1410
      %1492 = vst.msk [vmem:[#allocation3 + $0x80] sm:$0xff] %vm1475, %v1412
      %1493 = vst.msk [vmem:[#allocation3 + $0x88] sm:$0xff] %vm1475, %v1414
      %1494 = vst.msk [vmem:[#allocation3 + $0x90] sm:$0xff] %vm1475, %v1416
      %1495 = vst.msk [vmem:[#allocation3 + $0x98] sm:$0xff] %vm1475, %v1418
      %1496 = vst.msk [vmem:[#allocation3 + $0xa0] sm:$0xff] %vm1475, %v1420
      %1497 = vst.msk [vmem:[#allocation3 + $0xa8] sm:$0xff] %vm1475, %v1422
      %1498 = vst.msk [vmem:[#allocation3 + $0xb0] sm:$0xff] %vm1475, %v1424
      %1499 = vst.msk [vmem:[#allocation3 + $0xb8] sm:$0xff] %vm1475, %v1426
      %1500 = vst.msk [vmem:[#allocation3 + $0xc0] sm:$0xff] %vm1475, %v1428
      %1501 = vst.msk [vmem:[#allocation3 + $0xc8] sm:$0xff] %vm1475, %v1430
      %1502 = vst.msk [vmem:[#allocation3 + $0xd0] sm:$0xff] %vm1475, %v1432
      %1503 = vst.msk [vmem:[#allocation3 + $0xd8] sm:$0xff] %vm1475, %v1434
      %1504 = vst.msk [vmem:[#allocation3 + $0xe0] sm:$0xff] %vm1475, %v1436
      %1505 = vst.msk [vmem:[#allocation3 + $0xe8] sm:$0xff] %vm1475, %v1438
      %1506 = vst.msk [vmem:[#allocation3 + $0xf0] sm:$0xff] %vm1475, %v1440
      %1507 = vst.msk [vmem:[#allocation3 + $0xf8] sm:$0xff] %vm1475, %v1442
      %s1508 = scalar_lea.vmem [#allocation2], 48
      %v1509 = vld [vmem:[%s1508] sm:$0xff]
      %v1510 = vld [vmem:[%s1508 + $0x8] sm:$0xff]
      %v1511 = vld [vmem:[%s1508 + $0x18] sm:$0xff]
      %v1512 = vld [vmem:[%s1508 + $0x20] sm:$0xff]
      %v1513 = vld [vmem:[%s1508 + $0x30] sm:$0xff]
      %v1514 = vld [vmem:[%s1508 + $0x38] sm:$0xff]
      %v1515 = vld [vmem:[%s1508 + $0x48] sm:$0xff]
      %v1516 = vld [vmem:[%s1508 + $0x50] sm:$0xff]
      %v1517 = vld [vmem:[%s1508 + $0x60] sm:$0xff]
      %v1518 = vld [vmem:[%s1508 + $0x68] sm:$0xff]
      %v1519 = vld [vmem:[%s1508 + $0x78] sm:$0xff]
      %v1520 = vld [vmem:[%s1508 + $0x80] sm:$0xff]
      %v1521 = vld [vmem:[%s1508 + $0x90] sm:$0xff]
      %v1522 = vld [vmem:[%s1508 + $0x98] sm:$0xff]
      %v1523 = vld [vmem:[%s1508 + $0xa8] sm:$0xff]
      %v1524 = vld [vmem:[%s1508 + $0xb0] sm:$0xff]
      %v1525 = vld [vmem:[%s1508 + $0xc0] sm:$0xff]
      %v1526 = vld [vmem:[%s1508 + $0xc8] sm:$0xff]
      %v1527 = vld [vmem:[%s1508 + $0xd8] sm:$0xff]
      %v1528 = vld [vmem:[%s1508 + $0xe0] sm:$0xff]
      %v1529 = vld [vmem:[%s1508 + $0xf0] sm:$0xff]
      %v1530 = vld [vmem:[%s1508 + $0xf8] sm:$0xff]
      %v1531 = vld [vmem:[%s1508 + $0x108] sm:$0xff]
      %v1532 = vld [vmem:[%s1508 + $0x110] sm:$0xff]
      %v1533 = vld [vmem:[%s1508 + $0x120] sm:$0xff]
      %v1534 = vld [vmem:[%s1508 + $0x128] sm:$0xff]
      %v1535 = vld [vmem:[%s1508 + $0x138] sm:$0xff]
      %v1536 = vld [vmem:[%s1508 + $0x140] sm:$0xff]
      %v1537 = vld [vmem:[%s1508 + $0x150] sm:$0xff]
      %v1538 = vld [vmem:[%s1508 + $0x158] sm:$0xff]
      %v1539 = vld [vmem:[%s1508 + $0x168] sm:$0xff]
      %v1540 = vld [vmem:[%s1508 + $0x170] sm:$0xff]
      %1573 = vrot.lane.b32.xlu0 %v1509, 24
      %v1574 = vpop.permute.xlu0 %1573
      %1575 = vrot.lane.b32.xlu0 %v1510, 24
      %v1576 = vpop.permute.xlu0 %1575
      %1577 = vrot.lane.b32.xlu0 %v1511, 24
      %v1578 = vpop.permute.xlu0 %1577
      %1579 = vrot.lane.b32.xlu0 %v1512, 24
      %v1580 = vpop.permute.xlu0 %1579
      %1581 = vrot.lane.b32.xlu0 %v1513, 24
      %v1582 = vpop.permute.xlu0 %1581
      %1583 = vrot.lane.b32.xlu0 %v1514, 24
      %v1584 = vpop.permute.xlu0 %1583
      %1585 = vrot.lane.b32.xlu0 %v1515, 24
      %v1586 = vpop.permute.xlu0 %1585
      %1587 = vrot.lane.b32.xlu0 %v1516, 24
      %v1588 = vpop.permute.xlu0 %1587
      %1589 = vrot.lane.b32.xlu0 %v1517, 24
      %v1590 = vpop.permute.xlu0 %1589
      %1591 = vrot.lane.b32.xlu0 %v1518, 24
      %v1592 = vpop.permute.xlu0 %1591
      %1593 = vrot.lane.b32.xlu0 %v1519, 24
      %v1594 = vpop.permute.xlu0 %1593
      %1595 = vrot.lane.b32.xlu0 %v1520, 24
      %v1596 = vpop.permute.xlu0 %1595
      %1597 = vrot.lane.b32.xlu0 %v1521, 24
      %v1598 = vpop.permute.xlu0 %1597
      %1599 = vrot.lane.b32.xlu0 %v1522, 24
      %v1600 = vpop.permute.xlu0 %1599
      %1601 = vrot.lane.b32.xlu0 %v1523, 24
      %v1602 = vpop.permute.xlu0 %1601
      %1603 = vrot.lane.b32.xlu0 %v1524, 24
      %v1604 = vpop.permute.xlu0 %1603
      %1605 = vrot.lane.b32.xlu0 %v1525, 24
      %v1606 = vpop.permute.xlu0 %1605
      %1607 = vrot.lane.b32.xlu0 %v1526, 24
      %v1608 = vpop.permute.xlu0 %1607
      %1609 = vrot.lane.b32.xlu0 %v1527, 24
      %v1610 = vpop.permute.xlu0 %1609
      %1611 = vrot.lane.b32.xlu0 %v1528, 24
      %v1612 = vpop.permute.xlu0 %1611
      %1613 = vrot.lane.b32.xlu0 %v1529, 24
      %v1614 = vpop.permute.xlu0 %1613
      %1615 = vrot.lane.b32.xlu0 %v1530, 24
      %v1616 = vpop.permute.xlu0 %1615
      %1617 = vrot.lane.b32.xlu0 %v1531, 24
      %v1618 = vpop.permute.xlu0 %1617
      %1619 = vrot.lane.b32.xlu0 %v1532, 24
      %v1620 = vpop.permute.xlu0 %1619
      %1621 = vrot.lane.b32.xlu0 %v1533, 24
      %v1622 = vpop.permute.xlu0 %1621
      %1623 = vrot.lane.b32.xlu0 %v1534, 24
      %v1624 = vpop.permute.xlu0 %1623
      %1625 = vrot.lane.b32.xlu0 %v1535, 24
      %v1626 = vpop.permute.xlu0 %1625
      %1627 = vrot.lane.b32.xlu0 %v1536, 24
      %v1628 = vpop.permute.xlu0 %1627
      %1629 = vrot.lane.b32.xlu0 %v1537, 24
      %v1630 = vpop.permute.xlu0 %1629
      %1631 = vrot.lane.b32.xlu0 %v1538, 24
      %v1632 = vpop.permute.xlu0 %1631
      %1633 = vrot.lane.b32.xlu0 %v1539, 24
      %v1634 = vpop.permute.xlu0 %1633
      %1635 = vrot.lane.b32.xlu0 %v1540, 24
      %v1636 = vpop.permute.xlu0 %1635
      %vm1669 = vcmask 228544
      %1670 = vst.msk [vmem:[#allocation3] sm:$0xff] %vm1669, %v1574
      %1671 = vst.msk [vmem:[#allocation3 + $0x8] sm:$0xff] %vm1669, %v1576
      %1672 = vst.msk [vmem:[#allocation3 + $0x10] sm:$0xff] %vm1669, %v1578
      %1673 = vst.msk [vmem:[#allocation3 + $0x18] sm:$0xff] %vm1669, %v1580
      %1674 = vst.msk [vmem:[#allocation3 + $0x20] sm:$0xff] %vm1669, %v1582
      %1675 = vst.msk [vmem:[#allocation3 + $0x28] sm:$0xff] %vm1669, %v1584
      %1676 = vst.msk [vmem:[#allocation3 + $0x30] sm:$0xff] %vm1669, %v1586
      %1677 = vst.msk [vmem:[#allocation3 + $0x38] sm:$0xff] %vm1669, %v1588
      %1678 = vst.msk [vmem:[#allocation3 + $0x40] sm:$0xff] %vm1669, %v1590
      %1679 = vst.msk [vmem:[#allocation3 + $0x48] sm:$0xff] %vm1669, %v1592
      %1680 = vst.msk [vmem:[#allocation3 + $0x50] sm:$0xff] %vm1669, %v1594
      %1681 = vst.msk [vmem:[#allocation3 + $0x58] sm:$0xff] %vm1669, %v1596
      %1682 = vst.msk [vmem:[#allocation3 + $0x60] sm:$0xff] %vm1669, %v1598
      %1683 = vst.msk [vmem:[#allocation3 + $0x68] sm:$0xff] %vm1669, %v1600
      %1684 = vst.msk [vmem:[#allocation3 + $0x70] sm:$0xff] %vm1669, %v1602
      %1685 = vst.msk [vmem:[#allocation3 + $0x78] sm:$0xff] %vm1669, %v1604
      %1686 = vst.msk [vmem:[#allocation3 + $0x80] sm:$0xff] %vm1669, %v1606
      %1687 = vst.msk [vmem:[#allocation3 + $0x88] sm:$0xff] %vm1669, %v1608
      %1688 = vst.msk [vmem:[#allocation3 + $0x90] sm:$0xff] %vm1669, %v1610
      %1689 = vst.msk [vmem:[#allocation3 + $0x98] sm:$0xff] %vm1669, %v1612
      %1690 = vst.msk [vmem:[#allocation3 + $0xa0] sm:$0xff] %vm1669, %v1614
      %1691 = vst.msk [vmem:[#allocation3 + $0xa8] sm:$0xff] %vm1669, %v1616
      %1692 = vst.msk [vmem:[#allocation3 + $0xb0] sm:$0xff] %vm1669, %v1618
      %1693 = vst.msk [vmem:[#allocation3 + $0xb8] sm:$0xff] %vm1669, %v1620
      %1694 = vst.msk [vmem:[#allocation3 + $0xc0] sm:$0xff] %vm1669, %v1622
      %1695 = vst.msk [vmem:[#allocation3 + $0xc8] sm:$0xff] %vm1669, %v1624
      %1696 = vst.msk [vmem:[#allocation3 + $0xd0] sm:$0xff] %vm1669, %v1626
      %1697 = vst.msk [vmem:[#allocation3 + $0xd8] sm:$0xff] %vm1669, %v1628
      %1698 = vst.msk [vmem:[#allocation3 + $0xe0] sm:$0xff] %vm1669, %v1630
      %1699 = vst.msk [vmem:[#allocation3 + $0xe8] sm:$0xff] %vm1669, %v1632
      %1700 = vst.msk [vmem:[#allocation3 + $0xf0] sm:$0xff] %vm1669, %v1634
      %1701 = vst.msk [vmem:[#allocation3 + $0xf8] sm:$0xff] %vm1669, %v1636
      %v1702 = vld [vmem:[%s1508 + $0x1] sm:$0xff]
      %v1703 = vld [vmem:[%s1508 + $0x9] sm:$0xff]
      %v1704 = vld [vmem:[%s1508 + $0x19] sm:$0xff]
      %v1705 = vld [vmem:[%s1508 + $0x21] sm:$0xff]
      %v1706 = vld [vmem:[%s1508 + $0x31] sm:$0xff]
      %v1707 = vld [vmem:[%s1508 + $0x39] sm:$0xff]
      %v1708 = vld [vmem:[%s1508 + $0x49] sm:$0xff]
      %v1709 = vld [vmem:[%s1508 + $0x51] sm:$0xff]
      %v1710 = vld [vmem:[%s1508 + $0x61] sm:$0xff]
      %v1711 = vld [vmem:[%s1508 + $0x69] sm:$0xff]
      %v1712 = vld [vmem:[%s1508 + $0x79] sm:$0xff]
      %v1713 = vld [vmem:[%s1508 + $0x81] sm:$0xff]
      %v1714 = vld [vmem:[%s1508 + $0x91] sm:$0xff]
      %v1715 = vld [vmem:[%s1508 + $0x99] sm:$0xff]
      %v1716 = vld [vmem:[%s1508 + $0xa9] sm:$0xff]
      %v1717 = vld [vmem:[%s1508 + $0xb1] sm:$0xff]
      %v1718 = vld [vmem:[%s1508 + $0xc1] sm:$0xff]
      %v1719 = vld [vmem:[%s1508 + $0xc9] sm:$0xff]
      %v1720 = vld [vmem:[%s1508 + $0xd9] sm:$0xff]
      %v1721 = vld [vmem:[%s1508 + $0xe1] sm:$0xff]
      %v1722 = vld [vmem:[%s1508 + $0xf1] sm:$0xff]
      %v1723 = vld [vmem:[%s1508 + $0xf9] sm:$0xff]
      %v1724 = vld [vmem:[%s1508 + $0x109] sm:$0xff]
      %v1725 = vld [vmem:[%s1508 + $0x111] sm:$0xff]
      %v1726 = vld [vmem:[%s1508 + $0x121] sm:$0xff]
      %v1727 = vld [vmem:[%s1508 + $0x129] sm:$0xff]
      %v1728 = vld [vmem:[%s1508 + $0x139] sm:$0xff]
      %v1729 = vld [vmem:[%s1508 + $0x141] sm:$0xff]
      %v1730 = vld [vmem:[%s1508 + $0x151] sm:$0xff]
      %v1731 = vld [vmem:[%s1508 + $0x159] sm:$0xff]
      %v1732 = vld [vmem:[%s1508 + $0x169] sm:$0xff]
      %v1733 = vld [vmem:[%s1508 + $0x171] sm:$0xff]
      %1766 = vrot.lane.b32.xlu0 %v1702, 28
      %v1767 = vpop.permute.xlu0 %1766
      %1768 = vrot.lane.b32.xlu0 %v1703, 28
      %v1769 = vpop.permute.xlu0 %1768
      %1770 = vrot.lane.b32.xlu0 %v1704, 28
      %v1771 = vpop.permute.xlu0 %1770
      %1772 = vrot.lane.b32.xlu0 %v1705, 28
      %v1773 = vpop.permute.xlu0 %1772
      %1774 = vrot.lane.b32.xlu0 %v1706, 28
      %v1775 = vpop.permute.xlu0 %1774
      %1776 = vrot.lane.b32.xlu0 %v1707, 28
      %v1777 = vpop.permute.xlu0 %1776
      %1778 = vrot.lane.b32.xlu0 %v1708, 28
      %v1779 = vpop.permute.xlu0 %1778
      %1780 = vrot.lane.b32.xlu0 %v1709, 28
      %v1781 = vpop.permute.xlu0 %1780
      %1782 = vrot.lane.b32.xlu0 %v1710, 28
      %v1783 = vpop.permute.xlu0 %1782
      %1784 = vrot.lane.b32.xlu0 %v1711, 28
      %v1785 = vpop.permute.xlu0 %1784
      %1786 = vrot.lane.b32.xlu0 %v1712, 28
      %v1787 = vpop.permute.xlu0 %1786
      %1788 = vrot.lane.b32.xlu0 %v1713, 28
      %v1789 = vpop.permute.xlu0 %1788
      %1790 = vrot.lane.b32.xlu0 %v1714, 28
      %v1791 = vpop.permute.xlu0 %1790
      %1792 = vrot.lane.b32.xlu0 %v1715, 28
      %v1793 = vpop.permute.xlu0 %1792
      %1794 = vrot.lane.b32.xlu0 %v1716, 28
      %v1795 = vpop.permute.xlu0 %1794
      %1796 = vrot.lane.b32.xlu0 %v1717, 28
      %v1797 = vpop.permute.xlu0 %1796
      %1798 = vrot.lane.b32.xlu0 %v1718, 28
      %v1799 = vpop.permute.xlu0 %1798
      %1800 = vrot.lane.b32.xlu0 %v1719, 28
      %v1801 = vpop.permute.xlu0 %1800
      %1802 = vrot.lane.b32.xlu0 %v1720, 28
      %v1803 = vpop.permute.xlu0 %1802
      %1804 = vrot.lane.b32.xlu0 %v1721, 28
      %v1805 = vpop.permute.xlu0 %1804
      %1806 = vrot.lane.b32.xlu0 %v1722, 28
      %v1807 = vpop.permute.xlu0 %1806
      %1808 = vrot.lane.b32.xlu0 %v1723, 28
      %v1809 = vpop.permute.xlu0 %1808
      %1810 = vrot.lane.b32.xlu0 %v1724, 28
      %v1811 = vpop.permute.xlu0 %1810
      %1812 = vrot.lane.b32.xlu0 %v1725, 28
      %v1813 = vpop.permute.xlu0 %1812
      %1814 = vrot.lane.b32.xlu0 %v1726, 28
      %v1815 = vpop.permute.xlu0 %1814
      %1816 = vrot.lane.b32.xlu0 %v1727, 28
      %v1817 = vpop.permute.xlu0 %1816
      %1818 = vrot.lane.b32.xlu0 %v1728, 28
      %v1819 = vpop.permute.xlu0 %1818
      %1820 = vrot.lane.b32.xlu0 %v1729, 28
      %v1821 = vpop.permute.xlu0 %1820
      %1822 = vrot.lane.b32.xlu0 %v1730, 28
      %v1823 = vpop.permute.xlu0 %1822
      %1824 = vrot.lane.b32.xlu0 %v1731, 28
      %v1825 = vpop.permute.xlu0 %1824
      %1826 = vrot.lane.b32.xlu0 %v1732, 28
      %v1827 = vpop.permute.xlu0 %1826
      %1828 = vrot.lane.b32.xlu0 %v1733, 28
      %v1829 = vpop.permute.xlu0 %1828
      %vm1862 = vcmask 261344
      %1863 = vst.msk [vmem:[#allocation3] sm:$0xff] %vm1862, %v1767
      %1864 = vst.msk [vmem:[#allocation3 + $0x8] sm:$0xff] %vm1862, %v1769
      %1865 = vst.msk [vmem:[#allocation3 + $0x10] sm:$0xff] %vm1862, %v1771
      %1866 = vst.msk [vmem:[#allocation3 + $0x18] sm:$0xff] %vm1862, %v1773
      %1867 = vst.msk [vmem:[#allocation3 + $0x20] sm:$0xff] %vm1862, %v1775
      %1868 = vst.msk [vmem:[#allocation3 + $0x28] sm:$0xff] %vm1862, %v1777
      %1869 = vst.msk [vmem:[#allocation3 + $0x30] sm:$0xff] %vm1862, %v1779
      %1870 = vst.msk [vmem:[#allocation3 + $0x38] sm:$0xff] %vm1862, %v1781
      %1871 = vst.msk [vmem:[#allocation3 + $0x40] sm:$0xff] %vm1862, %v1783
      %1872 = vst.msk [vmem:[#allocation3 + $0x48] sm:$0xff] %vm1862, %v1785
      %1873 = vst.msk [vmem:[#allocation3 + $0x50] sm:$0xff] %vm1862, %v1787
      %1874 = vst.msk [vmem:[#allocation3 + $0x58] sm:$0xff] %vm1862, %v1789
      %1875 = vst.msk [vmem:[#allocation3 + $0x60] sm:$0xff] %vm1862, %v1791
      %1876 = vst.msk [vmem:[#allocation3 + $0x68] sm:$0xff] %vm1862, %v1793
      %1877 = vst.msk [vmem:[#allocation3 + $0x70] sm:$0xff] %vm1862, %v1795
      %1878 = vst.msk [vmem:[#allocation3 + $0x78] sm:$0xff] %vm1862, %v1797
      %1879 = vst.msk [vmem:[#allocation3 + $0x80] sm:$0xff] %vm1862, %v1799
      %1880 = vst.msk [vmem:[#allocation3 + $0x88] sm:$0xff] %vm1862, %v1801
      %1881 = vst.msk [vmem:[#allocation3 + $0x90] sm:$0xff] %vm1862, %v1803
      %1882 = vst.msk [vmem:[#allocation3 + $0x98] sm:$0xff] %vm1862, %v1805
      %1883 = vst.msk [vmem:[#allocation3 + $0xa0] sm:$0xff] %vm1862, %v1807
      %1884 = vst.msk [vmem:[#allocation3 + $0xa8] sm:$0xff] %vm1862, %v1809
      %1885 = vst.msk [vmem:[#allocation3 + $0xb0] sm:$0xff] %vm1862, %v1811
      %1886 = vst.msk [vmem:[#allocation3 + $0xb8] sm:$0xff] %vm1862, %v1813
      %1887 = vst.msk [vmem:[#allocation3 + $0xc0] sm:$0xff] %vm1862, %v1815
      %1888 = vst.msk [vmem:[#allocation3 + $0xc8] sm:$0xff] %vm1862, %v1817
      %1889 = vst.msk [vmem:[#allocation3 + $0xd0] sm:$0xff] %vm1862, %v1819
      %1890 = vst.msk [vmem:[#allocation3 + $0xd8] sm:$0xff] %vm1862, %v1821
      %1891 = vst.msk [vmem:[#allocation3 + $0xe0] sm:$0xff] %vm1862, %v1823
      %1892 = vst.msk [vmem:[#allocation3 + $0xe8] sm:$0xff] %vm1862, %v1825
      %1893 = vst.msk [vmem:[#allocation3 + $0xf0] sm:$0xff] %vm1862, %v1827
      %1894 = vst.msk [vmem:[#allocation3 + $0xf8] sm:$0xff] %vm1862, %v1829
      %v1895 = vld [vmem:[%s1508 + $0x2] sm:$0xff]
      %v1896 = vld [vmem:[%s1508 + $0xa] sm:$0xff]
      %v1897 = vld [vmem:[%s1508 + $0x1a] sm:$0xff]
      %v1898 = vld [vmem:[%s1508 + $0x22] sm:$0xff]
      %v1899 = vld [vmem:[%s1508 + $0x32] sm:$0xff]
      %v1900 = vld [vmem:[%s1508 + $0x3a] sm:$0xff]
      %v1901 = vld [vmem:[%s1508 + $0x4a] sm:$0xff]
      %v1902 = vld [vmem:[%s1508 + $0x52] sm:$0xff]
      %v1903 = vld [vmem:[%s1508 + $0x62] sm:$0xff]
      %v1904 = vld [vmem:[%s1508 + $0x6a] sm:$0xff]
      %v1905 = vld [vmem:[%s1508 + $0x7a] sm:$0xff]
      %v1906 = vld [vmem:[%s1508 + $0x82] sm:$0xff]
      %v1907 = vld [vmem:[%s1508 + $0x92] sm:$0xff]
      %v1908 = vld [vmem:[%s1508 + $0x9a] sm:$0xff]
      %v1909 = vld [vmem:[%s1508 + $0xaa] sm:$0xff]
      %v1910 = vld [vmem:[%s1508 + $0xb2] sm:$0xff]
      %v1911 = vld [vmem:[%s1508 + $0xc2] sm:$0xff]
      %v1912 = vld [vmem:[%s1508 + $0xca] sm:$0xff]
      %v1913 = vld [vmem:[%s1508 + $0xda] sm:$0xff]
      %v1914 = vld [vmem:[%s1508 + $0xe2] sm:$0xff]
      %v1915 = vld [vmem:[%s1508 + $0xf2] sm:$0xff]
      %v1916 = vld [vmem:[%s1508 + $0xfa] sm:$0xff]
      %v1917 = vld [vmem:[%s1508 + $0x10a] sm:$0xff]
      %v1918 = vld [vmem:[%s1508 + $0x112] sm:$0xff]
      %v1919 = vld [vmem:[%s1508 + $0x122] sm:$0xff]
      %v1920 = vld [vmem:[%s1508 + $0x12a] sm:$0xff]
      %v1921 = vld [vmem:[%s1508 + $0x13a] sm:$0xff]
      %v1922 = vld [vmem:[%s1508 + $0x142] sm:$0xff]
      %v1923 = vld [vmem:[%s1508 + $0x152] sm:$0xff]
      %v1924 = vld [vmem:[%s1508 + $0x15a] sm:$0xff]
      %v1925 = vld [vmem:[%s1508 + $0x16a] sm:$0xff]
      %v1926 = vld [vmem:[%s1508 + $0x172] sm:$0xff]
      %1959 = vrot.lane.b32.xlu0 %v1895, 32
      %v1960 = vpop.permute.xlu0 %1959
      %1961 = vrot.lane.b32.xlu0 %v1896, 32
      %v1962 = vpop.permute.xlu0 %1961
      %1963 = vrot.lane.b32.xlu0 %v1897, 32
      %v1964 = vpop.permute.xlu0 %1963
      %1965 = vrot.lane.b32.xlu0 %v1898, 32
      %v1966 = vpop.permute.xlu0 %1965
      %1967 = vrot.lane.b32.xlu0 %v1899, 32
      %v1968 = vpop.permute.xlu0 %1967
      %1969 = vrot.lane.b32.xlu0 %v1900, 32
      %v1970 = vpop.permute.xlu0 %1969
      %1971 = vrot.lane.b32.xlu0 %v1901, 32
      %v1972 = vpop.permute.xlu0 %1971
      %1973 = vrot.lane.b32.xlu0 %v1902, 32
      %v1974 = vpop.permute.xlu0 %1973
      %1975 = vrot.lane.b32.xlu0 %v1903, 32
      %v1976 = vpop.permute.xlu0 %1975
      %1977 = vrot.lane.b32.xlu0 %v1904, 32
      %v1978 = vpop.permute.xlu0 %1977
      %1979 = vrot.lane.b32.xlu0 %v1905, 32
      %v1980 = vpop.permute.xlu0 %1979
      %1981 = vrot.lane.b32.xlu0 %v1906, 32
      %v1982 = vpop.permute.xlu0 %1981
      %1983 = vrot.lane.b32.xlu0 %v1907, 32
      %v1984 = vpop.permute.xlu0 %1983
      %1985 = vrot.lane.b32.xlu0 %v1908, 32
      %v1986 = vpop.permute.xlu0 %1985
      %1987 = vrot.lane.b32.xlu0 %v1909, 32
      %v1988 = vpop.permute.xlu0 %1987
      %1989 = vrot.lane.b32.xlu0 %v1910, 32
      %v1990 = vpop.permute.xlu0 %1989
      %1991 = vrot.lane.b32.xlu0 %v1911, 32
      %v1992 = vpop.permute.xlu0 %1991
      %1993 = vrot.lane.b32.xlu0 %v1912, 32
      %v1994 = vpop.permute.xlu0 %1993
      %1995 = vrot.lane.b32.xlu0 %v1913, 32
      %v1996 = vpop.permute.xlu0 %1995
      %1997 = vrot.lane.b32.xlu0 %v1914, 32
      %v1998 = vpop.permute.xlu0 %1997
      %1999 = vrot.lane.b32.xlu0 %v1915, 32
      %v2000 = vpop.permute.xlu0 %1999
      %2001 = vrot.lane.b32.xlu0 %v1916, 32
      %v2002 = vpop.permute.xlu0 %2001
      %2003 = vrot.lane.b32.xlu0 %v1917, 32
      %v2004 = vpop.permute.xlu0 %2003
      %2005 = vrot.lane.b32.xlu0 %v1918, 32
      %v2006 = vpop.permute.xlu0 %2005
      %2007 = vrot.lane.b32.xlu0 %v1919, 32
      %v2008 = vpop.permute.xlu0 %2007
      %2009 = vrot.lane.b32.xlu0 %v1920, 32
      %v2010 = vpop.permute.xlu0 %2009
      %2011 = vrot.lane.b32.xlu0 %v1921, 32
      %v2012 = vpop.permute.xlu0 %2011
      %2013 = vrot.lane.b32.xlu0 %v1922, 32
      %v2014 = vpop.permute.xlu0 %2013
      %2015 = vrot.lane.b32.xlu0 %v1923, 32
      %v2016 = vpop.permute.xlu0 %2015
      %2017 = vrot.lane.b32.xlu0 %v1924, 32
      %v2018 = vpop.permute.xlu0 %2017
      %2019 = vrot.lane.b32.xlu0 %v1925, 32
      %v2020 = vpop.permute.xlu0 %2019
      %2021 = vrot.lane.b32.xlu0 %v1926, 32
      %v2022 = vpop.permute.xlu0 %2021
      %vm2055 = vcmask 294144
      %2056 = vst.msk [vmem:[#allocation3] sm:$0xff] %vm2055, %v1960
      %2057 = vst.msk [vmem:[#allocation3 + $0x8] sm:$0xff] %vm2055, %v1962
      %2058 = vst.msk [vmem:[#allocation3 + $0x10] sm:$0xff] %vm2055, %v1964
      %2059 = vst.msk [vmem:[#allocation3 + $0x18] sm:$0xff] %vm2055, %v1966
      %2060 = vst.msk [vmem:[#allocation3 + $0x20] sm:$0xff] %vm2055, %v1968
      %2061 = vst.msk [vmem:[#allocation3 + $0x28] sm:$0xff] %vm2055, %v1970
      %2062 = vst.msk [vmem:[#allocation3 + $0x30] sm:$0xff] %vm2055, %v1972
      %2063 = vst.msk [vmem:[#allocation3 + $0x38] sm:$0xff] %vm2055, %v1974
      %2064 = vst.msk [vmem:[#allocation3 + $0x40] sm:$0xff] %vm2055, %v1976
      %2065 = vst.msk [vmem:[#allocation3 + $0x48] sm:$0xff] %vm2055, %v1978
      %2066 = vst.msk [vmem:[#allocation3 + $0x50] sm:$0xff] %vm2055, %v1980
      %2067 = vst.msk [vmem:[#allocation3 + $0x58] sm:$0xff] %vm2055, %v1982
      %2068 = vst.msk [vmem:[#allocation3 + $0x60] sm:$0xff] %vm2055, %v1984
      %2069 = vst.msk [vmem:[#allocation3 + $0x68] sm:$0xff] %vm2055, %v1986
      %2070 = vst.msk [vmem:[#allocation3 + $0x70] sm:$0xff] %vm2055, %v1988
      %2071 = vst.msk [vmem:[#allocation3 + $0x78] sm:$0xff] %vm2055, %v1990
      %2072 = vst.msk [vmem:[#allocation3 + $0x80] sm:$0xff] %vm2055, %v1992
      %2073 = vst.msk [vmem:[#allocation3 + $0x88] sm:$0xff] %vm2055, %v1994
      %2074 = vst.msk [vmem:[#allocation3 + $0x90] sm:$0xff] %vm2055, %v1996
      %2075 = vst.msk [vmem:[#allocation3 + $0x98] sm:$0xff] %vm2055, %v1998
      %2076 = vst.msk [vmem:[#allocation3 + $0xa0] sm:$0xff] %vm2055, %v2000
      %2077 = vst.msk [vmem:[#allocation3 + $0xa8] sm:$0xff] %vm2055, %v2002
      %2078 = vst.msk [vmem:[#allocation3 + $0xb0] sm:$0xff] %vm2055, %v2004
      %2079 = vst.msk [vmem:[#allocation3 + $0xb8] sm:$0xff] %vm2055, %v2006
      %2080 = vst.msk [vmem:[#allocation3 + $0xc0] sm:$0xff] %vm2055, %v2008
      %2081 = vst.msk [vmem:[#allocation3 + $0xc8] sm:$0xff] %vm2055, %v2010
      %2082 = vst.msk [vmem:[#allocation3 + $0xd0] sm:$0xff] %vm2055, %v2012
      %2083 = vst.msk [vmem:[#allocation3 + $0xd8] sm:$0xff] %vm2055, %v2014
      %2084 = vst.msk [vmem:[#allocation3 + $0xe0] sm:$0xff] %vm2055, %v2016
      %2085 = vst.msk [vmem:[#allocation3 + $0xe8] sm:$0xff] %vm2055, %v2018
      %2086 = vst.msk [vmem:[#allocation3 + $0xf0] sm:$0xff] %vm2055, %v2020
      %2087 = vst.msk [vmem:[#allocation3 + $0xf8] sm:$0xff] %vm2055, %v2022
      %v2088 = vld [vmem:[#allocation3] sm:$0xff]
      %v2089 = vld [vmem:[#allocation3 + $0x8] sm:$0xff]
      %v2090 = vld [vmem:[#allocation3 + $0x10] sm:$0xff]
      %v2091 = vld [vmem:[#allocation3 + $0x18] sm:$0xff]
      %v2092 = vld [vmem:[#allocation3 + $0x20] sm:$0xff]
      %v2093 = vld [vmem:[#allocation3 + $0x28] sm:$0xff]
      %v2094 = vld [vmem:[#allocation3 + $0x30] sm:$0xff]
      %v2095 = vld [vmem:[#allocation3 + $0x38] sm:$0xff]
      %v2096 = vld [vmem:[#allocation3 + $0x40] sm:$0xff]
      %v2097 = vld [vmem:[#allocation3 + $0x48] sm:$0xff]
      %v2098 = vld [vmem:[#allocation3 + $0x50] sm:$0xff]
      %v2099 = vld [vmem:[#allocation3 + $0x58] sm:$0xff]
      %v2100 = vld [vmem:[#allocation3 + $0x60] sm:$0xff]
      %v2101 = vld [vmem:[#allocation3 + $0x68] sm:$0xff]
      %v2102 = vld [vmem:[#allocation3 + $0x70] sm:$0xff]
      %v2103 = vld [vmem:[#allocation3 + $0x78] sm:$0xff]
      %v2104 = vld [vmem:[#allocation3 + $0x80] sm:$0xff]
      %v2105 = vld [vmem:[#allocation3 + $0x88] sm:$0xff]
      %v2106 = vld [vmem:[#allocation3 + $0x90] sm:$0xff]
      %v2107 = vld [vmem:[#allocation3 + $0x98] sm:$0xff]
      %v2108 = vld [vmem:[#allocation3 + $0xa0] sm:$0xff]
      %v2109 = vld [vmem:[#allocation3 + $0xa8] sm:$0xff]
      %v2110 = vld [vmem:[#allocation3 + $0xb0] sm:$0xff]
      %v2111 = vld [vmem:[#allocation3 + $0xb8] sm:$0xff]
      %v2112 = vld [vmem:[#allocation3 + $0xc0] sm:$0xff]
      %v2113 = vld [vmem:[#allocation3 + $0xc8] sm:$0xff]
      %v2114 = vld [vmem:[#allocation3 + $0xd0] sm:$0xff]
      %v2115 = vld [vmem:[#allocation3 + $0xd8] sm:$0xff]
      %v2116 = vld [vmem:[#allocation3 + $0xe0] sm:$0xff]
      %v2117 = vld [vmem:[#allocation3 + $0xe8] sm:$0xff]
      %v2118 = vld [vmem:[#allocation3 + $0xf0] sm:$0xff]
      %v2119 = vld [vmem:[#allocation3 + $0xf8] sm:$0xff]
      %v2120 = vld [vmem:[%s3] sm:$0xff]
      %v2121 = vld [vmem:[%s3 + $0x8] sm:$0xff]
      %v2122 = vld [vmem:[%s3 + $0x10] sm:$0xff]
      %v2123 = vld [vmem:[%s3 + $0x18] sm:$0xff]
      %v2124 = vld [vmem:[%s3 + $0x20] sm:$0xf]
      %v2125 = vld [vmem:[%s4] sm:$0x1]
      %v2127 = vperm.slane %v2125, 0
      %vm2129 = vcmask 293888
      %v2131 = vsel %vm2129, %v2088, 0
      %v2134 = vsel %vm2129, %v2089, 0
      %v2137 = vsel %vm2129, %v2090, 0
      %v2140 = vsel %vm2129, %v2091, 0
      %v2143 = vsel %vm2129, %v2092, 0
      %v2146 = vsel %vm2129, %v2093, 0
      %v2149 = vsel %vm2129, %v2094, 0
      %v2152 = vsel %vm2129, %v2095, 0
      %v2155 = vsel %vm2129, %v2096, 0
      %v2158 = vsel %vm2129, %v2097, 0
      %v2161 = vsel %vm2129, %v2098, 0
      %v2164 = vsel %vm2129, %v2099, 0
      %v2167 = vsel %vm2129, %v2100, 0
      %v2170 = vsel %vm2129, %v2101, 0
      %v2173 = vsel %vm2129, %v2102, 0
      %v2176 = vsel %vm2129, %v2103, 0
      %v2179 = vsel %vm2129, %v2104, 0
      %v2182 = vsel %vm2129, %v2105, 0
      %v2185 = vsel %vm2129, %v2106, 0
      %v2188 = vsel %vm2129, %v2107, 0
      %v2191 = vsel %vm2129, %v2108, 0
      %v2194 = vsel %vm2129, %v2109, 0
      %v2197 = vsel %vm2129, %v2110, 0
      %v2200 = vsel %vm2129, %v2111, 0
      %v2203 = vsel %vm2129, %v2112, 0
      %v2206 = vsel %vm2129, %v2113, 0
      %v2209 = vsel %vm2129, %v2114, 0
      %v2212 = vsel %vm2129, %v2115, 0
      %v2215 = vsel %vm2129, %v2116, 0
      %v2218 = vsel %vm2129, %v2117, 0
      %v2221 = vsel %vm2129, %v2118, 0
      %v2224 = vsel %vm2129, %v2119, 0
      %vm2226 = vcmask 1043456
      %v2228 = vsel %vm2226, %v2124, 0
      %2230 = vmatpush.msra.mxu0 0.0
      %2231 = vmatpush.msra.mxu0 0.0
      %2232 = vmatpush.msra.mxu0 0.0
      %2233 = vmatpush.msra.mxu0 0.0
      %2234 = vmatpush.msra.mxu0 0.0
      %2235 = vmatpush.msra.mxu0 0.0
      %2236 = vmatpush.msra.mxu0 0.0
      %2237 = vmatpush.msra.mxu0 0.0
      %2238 = vmatpush.msra.mxu0 0.0
      %2239 = vmatpush.msra.mxu0 0.0
      %2240 = vmatpush.msra.mxu0 0.0
      %2241 = vmatpush.msra.mxu0 %v2228
      %2242 = vmatpush.msra.mxu0 %v2123
      %2243 = vmatpush.msra.mxu0 %v2122
      %2244 = vmatpush.msra.mxu0 %v2121
      %2245 = vmatpush.msra.mxu0 %v2120
      %2246 = vmatmul.f32.gmra.mxu0 %v2131
      %v2247 = vpop.f32.mrf.mxu0
      %v2248 = vadd.f32 %v2127, %v2247
      %2249 = vmatmul.f32.gmra.mxu0 %v2134
      %v2250 = vpop.f32.mrf.mxu0
      %v2251 = vadd.f32 %v2127, %v2250
      %2252 = vmatmul.f32.gmra.mxu0 %v2137
      %v2253 = vpop.f32.mrf.mxu0
      %v2254 = vadd.f32 %v2127, %v2253
      %2255 = vmatmul.f32.gmra.mxu0 %v2140
      %v2256 = vpop.f32.mrf.mxu0
      %v2257 = vadd.f32 %v2127, %v2256
      %2258 = vmatmul.f32.gmra.mxu0 %v2143
      %v2259 = vpop.f32.mrf.mxu0
      %v2260 = vadd.f32 %v2127, %v2259
      %2261 = vmatmul.f32.gmra.mxu0 %v2146
      %v2262 = vpop.f32.mrf.mxu0
      %v2263 = vadd.f32 %v2127, %v2262
      %2264 = vmatmul.f32.gmra.mxu0 %v2149
      %v2265 = vpop.f32.mrf.mxu0
      %v2266 = vadd.f32 %v2127, %v2265
      %2267 = vmatmul.f32.gmra.mxu0 %v2152
      %v2268 = vpop.f32.mrf.mxu0
      %v2269 = vadd.f32 %v2127, %v2268
      %2270 = vmatmul.f32.gmra.mxu0 %v2155
      %v2271 = vpop.f32.mrf.mxu0
      %v2272 = vadd.f32 %v2127, %v2271
      %2273 = vmatmul.f32.gmra.mxu0 %v2158
      %v2274 = vpop.f32.mrf.mxu0
      %v2275 = vadd.f32 %v2127, %v2274
      %2276 = vmatmul.f32.gmra.mxu0 %v2161
      %v2277 = vpop.f32.mrf.mxu0
      %v2278 = vadd.f32 %v2127, %v2277
      %2279 = vmatmul.f32.gmra.mxu0 %v2164
      %v2280 = vpop.f32.mrf.mxu0
      %v2281 = vadd.f32 %v2127, %v2280
      %2282 = vmatmul.f32.gmra.mxu0 %v2167
      %v2283 = vpop.f32.mrf.mxu0
      %v2284 = vadd.f32 %v2127, %v2283
      %2285 = vmatmul.f32.gmra.mxu0 %v2170
      %v2286 = vpop.f32.mrf.mxu0
      %v2287 = vadd.f32 %v2127, %v2286
      %2288 = vmatmul.f32.gmra.mxu0 %v2173
      %v2289 = vpop.f32.mrf.mxu0
      %v2290 = vadd.f32 %v2127, %v2289
      %2291 = vmatmul.f32.gmra.mxu0 %v2176
      %v2292 = vpop.f32.mrf.mxu0
      %v2293 = vadd.f32 %v2127, %v2292
      %2294 = vmatmul.f32.gmra.mxu0 %v2179
      %v2295 = vpop.f32.mrf.mxu0
      %v2296 = vadd.f32 %v2127, %v2295
      %2297 = vmatmul.f32.gmra.mxu0 %v2182
      %v2298 = vpop.f32.mrf.mxu0
      %v2299 = vadd.f32 %v2127, %v2298
      %2300 = vmatmul.f32.gmra.mxu0 %v2185
      %v2301 = vpop.f32.mrf.mxu0
      %v2302 = vadd.f32 %v2127, %v2301
      %2303 = vmatmul.f32.gmra.mxu0 %v2188
      %v2304 = vpop.f32.mrf.mxu0
      %v2305 = vadd.f32 %v2127, %v2304
      %2306 = vmatmul.f32.gmra.mxu0 %v2191
      %v2307 = vpop.f32.mrf.mxu0
      %v2308 = vadd.f32 %v2127, %v2307
      %2309 = vmatmul.f32.gmra.mxu0 %v2194
      %v2310 = vpop.f32.mrf.mxu0
      %v2311 = vadd.f32 %v2127, %v2310
      %2312 = vmatmul.f32.gmra.mxu0 %v2197
      %v2313 = vpop.f32.mrf.mxu0
      %v2314 = vadd.f32 %v2127, %v2313
      %2315 = vmatmul.f32.gmra.mxu0 %v2200
      %v2316 = vpop.f32.mrf.mxu0
      %v2317 = vadd.f32 %v2127, %v2316
      %2318 = vmatmul.f32.gmra.mxu0 %v2203
      %v2319 = vpop.f32.mrf.mxu0
      %v2320 = vadd.f32 %v2127, %v2319
      %2321 = vmatmul.f32.gmra.mxu0 %v2206
      %v2322 = vpop.f32.mrf.mxu0
      %v2323 = vadd.f32 %v2127, %v2322
      %2324 = vmatmul.f32.gmra.mxu0 %v2209
      %v2325 = vpop.f32.mrf.mxu0
      %v2326 = vadd.f32 %v2127, %v2325
      %2327 = vmatmul.f32.gmra.mxu0 %v2212
      %v2328 = vpop.f32.mrf.mxu0
      %v2329 = vadd.f32 %v2127, %v2328
      %2330 = vmatmul.f32.gmra.mxu0 %v2215
      %v2331 = vpop.f32.mrf.mxu0
      %v2332 = vadd.f32 %v2127, %v2331
      %2333 = vmatmul.f32.gmra.mxu0 %v2218
      %v2334 = vpop.f32.mrf.mxu0
      %v2335 = vadd.f32 %v2127, %v2334
      %2336 = vmatmul.f32.gmra.mxu0 %v2221
      %v2337 = vpop.f32.mrf.mxu0
      %v2338 = vadd.f32 %v2127, %v2337
      %2339 = vmatmul.f32.gmra.mxu0 %v2224
      %v2340 = vpop.f32.mrf.mxu0
      %v2341 = vadd.f32 %v2127, %v2340
      %2342 = vdwg.mxu0
      %v2343 = vmax.f32 %v2248, 0.0
      %v2344 = vmax.f32 %v2251, 0.0
      %v2345 = vmax.f32 %v2254, 0.0
      %v2346 = vmax.f32 %v2257, 0.0
      %v2347 = vmax.f32 %v2260, 0.0
      %v2348 = vmax.f32 %v2263, 0.0
      %v2349 = vmax.f32 %v2266, 0.0
      %v2350 = vmax.f32 %v2269, 0.0
      %v2351 = vmax.f32 %v2272, 0.0
      %v2352 = vmax.f32 %v2275, 0.0
      %v2353 = vmax.f32 %v2278, 0.0
      %v2354 = vmax.f32 %v2281, 0.0
      %v2355 = vmax.f32 %v2284, 0.0
      %v2356 = vmax.f32 %v2287, 0.0
      %v2357 = vmax.f32 %v2290, 0.0
      %v2358 = vmax.f32 %v2293, 0.0
      %v2359 = vmax.f32 %v2296, 0.0
      %v2360 = vmax.f32 %v2299, 0.0
      %v2361 = vmax.f32 %v2302, 0.0
      %v2362 = vmax.f32 %v2305, 0.0
      %v2363 = vmax.f32 %v2308, 0.0
      %v2364 = vmax.f32 %v2311, 0.0
      %v2365 = vmax.f32 %v2314, 0.0
      %v2366 = vmax.f32 %v2317, 0.0
      %v2367 = vmax.f32 %v2320, 0.0
      %v2368 = vmax.f32 %v2323, 0.0
      %v2369 = vmax.f32 %v2326, 0.0
      %v2370 = vmax.f32 %v2329, 0.0
      %v2371 = vmax.f32 %v2332, 0.0
      %v2372 = vmax.f32 %v2335, 0.0
      %v2373 = vmax.f32 %v2338, 0.0
      %v2374 = vmax.f32 %v2341, 0.0
      %vm2375 = vcmask 64512
      %2376 = vst.msk [vmem:[%s289] sm:$0xff] %vm2375, %v2343
      %2377 = vst.msk [vmem:[%s289 + $0x8] sm:$0xff] %vm2375, %v2344
      %2378 = vst.msk [vmem:[%s289 + $0x10] sm:$0xff] %vm2375, %v2345
      %2379 = vst.msk [vmem:[%s289 + $0x18] sm:$0xff] %vm2375, %v2346
      %2380 = vst.msk [vmem:[%s289 + $0x20] sm:$0xff] %vm2375, %v2347
      %2381 = vst.msk [vmem:[%s289 + $0x28] sm:$0xff] %vm2375, %v2348
      %2382 = vst.msk [vmem:[%s289 + $0x30] sm:$0xff] %vm2375, %v2349
      %2383 = vst.msk [vmem:[%s289 + $0x38] sm:$0xff] %vm2375, %v2350
      %2384 = vst.msk [vmem:[%s289 + $0x40] sm:$0xff] %vm2375, %v2351
      %2385 = vst.msk [vmem:[%s289 + $0x48] sm:$0xff] %vm2375, %v2352
      %2386 = vst.msk [vmem:[%s289 + $0x50] sm:$0xff] %vm2375, %v2353
      %2387 = vst.msk [vmem:[%s289 + $0x58] sm:$0xff] %vm2375, %v2354
      %2388 = vst.msk [vmem:[%s289 + $0x60] sm:$0xff] %vm2375, %v2355
      %2389 = vst.msk [vmem:[%s289 + $0x68] sm:$0xff] %vm2375, %v2356
      %2390 = vst.msk [vmem:[%s289 + $0x70] sm:$0xff] %vm2375, %v2357
      %2391 = vst.msk [vmem:[%s289 + $0x78] sm:$0xff] %vm2375, %v2358
      %2392 = vst.msk [vmem:[%s289 + $0x80] sm:$0xff] %vm2375, %v2359
      %2393 = vst.msk [vmem:[%s289 + $0x88] sm:$0xff] %vm2375, %v2360
      %2394 = vst.msk [vmem:[%s289 + $0x90] sm:$0xff] %vm2375, %v2361
      %2395 = vst.msk [vmem:[%s289 + $0x98] sm:$0xff] %vm2375, %v2362
      %2396 = vst.msk [vmem:[%s289 + $0xa0] sm:$0xff] %vm2375, %v2363
      %2397 = vst.msk [vmem:[%s289 + $0xa8] sm:$0xff] %vm2375, %v2364
      %2398 = vst.msk [vmem:[%s289 + $0xb0] sm:$0xff] %vm2375, %v2365
      %2399 = vst.msk [vmem:[%s289 + $0xb8] sm:$0xff] %vm2375, %v2366
      %2400 = vst.msk [vmem:[%s289 + $0xc0] sm:$0xff] %vm2375, %v2367
      %2401 = vst.msk [vmem:[%s289 + $0xc8] sm:$0xff] %vm2375, %v2368
      %2402 = vst.msk [vmem:[%s289 + $0xd0] sm:$0xff] %vm2375, %v2369
      %2403 = vst.msk [vmem:[%s289 + $0xd8] sm:$0xff] %vm2375, %v2370
      %2404 = vst.msk [vmem:[%s289 + $0xe0] sm:$0xff] %vm2375, %v2371
      %2405 = vst.msk [vmem:[%s289 + $0xe8] sm:$0xff] %vm2375, %v2372
      %2406 = vst.msk [vmem:[%s289 + $0xf0] sm:$0xff] %vm2375, %v2373
      %2407 = vst.msk [vmem:[%s289 + $0xf8] sm:$0xff] %vm2375, %v2374
      %v2408 = vsel %vm2375, %v2343, 0.0
      %v2409 = vsel %vm2375, %v2344, 0.0
      %v2410 = vadd.f32 %v2408, %v2409
      %v2411 = vsel %vm2375, %v2345, 0.0
      %v2412 = vadd.f32 %v2410, %v2411
      %v2413 = vsel %vm2375, %v2346, 0.0
      %v2414 = vadd.f32 %v2412, %v2413
      %v2415 = vsel %vm2375, %v2347, 0.0
      %v2416 = vadd.f32 %v2414, %v2415
      %v2417 = vsel %vm2375, %v2348, 0.0
      %v2418 = vadd.f32 %v2416, %v2417
      %v2419 = vsel %vm2375, %v2349, 0.0
      %v2420 = vadd.f32 %v2418, %v2419
      %v2421 = vsel %vm2375, %v2350, 0.0
      %v2422 = vadd.f32 %v2420, %v2421
      %v2423 = vsel %vm2375, %v2351, 0.0
      %v2424 = vadd.f32 %v2422, %v2423
      %v2425 = vsel %vm2375, %v2352, 0.0
      %v2426 = vadd.f32 %v2424, %v2425
      %v2427 = vsel %vm2375, %v2353, 0.0
      %v2428 = vadd.f32 %v2426, %v2427
      %v2429 = vsel %vm2375, %v2354, 0.0
      %v2430 = vadd.f32 %v2428, %v2429
      %v2431 = vsel %vm2375, %v2355, 0.0
      %v2432 = vadd.f32 %v2430, %v2431
      %v2433 = vsel %vm2375, %v2356, 0.0
      %v2434 = vadd.f32 %v2432, %v2433
      %v2435 = vsel %vm2375, %v2357, 0.0
      %v2436 = vadd.f32 %v2434, %v2435
      %v2437 = vsel %vm2375, %v2358, 0.0
      %v2438 = vadd.f32 %v2436, %v2437
      %v2439 = vsel %vm2375, %v2359, 0.0
      %v2440 = vadd.f32 %v2438, %v2439
      %v2441 = vsel %vm2375, %v2360, 0.0
      %v2442 = vadd.f32 %v2440, %v2441
      %v2443 = vsel %vm2375, %v2361, 0.0
      %v2444 = vadd.f32 %v2442, %v2443
      %v2445 = vsel %vm2375, %v2362, 0.0
      %v2446 = vadd.f32 %v2444, %v2445
      %v2447 = vsel %vm2375, %v2363, 0.0
      %v2448 = vadd.f32 %v2446, %v2447
      %v2449 = vsel %vm2375, %v2364, 0.0
      %v2450 = vadd.f32 %v2448, %v2449
      %v2451 = vsel %vm2375, %v2365, 0.0
      %v2452 = vadd.f32 %v2450, %v2451
      %v2453 = vsel %vm2375, %v2366, 0.0
      %v2454 = vadd.f32 %v2452, %v2453
      %v2455 = vsel %vm2375, %v2367, 0.0
      %v2456 = vadd.f32 %v2454, %v2455
      %v2457 = vsel %vm2375, %v2368, 0.0
      %v2458 = vadd.f32 %v2456, %v2457
      %v2459 = vsel %vm2375, %v2369, 0.0
      %v2460 = vadd.f32 %v2458, %v2459
      %v2461 = vsel %vm2375, %v2370, 0.0
      %v2462 = vadd.f32 %v2460, %v2461
      %v2463 = vsel %vm2375, %v2371, 0.0
      %v2464 = vadd.f32 %v2462, %v2463
      %v2465 = vsel %vm2375, %v2372, 0.0
      %v2466 = vadd.f32 %v2464, %v2465
      %v2467 = vsel %vm2375, %v2373, 0.0
      %v2468 = vadd.f32 %v2466, %v2467
      %v2469 = vsel %vm2375, %v2374, 0.0
      %v2470 = vadd.f32 %v2468, %v2469
      %v2471 = vrot.slane %v2470, 4
      %v2472 = vadd.f32 %v2470, %v2471
      %v2473 = vrot.slane %v2472, 2
      %v2474 = vadd.f32 %v2472, %v2473
      %v2475 = vrot.slane %v2474, 1
      %v2476 = vadd.f32 %v2474, %v2475
      %vm2477 = vcmask 57344
      %2478 = vst.msk [vmem:[%s292] sm:$0x1] %vm2477, %v2476
      %v2479 = vmul.f32 %v2343, %v2343
      %v2480 = vmul.f32 %v2344, %v2344
      %v2481 = vmul.f32 %v2345, %v2345
      %v2482 = vmul.f32 %v2346, %v2346
      %v2483 = vmul.f32 %v2347, %v2347
      %v2484 = vmul.f32 %v2348, %v2348
      %v2485 = vmul.f32 %v2349, %v2349
      %v2486 = vmul.f32 %v2350, %v2350
      %v2487 = vmul.f32 %v2351, %v2351
      %v2488 = vmul.f32 %v2352, %v2352
      %v2489 = vmul.f32 %v2353, %v2353
      %v2490 = vmul.f32 %v2354, %v2354
      %v2491 = vmul.f32 %v2355, %v2355
      %v2492 = vmul.f32 %v2356, %v2356
      %v2493 = vmul.f32 %v2357, %v2357
      %v2494 = vmul.f32 %v2358, %v2358
      %v2495 = vmul.f32 %v2359, %v2359
      %v2496 = vmul.f32 %v2360, %v2360
      %v2497 = vmul.f32 %v2361, %v2361
      %v2498 = vmul.f32 %v2362, %v2362
      %v2499 = vmul.f32 %v2363, %v2363
      %v2500 = vmul.f32 %v2364, %v2364
      %v2501 = vmul.f32 %v2365, %v2365
      %v2502 = vmul.f32 %v2366, %v2366
      %v2503 = vmul.f32 %v2367, %v2367
      %v2504 = vmul.f32 %v2368, %v2368
      %v2505 = vmul.f32 %v2369, %v2369
      %v2506 = vmul.f32 %v2370, %v2370
      %v2507 = vmul.f32 %v2371, %v2371
      %v2508 = vmul.f32 %v2372, %v2372
      %v2509 = vmul.f32 %v2373, %v2373
      %v2510 = vmul.f32 %v2374, %v2374
      %v2511 = vsel %vm2375, %v2479, 0.0
      %v2512 = vsel %vm2375, %v2480, 0.0
      %v2513 = vadd.f32 %v2511, %v2512
      %v2514 = vsel %vm2375, %v2481, 0.0
      %v2515 = vadd.f32 %v2513, %v2514
      %v2516 = vsel %vm2375, %v2482, 0.0
      %v2517 = vadd.f32 %v2515, %v2516
      %v2518 = vsel %vm2375, %v2483, 0.0
      %v2519 = vadd.f32 %v2517, %v2518
      %v2520 = vsel %vm2375, %v2484, 0.0
      %v2521 = vadd.f32 %v2519, %v2520
      %v2522 = vsel %vm2375, %v2485, 0.0
      %v2523 = vadd.f32 %v2521, %v2522
      %v2524 = vsel %vm2375, %v2486, 0.0
      %v2525 = vadd.f32 %v2523, %v2524
      %v2526 = vsel %vm2375, %v2487, 0.0
      %v2527 = vadd.f32 %v2525, %v2526
      %v2528 = vsel %vm2375, %v2488, 0.0
      %v2529 = vadd.f32 %v2527, %v2528
      %v2530 = vsel %vm2375, %v2489, 0.0
      %v2531 = vadd.f32 %v2529, %v2530
      %v2532 = vsel %vm2375, %v2490, 0.0
      %v2533 = vadd.f32 %v2531, %v2532
      %v2534 = vsel %vm2375, %v2491, 0.0
      %v2535 = vadd.f32 %v2533, %v2534
      %v2536 = vsel %vm2375, %v2492, 0.0
      %v2537 = vadd.f32 %v2535, %v2536
      %v2538 = vsel %vm2375, %v2493, 0.0
      %v2539 = vadd.f32 %v2537, %v2538
      %v2540 = vsel %vm2375, %v2494, 0.0
      %v2541 = vadd.f32 %v2539, %v2540
      %v2542 = vsel %vm2375, %v2495, 0.0
      %v2543 = vadd.f32 %v2541, %v2542
      %v2544 = vsel %vm2375, %v2496, 0.0
      %v2545 = vadd.f32 %v2543, %v2544
      %v2546 = vsel %vm2375, %v2497, 0.0
      %v2547 = vadd.f32 %v2545, %v2546
      %v2548 = vsel %vm2375, %v2498, 0.0
      %v2549 = vadd.f32 %v2547, %v2548
      %v2550 = vsel %vm2375, %v2499, 0.0
      %v2551 = vadd.f32 %v2549, %v2550
      %v2552 = vsel %vm2375, %v2500, 0.0
      %v2553 = vadd.f32 %v2551, %v2552
      %v2554 = vsel %vm2375, %v2501, 0.0
      %v2555 = vadd.f32 %v2553, %v2554
      %v2556 = vsel %vm2375, %v2502, 0.0
      %v2557 = vadd.f32 %v2555, %v2556
      %v2558 = vsel %vm2375, %v2503, 0.0
      %v2559 = vadd.f32 %v2557, %v2558
      %v2560 = vsel %vm2375, %v2504, 0.0
      %v2561 = vadd.f32 %v2559, %v2560
      %v2562 = vsel %vm2375, %v2505, 0.0
      %v2563 = vadd.f32 %v2561, %v2562
      %v2564 = vsel %vm2375, %v2506, 0.0
      %v2565 = vadd.f32 %v2563, %v2564
      %v2566 = vsel %vm2375, %v2507, 0.0
      %v2567 = vadd.f32 %v2565, %v2566
      %v2568 = vsel %vm2375, %v2508, 0.0
      %v2569 = vadd.f32 %v2567, %v2568
      %v2570 = vsel %vm2375, %v2509, 0.0
      %v2571 = vadd.f32 %v2569, %v2570
      %v2572 = vsel %vm2375, %v2510, 0.0
      %v2573 = vadd.f32 %v2571, %v2572
      %v2574 = vrot.slane %v2573, 4
      %v2575 = vadd.f32 %v2573, %v2574
      %v2576 = vrot.slane %v2575, 2
      %v2577 = vadd.f32 %v2575, %v2576
      %v2578 = vrot.slane %v2577, 1
      %v2579 = vadd.f32 %v2577, %v2578
      %2580 = vst.msk [vmem:[%s295] sm:$0x1] %vm2477, %v2579
      %p2581 = scmp.lt.s32.totalorder %s19, 1
      %s2582 = scalar_select %p2581, %s19, 1
      %s2583 = smul.addr %s2582, 32
      %s2584 = smul.addr %s2583, 8
      %s2585 = scalar_lea.vmem %s5, %s2584
      %p2586 = scmp.lt.s32.totalorder %s19, 1
      %s2587 = scalar_select %p2586, %s19, 1
      %s2588 = scalar_lea.vmem %s6, %s2587
      %p2589 = scmp.lt.s32.totalorder %s19, 1
      %s2590 = scalar_select %p2589, %s19, 1
      %s2591 = scalar_lea.vmem %s7, %s2590
      // Predicated region
      $region41: #{block_forward.3} parent=39 // pred_check
        %p2592 = pneg %p147
      $region42: #{block_forward.3} parent=39 // pred_check_branch
        %2594 = sbr.rel (%p2592) target = $region44
      $region43: #{block_forward.3} parent=39 // pred_region
        _
      $region44: #{block_forward.3} parent=39 // pred_fallthru
        _
      // Predicated region
      $region45: #{block_forward.3} parent=39 // pred_check
        %p2595 = pneg %p173
      $region46: #{block_forward.3} parent=39 // pred_check_branch
        %2597 = sbr.rel (%p2595) target = $region48
      $region47: #{block_forward.3} parent=39 // pred_region
        _
      $region48: #{block_forward.3} parent=39 // pred_fallthru
        _
      // Predicated region
      $region49: #{block_forward.3} parent=39 // pred_check
        %p2598 = pneg %p199
      $region50: #{block_forward.3} parent=39 // pred_check_branch
        %2600 = sbr.rel (%p2598) target = $region52
      $region51: #{block_forward.3} parent=39 // pred_region
        _
      $region52: #{block_forward.3} parent=39 // pred_fallthru
        _
    $region40: #{block_forward.3} parent=5 // pred_fallthru
      _
    %p2601 = scmp.le.s32.totalorder 2, %s14
    // Predicated region
    $region53: #{block_forward.3} parent=5 // pred_check
      %p2602 = pneg %p2601
    $region54: #{block_forward.3} parent=5 // pred_check_branch
      %2604 = sbr.rel (%p2602) target = $region56
    $region55: #{block_forward.3} parent=5 // pred_region
      %s2605 = ssub.s32 %s14, 2
      // Predicated region
      $region57: #{block_forward.3} parent=55 // pred_check
        %p2606 = pneg %p153
      $region58: #{block_forward.3} parent=55 // pred_check_branch
        %2608 = sbr.rel (%p2606) target = $region60
      $region59: #{block_forward.3} parent=55 // pred_region
        %p2609 = scmp.lt.s32.totalorder %s20, 1
        %s2610 = scalar_select %p2609, %s20, 1
        %s2611 = smul.addr %s2610, 32
        %s2612 = smul.addr %s2611, 8
        %s2613 = scalar_lea.vmem %s5, %s2612
      $region60: #{block_forward.3} parent=55 // pred_fallthru
        _
      // Predicated region
      $region61: #{block_forward.3} parent=55 // pred_check
        %p2614 = pneg %p179
      $region62: #{block_forward.3} parent=55 // pred_check_branch
        %2616 = sbr.rel (%p2614) target = $region64
      $region63: #{block_forward.3} parent=55 // pred_region
        %p2617 = scmp.lt.s32.totalorder %s20, 1
        %s2618 = scalar_select %p2617, %s20, 1
        %s2619 = scalar_lea.vmem %s6, %s2618
      $region64: #{block_forward.3} parent=55 // pred_fallthru
        _
      // Predicated region
      $region65: #{block_forward.3} parent=55 // pred_check
        %p2620 = pneg %p205
      $region66: #{block_forward.3} parent=55 // pred_check_branch
        %2622 = sbr.rel (%p2620) target = $region68
      $region67: #{block_forward.3} parent=55 // pred_region
        %p2623 = scmp.lt.s32.totalorder %s20, 1
        %s2624 = scalar_select %p2623, %s20, 1
        %s2625 = scalar_lea.vmem %s7, %s2624
      $region68: #{block_forward.3} parent=55 // pred_fallthru
        _
    $region56: #{block_forward.3} parent=5 // pred_fallthru
      _
  $region6: #{block_forward.3} parent=0 // loop_footer
    %s18 = sadd.s32 1, %s14
  $region7: #{block_forward.3} parent=0 // loop_footer_branch
    %13 = sbr.rel target = $region3
  $region8: #{block_forward.3} parent=0 // loop_exit
    _

// kernel: block_forward.4
$region0: #{block_forward.4}
  #allocation0 [shape = 'u32[]', space=smem, size = 0x4, offset = 0x4, fixed_abs, tag = 'smem constant byte address 0x4 - core index']
  #allocation1 [shape = 'u32[72,128]{1,0:T(1,128)}', space=vmem, size = 0x9000, scoped, tag = 'internal scratch']
  #allocation2 [shape = 'f32[18,18,8]{2,1,0:T(8,128)}', space=vmem, size = 0x36000, scoped, tag = 'scratch operand']
  #allocation3 [shape = 'f32[256,72]{1,0:T(8,128)}', space=vmem, size = 0x20000, scoped, tag = 'scratch operand']
  %s0 = inlined_call_operand.vmem [shape: f32[2,16,16,8], index: 0, kind: input, shape index: {}]
  %s1 = inlined_call_operand.vmem [shape: f32[1,8], index: 1, kind: input, shape index: {}]
  %s2 = inlined_call_operand.vmem [shape: f32[1,8], index: 2, kind: input, shape index: {}]
  %s3 = inlined_call_operand.vmem [shape: f32[72,8], index: 3, kind: input, shape index: {}]
  %s4 = inlined_call_operand.vmem [shape: f32[1,8], index: 4, kind: input, shape index: {}]
  %s5 = inlined_call_operand.vmem [shape: f32[2,16,16,8], index: 5, kind: output, shape index: {0}]
  %s6 = inlined_call_operand.vmem [shape: f32[2,1,8], index: 6, kind: output, shape index: {1}]
  %s7 = inlined_call_operand.vmem [shape: f32[2,1,8], index: 7, kind: output, shape index: {2}]
  %8 = xla_tuple %s5, %s6, %s7
  %s9 = sld [smem:[#allocation0]]
  $region69: #{block_forward.4} parent=0
    _
  %s11 = ssub.s32 1, %s9
  %s12 = scalar_select 0, %s11, %s9
  loop: start=0, step=1, limit=4
  $region2: #{block_forward.4} parent=0 // loop_pre_header
    _
  $region3: #{block_forward.4} parent=0 // loop_header
    %s14 = sphi 0, %s18
    %p15 = scmp.ge.s32.totalorder %s14, 4
    %s24 = sphi 0, %s26
    %s27 = sphi 0, %s24
    %s28 = sphi 0, %s27
    %s44 = sphi 0, %s28
    %s48 = sphi 0, %s48
    %s50 = sphi 0, %s48
    %s51 = sphi 0, %s50
    %s65 = sphi 0, %s51
    %s69 = sphi 0, %s69
    %s71 = sphi 0, %s69
    %s72 = sphi 0, %s71
    %s86 = sphi 0, %s72
    %s90 = sphi 0, %s90
    %s92 = sphi 0, %s90
    %s93 = sphi 0, %s92
    %s107 = sphi 0, %s93
    %s111 = sphi 0, %s111
    %s113 = sphi 0, %s111
    %s114 = sphi 0, %s113
    %s128 = sphi 0, %s114
    %s134 = sphi 0, %s136
    %s137 = sphi 0, %s134
    %s138 = sphi 0, %s137
    %s154 = sphi 0, %s138
    %s160 = sphi 0, %s162
    %s163 = sphi 0, %s160
    %s164 = sphi 0, %s163
    %s180 = sphi 0, %s164
    %s186 = sphi 0, %s188
    %s189 = sphi 0, %s186
    %s190 = sphi 0, %s189
    %s206 = sphi 0, %s190
  $region4: #{block_forward.4} parent=0 // loop_header_branch
    %17 = sbr.rel (%p15) target = $region8
  $region5: #{block_forward.4} parent=0 // loop_body
    %s19 = ssub.s32 %s14, 1
    %s20 = ssub.s32 %s14, 2
    %s21 = sadd.s32 %s14, 1
    %s22 = ssub.s32 %s14, %s21
    %p23 = scmp.eq.s32.totalorder %s22, 0
    %s25 = sadd.s32 %s24, 1
    %s26 = scalar_select %p23, %s24, %s25
    %p29 = pneg %p23
    %p30 = scmp.eq.s32.totalorder %s14, 1
    %p31 = por %p29, %p30
    %p32 = scmp.ne.s32.totalorder %s24, %s27
    %p33 = scmp.eq.s32.totalorder %s14, 0
    %p34 = por %p32, %p33
    %p35 = scmp.ne.s32.totalorder %s24, %s27
    %p36 = scmp.eq.s32.totalorder %s19, 1
    %p37 = por %p35, %p36
    %p38 = scmp.ne.s32.totalorder %s27, %s28
    %p39 = scmp.eq.s32.totalorder %s19, 0
    %p40 = por %p38, %p39
    %p41 = scmp.ne.s32.totalorder %s27, %s28
    %p42 = scmp.eq.s32.totalorder %s20, 1
    %p43 = por %p41, %p42
    %p45 = scmp.ne.s32.totalorder %s28, %s44
    %p46 = scmp.eq.s32.totalorder %s20, 0
    %p47 = por %p45, %p46
    %s49 = sadd.s32 %s48, 1
    %p52 = scmp.eq.s32.totalorder %s14, 1
    %p53 = scmp.ne.s32.totalorder %s48, %s50
    %p54 = scmp.eq.s32.totalorder %s14, 0
    %p55 = por %p53, %p54
    %p56 = scmp.ne.s32.totalorder %s48, %s50
    %p57 = scmp.eq.s32.totalorder %s19, 1
    %p58 = por %p56, %p57
    %p59 = scmp.ne.s32.totalorder %s50, %s51
    %p60 = scmp.eq.s32.totalorder %s19, 0
    %p61 = por %p59, %p60
    %p62 = scmp.ne.s32.totalorder %s50, %s51
    %p63 = scmp.eq.s32.totalorder %s20, 1
    %p64 = por %p62, %p63
    %p66 = scmp.ne.s32.totalorder %s51, %s65
    %p67 = scmp.eq.s32.totalorder %s20, 0
    %p68 = por %p66, %p67
    %s70 = sadd.s32 %s69, 1
    %p73 = scmp.eq.s32.totalorder %s14, 1
    %p74 = scmp.ne.s32.totalorder %s69, %s71
    %p75 = scmp.eq.s32.totalorder %s14, 0
    %p76 = por %p74, %p75
    %p77 = scmp.ne.s32.totalorder %s69, %s71
    %p78 = scmp.eq.s32.totalorder %s19, 1
    %p79 = por %p77, %p78
    %p80 = scmp.ne.s32.totalorder %s71, %s72
    %p81 = scmp.eq.s32.totalorder %s19, 0
    %p82 = por %p80, %p81
    %p83 = scmp.ne.s32.totalorder %s71, %s72
    %p84 = scmp.eq.s32.totalorder %s20, 1
    %p85 = por %p83, %p84
    %p87 = scmp.ne.s32.totalorder %s72, %s86
    %p88 = scmp.eq.s32.totalorder %s20, 0
    %p89 = por %p87, %p88
    %s91 = sadd.s32 %s90, 1
    %p94 = scmp.eq.s32.totalorder %s14, 1
    %p95 = scmp.ne.s32.totalorder %s90, %s92
    %p96 = scmp.eq.s32.totalorder %s14, 0
    %p97 = por %p95, %p96
    %p98 = scmp.ne.s32.totalorder %s90, %s92
    %p99 = scmp.eq.s32.totalorder %s19, 1
    %p100 = por %p98, %p99
    %p101 = scmp.ne.s32.totalorder %s92, %s93
    %p102 = scmp.eq.s32.totalorder %s19, 0
    %p103 = por %p101, %p102
    %p104 = scmp.ne.s32.totalorder %s92, %s93
    %p105 = scmp.eq.s32.totalorder %s20, 1
    %p106 = por %p104, %p105
    %p108 = scmp.ne.s32.totalorder %s93, %s107
    %p109 = scmp.eq.s32.totalorder %s20, 0
    %p110 = por %p108, %p109
    %s112 = sadd.s32 %s111, 1
    %p115 = scmp.eq.s32.totalorder %s14, 1
    %p116 = scmp.ne.s32.totalorder %s111, %s113
    %p117 = scmp.eq.s32.totalorder %s14, 0
    %p118 = por %p116, %p117
    %p119 = scmp.ne.s32.totalorder %s111, %s113
    %p120 = scmp.eq.s32.totalorder %s19, 1
    %p121 = por %p119, %p120
    %p122 = scmp.ne.s32.totalorder %s113, %s114
    %p123 = scmp.eq.s32.totalorder %s19, 0
    %p124 = por %p122, %p123
    %p125 = scmp.ne.s32.totalorder %s113, %s114
    %p126 = scmp.eq.s32.totalorder %s20, 1
    %p127 = por %p125, %p126
    %p129 = scmp.ne.s32.totalorder %s114, %s128
    %p130 = scmp.eq.s32.totalorder %s20, 0
    %p131 = por %p129, %p130
    %s132 = ssub.s32 %s14, %s21
    %p133 = scmp.eq.s32.totalorder %s132, 0
    %s135 = sadd.s32 %s134, 1
    %s136 = scalar_select %p133, %s134, %s135
    %p139 = pneg %p133
    %p140 = scmp.eq.s32.totalorder %s14, 1
    %p141 = por %p139, %p140
    %p142 = scmp.ne.s32.totalorder %s134, %s137
    %p143 = scmp.eq.s32.totalorder %s14, 0
    %p144 = por %p142, %p143
    %p145 = scmp.ne.s32.totalorder %s134, %s137
    %p146 = scmp.eq.s32.totalorder %s19, 1
    %p147 = por %p145, %p146
    %p148 = scmp.ne.s32.totalorder %s137, %s138
    %p149 = scmp.eq.s32.totalorder %s19, 0
    %p150 = por %p148, %p149
    %p151 = scmp.ne.s32.totalorder %s137, %s138
    %p152 = scmp.eq.s32.totalorder %s20, 1
    %p153 = por %p151, %p152
    %p155 = scmp.ne.s32.totalorder %s138, %s154
    %p156 = scmp.eq.s32.totalorder %s20, 0
    %p157 = por %p155, %p156
    %s158 = ssub.s32 %s14, %s21
    %p159 = scmp.eq.s32.totalorder %s158, 0
    %s161 = sadd.s32 %s160, 1
    %s162 = scalar_select %p159, %s160, %s161
    %p165 = pneg %p159
    %p166 = scmp.eq.s32.totalorder %s14, 1
    %p167 = por %p165, %p166
    %p168 = scmp.ne.s32.totalorder %s160, %s163
    %p169 = scmp.eq.s32.totalorder %s14, 0
    %p170 = por %p168, %p169
    %p171 = scmp.ne.s32.totalorder %s160, %s163
    %p172 = scmp.eq.s32.totalorder %s19, 1
    %p173 = por %p171, %p172
    %p174 = scmp.ne.s32.totalorder %s163, %s164
    %p175 = scmp.eq.s32.totalorder %s19, 0
    %p176 = por %p174, %p175
    %p177 = scmp.ne.s32.totalorder %s163, %s164
    %p178 = scmp.eq.s32.totalorder %s20, 1
    %p179 = por %p177, %p178
    %p181 = scmp.ne.s32.totalorder %s164, %s180
    %p182 = scmp.eq.s32.totalorder %s20, 0
    %p183 = por %p181, %p182
    %s184 = ssub.s32 %s14, %s21
    %p185 = scmp.eq.s32.totalorder %s184, 0
    %s187 = sadd.s32 %s186, 1
    %s188 = scalar_select %p185, %s186, %s187
    %p191 = pneg %p185
    %p192 = scmp.eq.s32.totalorder %s14, 1
    %p193 = por %p191, %p192
    %p194 = scmp.ne.s32.totalorder %s186, %s189
    %p195 = scmp.eq.s32.totalorder %s14, 0
    %p196 = por %p194, %p195
    %p197 = scmp.ne.s32.totalorder %s186, %s189
    %p198 = scmp.eq.s32.totalorder %s19, 1
    %p199 = por %p197, %p198
    %p200 = scmp.ne.s32.totalorder %s189, %s190
    %p201 = scmp.eq.s32.totalorder %s19, 0
    %p202 = por %p200, %p201
    %p203 = scmp.ne.s32.totalorder %s189, %s190
    %p204 = scmp.eq.s32.totalorder %s20, 1
    %p205 = por %p203, %p204
    %p207 = scmp.ne.s32.totalorder %s190, %s206
    %p208 = scmp.eq.s32.totalorder %s20, 0
    %p209 = por %p207, %p208
    %p210 = scmp.le.s32.totalorder 1, %s14
    %p211 = scmp.lt.s32.totalorder %s14, 3
    %p212 = pnand %p210, %p211
    %p213 = pneg %p212
    // Predicated region
    $region9: #{block_forward.4} parent=5 // pred_check
      _
    $region10: #{block_forward.4} parent=5 // pred_check_branch
      %215 = sbr.rel (%p212) target = $region12
    $region11: #{block_forward.4} parent=5 // pred_region
      %s216 = ssub.s32 %s14, 1
      // Predicated region
      $region13: #{block_forward.4} parent=11 // pred_check
        %p217 = pneg %p61
      $region14: #{block_forward.4} parent=11 // pred_check_branch
        %219 = sbr.rel (%p217) target = $region16
      $region15: #{block_forward.4} parent=11 // pred_region
        _
      $region16: #{block_forward.4} parent=11 // pred_fallthru
        _
      // Predicated region
      $region17: #{block_forward.4} parent=11 // pred_check
        %p220 = pneg %p82
      $region18: #{block_forward.4} parent=11 // pred_check_branch
        %222 = sbr.rel (%p220) target = $region20
      $region19: #{block_forward.4} parent=11 // pred_region
        _
      $region20: #{block_forward.4} parent=11 // pred_fallthru
        _
      // Predicated region
      $region21: #{block_forward.4} parent=11 // pred_check
        %p223 = pneg %p103
      $region22: #{block_forward.4} parent=11 // pred_check_branch
        %225 = sbr.rel (%p223) target = $region24
      $region23: #{block_forward.4} parent=11 // pred_region
        _
      $region24: #{block_forward.4} parent=11 // pred_fallthru
        _
      // Predicated region
      $region25: #{block_forward.4} parent=11 // pred_check
        %p226 = pneg %p124
      $region26: #{block_forward.4} parent=11 // pred_check_branch
        %228 = sbr.rel (%p226) target = $region28
      $region27: #{block_forward.4} parent=11 // pred_region
        _
      $region28: #{block_forward.4} parent=11 // pred_fallthru
        _
    $region12: #{block_forward.4} parent=5 // pred_fallthru
      _
    %p229 = scmp.lt.s32.totalorder %s14, 2
    // Predicated region
    $region29: #{block_forward.4} parent=5 // pred_check
      %p230 = pneg %p229
    $region30: #{block_forward.4} parent=5 // pred_check_branch
      %232 = sbr.rel (%p230) target = $region32
    $region31: #{block_forward.4} parent=5 // pred_region
      // Predicated region
      $region33: #{block_forward.4} parent=31 // pred_check
        %p233 = pneg %p34
      $region34: #{block_forward.4} parent=31 // pred_check_branch
        %235 = sbr.rel (%p233) target = $region36
      $region35: #{block_forward.4} parent=31 // pred_region
        %p236 = scmp.lt.s32.totalorder %s14, 1
        %s237 = scalar_select %p236, %s14, 1
        %s238 = smul.addr %s237, 32
        %s239 = smul.addr %s238, 8
        %s240 = scalar_lea.vmem %s0, %s239
      $region36: #{block_forward.4} parent=31 // pred_fallthru
        _
    $region32: #{block_forward.4} parent=5 // pred_fallthru
      _
    %p241 = scmp.le.s32.totalorder 1, %s14
    %p242 = scmp.lt.s32.totalorder %s14, 3
    %p243 = pnand %p241, %p242
    %p244 = pneg %p243
    // Predicated region
    $region37: #{block_forward.4} parent=5 // pred_check
      _
    $region38: #{block_forward.4} parent=5 // pred_check_branch
      %246 = sbr.rel (%p243) target = $region40
    $region39: #{block_forward.4} parent=5 // pred_region
      %s247 = ssub.s32 %s14, 1
      %p248 = scmp.lt.s32.totalorder %s19, 1
      %s249 = scalar_select %p248, %s19, 1
      %s250 = smul.addr %s249, 32
      %s251 = smul.addr %s250, 8
      %s252 = scalar_lea.vmem %s0, %s251
      %p253 = pneg %p40
      %p254 = pneg %p37
      %p255 = pneg %p61
      %p256 = pneg %p58
      %p257 = pneg %p82
      %p258 = pneg %p79
      %p259 = pneg %p103
      %p260 = pneg %p100
      %p261 = pneg %p124
      %p262 = pneg %p121
      %p263 = pneg %p150
      %p264 = pneg %p147
      %p265 = scmp.lt.s32.totalorder %s19, 1
      %s266 = scalar_select %p265, %s19, 1
      %s267 = smul.addr %s266, 32
      %s268 = smul.addr %s267, 8
      %s269 = scalar_lea.vmem %s5, %s268
      %p270 = pneg %p176
      %p271 = pneg %p173
      %p272 = scmp.lt.s32.totalorder %s19, 1
      %s273 = scalar_select %p272, %s19, 1
      %s274 = scalar_lea.vmem %s6, %s273
      %p275 = pneg %p202
      %p276 = pneg %p199
      %p277 = scmp.lt.s32.totalorder %s19, 1
      %s278 = scalar_select %p277, %s19, 1
      %s279 = scalar_lea.vmem %s7, %s278
      %p280 = scmp.lt.s32.totalorder %s19, 1
      %s281 = scalar_select %p280, %s19, 1
      %s282 = smul.addr %s281, 32
      %s283 = smul.addr %s282, 8
      %s284 = scalar_lea.vmem %s0, %s283
      %p285 = scmp.lt.s32.totalorder %s19, 1
      %s286 = scalar_select %p285, %s19, 1
      %s287 = smul.addr %s286, 32
      %s288 = smul.addr %s287, 8
      %s289 = scalar_lea.vmem %s5, %s288
      %p290 = scmp.lt.s32.totalorder %s19, 1
      %s291 = scalar_select %p290, %s19, 1
      %s292 = scalar_lea.vmem %s6, %s291
      %p293 = scmp.lt.s32.totalorder %s19, 1
      %s294 = scalar_select %p293, %s19, 1
      %s295 = scalar_lea.vmem %s7, %s294
      %vm296 = vcmask 64512
      %297 = vst.msk [vmem:[#allocation2] sm:$0xff] %vm296, 0.0
      %298 = vst.msk [vmem:[#allocation2 + $0x8] sm:$0xff] %vm296, 0.0
      %vm299 = vcmask 58368
      %300 = vst.msk [vmem:[#allocation2 + $0x10] sm:$0x3] %vm299, 0.0
      %s301 = scalar_lea.vmem [#allocation2], 408
      %302 = vst.msk [vmem:[%s301] sm:$0xff] %vm296, 0.0
      %303 = vst.msk [vmem:[%s301 + $0x8] sm:$0xff] %vm296, 0.0
      %304 = vst.msk [vmem:[%s301 + $0x10] sm:$0x3] %vm299, 0.0
      %vm305 = vcmask 57344
      %306 = vst.msk [vmem:[#allocation2] sm:$0x1] %vm305, 0.0
      %307 = vst.msk [vmem:[#allocation2 + $0x18] sm:$0x1] %vm305, 0.0
      %308 = vst.msk [vmem:[#allocation2 + $0x30] sm:$0x1] %vm305, 0.0
      %309 = vst.msk [vmem:[#allocation2 + $0x48] sm:$0x1] %vm305, 0.0
      %310 = vst.msk [vmem:[#allocation2 + $0x60] sm:$0x1] %vm305, 0.0
      %311 = vst.msk [vmem:[#allocation2 + $0x78] sm:$0x1] %vm305, 0.0
      %312 = vst.msk [vmem:[#allocation2 + $0x90] sm:$0x1] %vm305, 0.0
      %313 = vst.msk [vmem:[#allocation2 + $0xa8] sm:$0x1] %vm305, 0.0
      %314 = vst.msk [vmem:[#allocation2 + $0xc0] sm:$0x1] %vm305, 0.0
      %315 = vst.msk [vmem:[#allocation2 + $0xd8] sm:$0x1] %vm305, 0.0
      %316 = vst.msk [vmem:[#allocation2 + $0xf0] sm:$0x1] %vm305, 0.0
      %317 = vst.msk [vmem:[#allocation2 + $0x108] sm:$0x1] %vm305, 0.0
      %318 = vst.msk [vmem:[#allocation2 + $0x120] sm:$0x1] %vm305, 0.0
      %319 = vst.msk [vmem:[#allocation2 + $0x138] sm:$0x1] %vm305, 0.0
      %320 = vst.msk [vmem:[#allocation2 + $0x150] sm:$0x1] %vm305, 0.0
      %321 = vst.msk [vmem:[#allocation2 + $0x168] sm:$0x1] %vm305, 0.0
      %322 = vst.msk [vmem:[#allocation2 + $0x180] sm:$0x1] %vm305, 0.0
      %323 = vst.msk [vmem:[#allocation2 + $0x198] sm:$0x1] %vm305, 0.0
      %324 = vst.msk [vmem:[#allocation2 + $0x11] sm:$0x1] %vm305, 0.0
      %325 = vst.msk [vmem:[#allocation2 + $0x29] sm:$0x1] %vm305, 0.0
      %326 = vst.msk [vmem:[#allocation2 + $0x41] sm:$0x1] %vm305, 0.0
      %327 = vst.msk [vmem:[#allocation2 + $0x59] sm:$0x1] %vm305, 0.0
      %328 = vst.msk [vmem:[#allocation2 + $0x71] sm:$0x1] %vm305, 0.0
      %329 = vst.msk [vmem:[#allocation2 + $0x89] sm:$0x1] %vm305, 0.0
      %330 = vst.msk [vmem:[#allocation2 + $0xa1] sm:$0x1] %vm305, 0.0
      %331 = vst.msk [vmem:[#allocation2 + $0xb9] sm:$0x1] %vm305, 0.0
      %332 = vst.msk [vmem:[#allocation2 + $0xd1] sm:$0x1] %vm305, 0.0
      %333 = vst.msk [vmem:[#allocation2 + $0xe9] sm:$0x1] %vm305, 0.0
      %334 = vst.msk [vmem:[#allocation2 + $0x101] sm:$0x1] %vm305, 0.0
      %335 = vst.msk [vmem:[#allocation2 + $0x119] sm:$0x1] %vm305, 0.0
      %336 = vst.msk [vmem:[#allocation2 + $0x131] sm:$0x1] %vm305, 0.0
      %337 = vst.msk [vmem:[#allocation2 + $0x149] sm:$0x1] %vm305, 0.0
      %338 = vst.msk [vmem:[#allocation2 + $0x161] sm:$0x1] %vm305, 0.0
      %339 = vst.msk [vmem:[#allocation2 + $0x179] sm:$0x1] %vm305, 0.0
      %340 = vst.msk [vmem:[#allocation2 + $0x191] sm:$0x1] %vm305, 0.0
      %341 = vst.msk [vmem:[#allocation2 + $0x1a9] sm:$0x1] %vm305, 0.0
      %v342 = vld [vmem:[%s284] sm:$0xff]
      %v343 = vld [vmem:[%s284 + $0x8] sm:$0xff]
      %v344 = vld [vmem:[%s284 + $0x10] sm:$0xff]
      %v345 = vld [vmem:[%s284 + $0x18] sm:$0xff]
      %v346 = vld [vmem:[%s284 + $0x20] sm:$0xff]
      %v347 = vld [vmem:[%s284 + $0x28] sm:$0xff]
      %v348 = vld [vmem:[%s284 + $0x30] sm:$0xff]
      %v349 = vld [vmem:[%s284 + $0x38] sm:$0xff]
      %v350 = vld [vmem:[%s284 + $0x40] sm:$0xff]
      %v351 = vld [vmem:[%s284 + $0x48] sm:$0xff]
      %v352 = vld [vmem:[%s284 + $0x50] sm:$0xff]
      %v353 = vld [vmem:[%s284 + $0x58] sm:$0xff]
      %v354 = vld [vmem:[%s284 + $0x60] sm:$0xff]
      %v355 = vld [vmem:[%s284 + $0x68] sm:$0xff]
      %v356 = vld [vmem:[%s284 + $0x70] sm:$0xff]
      %v357 = vld [vmem:[%s284 + $0x78] sm:$0xff]
      %v358 = vld [vmem:[%s284 + $0x80] sm:$0xff]
      %v359 = vld [vmem:[%s284 + $0x88] sm:$0xff]
      %v360 = vld [vmem:[%s284 + $0x90] sm:$0xff]
      %v361 = vld [vmem:[%s284 + $0x98] sm:$0xff]
      %v362 = vld [vmem:[%s284 + $0xa0] sm:$0xff]
      %v363 = vld [vmem:[%s284 + $0xa8] sm:$0xff]
      %v364 = vld [vmem:[%s284 + $0xb0] sm:$0xff]
      %v365 = vld [vmem:[%s284 + $0xb8] sm:$0xff]
      %v366 = vld [vmem:[%s284 + $0xc0] sm:$0xff]
      %v367 = vld [vmem:[%s284 + $0xc8] sm:$0xff]
      %v368 = vld [vmem:[%s284 + $0xd0] sm:$0xff]
      %v369 = vld [vmem:[%s284 + $0xd8] sm:$0xff]
      %v370 = vld [vmem:[%s284 + $0xe0] sm:$0xff]
      %v371 = vld [vmem:[%s284 + $0xe8] sm:$0xff]
      %v372 = vld [vmem:[%s284 + $0xf0] sm:$0xff]
      %v373 = vld [vmem:[%s284 + $0xf8] sm:$0xff]
      %v374 = vld [vmem:[%s1] sm:$0x1]
      %v376 = vperm.slane %v374, 0
      %v378 = vmul.f32 %v342, %v376
      %v379 = vmul.f32 %v343, %v376
      %v380 = vmul.f32 %v344, %v376
      %v381 = vmul.f32 %v345, %v376
      %v382 = vmul.f32 %v346, %v376
      %v383 = vmul.f32 %v347, %v376
      %v384 = vmul.f32 %v348, %v376
      %v385 = vmul.f32 %v349, %v376
      %v386 = vmul.f32 %v350, %v376
      %v387 = vmul.f32 %v351, %v376
      %v388 = vmul.f32 %v352, %v376
      %v389 = vmul.f32 %v353, %v376
      %v390 = vmul.f32 %v354, %v376
      %v391 = vmul.f32 %v355, %v376
      %v392 = vmul.f32 %v356, %v376
      %v393 = vmul.f32 %v357, %v376
      %v394 = vmul.f32 %v358, %v376
      %v395 = vmul.f32 %v359, %v376
      %v396 = vmul.f32 %v360, %v376
      %v397 = vmul.f32 %v361, %v376
      %v398 = vmul.f32 %v362, %v376
      %v399 = vmul.f32 %v363, %v376
      %v400 = vmul.f32 %v364, %v376
      %v401 = vmul.f32 %v365, %v376
      %v402 = vmul.f32 %v366, %v376
      %v403 = vmul.f32 %v367, %v376
      %v404 = vmul.f32 %v368, %v376
      %v405 = vmul.f32 %v369, %v376
      %v406 = vmul.f32 %v370, %v376
      %v407 = vmul.f32 %v371, %v376
      %v408 = vmul.f32 %v372, %v376
      %v409 = vmul.f32 %v373, %v376
      %v410 = vld [vmem:[%s2] sm:$0x1]
      %v412 = vperm.slane %v410, 0
      %v414 = vadd.f32 %v378, %v412
      %v415 = vadd.f32 %v379, %v412
      %v416 = vadd.f32 %v380, %v412
      %v417 = vadd.f32 %v381, %v412
      %v418 = vadd.f32 %v382, %v412
      %v419 = vadd.f32 %v383, %v412
      %v420 = vadd.f32 %v384, %v412
      %v421 = vadd.f32 %v385, %v412
      %v422 = vadd.f32 %v386, %v412
      %v423 = vadd.f32 %v387, %v412
      %v424 = vadd.f32 %v388, %v412
      %v425 = vadd.f32 %v389, %v412
      %v426 = vadd.f32 %v390, %v412
      %v427 = vadd.f32 %v391, %v412
      %v428 = vadd.f32 %v392, %v412
      %v429 = vadd.f32 %v393, %v412
      %v430 = vadd.f32 %v394, %v412
      %v431 = vadd.f32 %v395, %v412
      %v432 = vadd.f32 %v396, %v412
      %v433 = vadd.f32 %v397, %v412
      %v434 = vadd.f32 %v398, %v412
      %v435 = vadd.f32 %v399, %v412
      %v436 = vadd.f32 %v400, %v412
      %v437 = vadd.f32 %v401, %v412
      %v438 = vadd.f32 %v402, %v412
      %v439 = vadd.f32 %v403, %v412
      %v440 = vadd.f32 %v404, %v412
      %v441 = vadd.f32 %v405, %v412
      %v442 = vadd.f32 %v406, %v412
      %v443 = vadd.f32 %v407, %v412
      %v444 = vadd.f32 %v408, %v412
      %v445 = vadd.f32 %v409, %v412
      %s446 = scalar_lea.vmem [#allocation2], 24
      %447 = vst.msk [vmem:[%s446 + $0x1] sm:$0xff] %vm296, %v414
      %448 = vst.msk [vmem:[%s446 + $0x9] sm:$0xff] %vm296, %v415
      %449 = vst.msk [vmem:[%s446 + $0x19] sm:$0xff] %vm296, %v416
      %450 = vst.msk [vmem:[%s446 + $0x21] sm:$0xff] %vm296, %v417
      %451 = vst.msk [vmem:[%s446 + $0x31] sm:$0xff] %vm296, %v418
      %452 = vst.msk [vmem:[%s446 + $0x39] sm:$0xff] %vm296, %v419
      %453 = vst.msk [vmem:[%s446 + $0x49] sm:$0xff] %vm296, %v420
      %454 = vst.msk [vmem:[%s446 + $0x51] sm:$0xff] %vm296, %v421
      %455 = vst.msk [vmem:[%s446 + $0x61] sm:$0xff] %vm296, %v422
      %456 = vst.msk [vmem:[%s446 + $0x69] sm:$0xff] %vm296, %v423
      %457 = vst.msk [vmem:[%s446 + $0x79] sm:$0xff] %vm296, %v424
      %458 = vst.msk [vmem:[%s446 + $0x81] sm:$0xff] %vm296, %v425
      %459 = vst.msk [vmem:[%s446 + $0x91] sm:$0xff] %vm296, %v426
      %460 = vst.msk [vmem:[%s446 + $0x99] sm:$0xff] %vm296, %v427
      %461 = vst.msk [vmem:[%s446 + $0xa9] sm:$0xff] %vm296, %v428
      %462 = vst.msk [vmem:[%s446 + $0xb1] sm:$0xff] %vm296, %v429
      %463 = vst.msk [vmem:[%s446 + $0xc1] sm:$0xff] %vm296, %v430
      %464 = vst.msk [vmem:[%s446 + $0xc9] sm:$0xff] %vm296, %v431
      %465 = vst.msk [vmem:[%s446 + $0xd9] sm:$0xff] %vm296, %v432
      %466 = vst.msk [vmem:[%s446 + $0xe1] sm:$0xff] %vm296, %v433
      %467 = vst.msk [vmem:[%s446 + $0xf1] sm:$0xff] %vm296, %v434
      %468 = vst.msk [vmem:[%s446 + $0xf9] sm:$0xff] %vm296, %v435
      %469 = vst.msk [vmem:[%s446 + $0x109] sm:$0xff] %vm296, %v436
      %470 = vst.msk [vmem:[%s446 + $0x111] sm:$0xff] %vm296, %v437
      %471 = vst.msk [vmem:[%s446 + $0x121] sm:$0xff] %vm296, %v438
      %472 = vst.msk [vmem:[%s446 + $0x129] sm:$0xff] %vm296, %v439
      %473 = vst.msk [vmem:[%s446 + $0x139] sm:$0xff] %vm296, %v440
      %474 = vst.msk [vmem:[%s446 + $0x141] sm:$0xff] %vm296, %v441
      %475 = vst.msk [vmem:[%s446 + $0x151] sm:$0xff] %vm296, %v442
      %476 = vst.msk [vmem:[%s446 + $0x159] sm:$0xff] %vm296, %v443
      %477 = vst.msk [vmem:[%s446 + $0x169] sm:$0xff] %vm296, %v444
      %478 = vst.msk [vmem:[%s446 + $0x171] sm:$0xff] %vm296, %v445
      %v479 = vld [vmem:[#allocation2] sm:$0xff]
      %v480 = vld [vmem:[#allocation2 + $0x8] sm:$0xff]
      %v481 = vld [vmem:[#allocation2 + $0x18] sm:$0xff]
      %v482 = vld [vmem:[#allocation2 + $0x20] sm:$0xff]
      %v483 = vld [vmem:[#allocation2 + $0x30] sm:$0xff]
      %v484 = vld [vmem:[#allocation2 + $0x38] sm:$0xff]
      %v485 = vld [vmem:[#allocation2 + $0x48] sm:$0xff]
      %v486 = vld [vmem:[#allocation2 + $0x50] sm:$0xff]
      %v487 = vld [vmem:[#allocation2 + $0x60] sm:$0xff]
      %v488 = vld [vmem:[#allocation2 + $0x68] sm:$0xff]
      %v489 = vld [vmem:[#allocation2 + $0x78] sm:$0xff]
      %v490 = vld [vmem:[#allocation2 + $0x80] sm:$0xff]
      %v491 = vld [vmem:[#allocation2 + $0x90] sm:$0xff]
      %v492 = vld [vmem:[#allocation2 + $0x98] sm:$0xff]
      %v493 = vld [vmem:[#allocation2 + $0xa8] sm:$0xff]
      %v494 = vld [vmem:[#allocation2 + $0xb0] sm:$0xff]
      %v495 = vld [vmem:[#allocation2 + $0xc0] sm:$0xff]
      %v496 = vld [vmem:[#allocation2 + $0xc8] sm:$0xff]
      %v497 = vld [vmem:[#allocation2 + $0xd8] sm:$0xff]
      %v498 = vld [vmem:[#allocation2 + $0xe0] sm:$0xff]
      %v499 = vld [vmem:[#allocation2 + $0xf0] sm:$0xff]
      %v500 = vld [vmem:[#allocation2 + $0xf8] sm:$0xff]
      %v501 = vld [vmem:[#allocation2 + $0x108] sm:$0xff]
      %v502 = vld [vmem:[#allocation2 + $0x110] sm:$0xff]
      %v503 = vld [vmem:[#allocation2 + $0x120] sm:$0xff]
      %v504 = vld [vmem:[#allocation2 + $0x128] sm:$0xff]
      %v505 = vld [vmem:[#allocation2 + $0x138] sm:$0xff]
      %v506 = vld [vmem:[#allocation2 + $0x140] sm:$0xff]
      %v507 = vld [vmem:[#allocation2 + $0x150] sm:$0xff]
      %v508 = vld [vmem:[#allocation2 + $0x158] sm:$0xff]
      %v509 = vld [vmem:[#allocation2 + $0x168] sm:$0xff]
      %v510 = vld [vmem:[#allocation2 + $0x170] sm:$0xff]
      %511 = vst.msk [vmem:[#allocation3] sm:$0xff] %vm296, %v479
      %512 = vst.msk [vmem:[#allocation3 + $0x8] sm:$0xff] %vm296, %v480
      %513 = vst.msk [vmem:[#allocation3 + $0x10] sm:$0xff] %vm296, %v481
      %514 = vst.msk [vmem:[#allocation3 + $0x18] sm:$0xff] %vm296, %v482
      %515 = vst.msk [vmem:[#allocation3 + $0x20] sm:$0xff] %vm296, %v483
      %516 = vst.msk [vmem:[#allocation3 + $0x28] sm:$0xff] %vm296, %v484
      %517 = vst.msk [vmem:[#allocation3 + $0x30] sm:$0xff] %vm296, %v485
      %518 = vst.msk [vmem:[#allocation3 + $0x38] sm:$0xff] %vm296, %v486
      %519 = vst.msk [vmem:[#allocation3 + $0x40] sm:$0xff] %vm296, %v487
      %520 = vst.msk [vmem:[#allocation3 + $0x48] sm:$0xff] %vm296, %v488
      %521 = vst.msk [vmem:[#allocation3 + $0x50] sm:$0xff] %vm296, %v489
      %522 = vst.msk [vmem:[#allocation3 + $0x58] sm:$0xff] %vm296, %v490
      %523 = vst.msk [vmem:[#allocation3 + $0x60] sm:$0xff] %vm296, %v491
      %524 = vst.msk [vmem:[#allocation3 + $0x68] sm:$0xff] %vm296, %v492
      %525 = vst.msk [vmem:[#allocation3 + $0x70] sm:$0xff] %vm296, %v493
      %526 = vst.msk [vmem:[#allocation3 + $0x78] sm:$0xff] %vm296, %v494
      %527 = vst.msk [vmem:[#allocation3 + $0x80] sm:$0xff] %vm296, %v495
      %528 = vst.msk [vmem:[#allocation3 + $0x88] sm:$0xff] %vm296, %v496
      %529 = vst.msk [vmem:[#allocation3 + $0x90] sm:$0xff] %vm296, %v497
      %530 = vst.msk [vmem:[#allocation3 + $0x98] sm:$0xff] %vm296, %v498
      %531 = vst.msk [vmem:[#allocation3 + $0xa0] sm:$0xff] %vm296, %v499
      %532 = vst.msk [vmem:[#allocation3 + $0xa8] sm:$0xff] %vm296, %v500
      %533 = vst.msk [vmem:[#allocation3 + $0xb0] sm:$0xff] %vm296, %v501
      %534 = vst.msk [vmem:[#allocation3 + $0xb8] sm:$0xff] %vm296, %v502
      %535 = vst.msk [vmem:[#allocation3 + $0xc0] sm:$0xff] %vm296, %v503
      %536 = vst.msk [vmem:[#allocation3 + $0xc8] sm:$0xff] %vm296, %v504
      %537 = vst.msk [vmem:[#allocation3 + $0xd0] sm:$0xff] %vm296, %v505
      %538 = vst.msk [vmem:[#allocation3 + $0xd8] sm:$0xff] %vm296, %v506
      %539 = vst.msk [vmem:[#allocation3 + $0xe0] sm:$0xff] %vm296, %v507
      %540 = vst.msk [vmem:[#allocation3 + $0xe8] sm:$0xff] %vm296, %v508
      %541 = vst.msk [vmem:[#allocation3 + $0xf0] sm:$0xff] %vm296, %v509
      %542 = vst.msk [vmem:[#allocation3 + $0xf8] sm:$0xff] %vm296, %v510
      %v543 = vld [vmem:[#allocation2 + $0x1] sm:$0xff]
      %v544 = vld [vmem:[#allocation2 + $0x9] sm:$0xff]
      %v545 = vld [vmem:[#allocation2 + $0x19] sm:$0xff]
      %v546 = vld [vmem:[#allocation2 + $0x21] sm:$0xff]
      %v547 = vld [vmem:[#allocation2 + $0x31] sm:$0xff]
      %v548 = vld [vmem:[#allocation2 + $0x39] sm:$0xff]
      %v549 = vld [vmem:[#allocation2 + $0x49] sm:$0xff]
      %v550 = vld [vmem:[#allocation2 + $0x51] sm:$0xff]
      %v551 = vld [vmem:[#allocation2 + $0x61] sm:$0xff]
      %v552 = vld [vmem:[#allocation2 + $0x69] sm:$0xff]
      %v553 = vld [vmem:[#allocation2 + $0x79] sm:$0xff]
      %v554 = vld [vmem:[#allocation2 + $0x81] sm:$0xff]
      %v555 = vld [vmem:[#allocation2 + $0x91] sm:$0xff]
      %v556 = vld [vmem:[#allocation2 + $0x99] sm:$0xff]
      %v557 = vld [vmem:[#allocation2 + $0xa9] sm:$0xff]
      %v558 = vld [vmem:[#allocation2 + $0xb1] sm:$0xff]
      %v559 = vld [vmem:[#allocation2 + $0xc1] sm:$0xff]
      %v560 = vld [vmem:[#allocation2 + $0xc9] sm:$0xff]
      %v561 = vld [vmem:[#allocation2 + $0xd9] sm:$0xff]
      %v562 = vld [vmem:[#allocation2 + $0xe1] sm:$0xff]
      %v563 = vld [vmem:[#allocation2 + $0xf1] sm:$0xff]
      %v564 = vld [vmem:[#allocation2 + $0xf9] sm:$0xff]
      %v565 = vld [vmem:[#allocation2 + $0x109] sm:$0xff]
      %v566 = vld [vmem:[#allocation2 + $0x111] sm:$0xff]
      %v567 = vld [vmem:[#allocation2 + $0x121] sm:$0xff]
      %v568 = vld [vmem:[#allocation2 + $0x129] sm:$0xff]
      %v569 = vld [vmem:[#allocation2 + $0x139] sm:$0xff]
      %v570 = vld [vmem:[#allocation2 + $0x141] sm:$0xff]
      %v571 = vld [vmem:[#allocation2 + $0x151] sm:$0xff]
      %v572 = vld [vmem:[#allocation2 + $0x159] sm:$0xff]
      %v573 = vld [vmem:[#allocation2 + $0x169] sm:$0xff]
      %v574 = vld [vmem:[#allocation2 + $0x171] sm:$0xff]
      %607 = vrot.lane.b32.xlu0 %v543, 8
      %v608 = vpop.permute.xlu0 %607
      %609 = vrot.lane.b32.xlu0 %v544, 8
      %v610 = vpop.permute.xlu0 %609
      %611 = vrot.lane.b32.xlu0 %v545, 8
      %v612 = vpop.permute.xlu0 %611
      %613 = vrot.lane.b32.xlu0 %v546, 8
      %v614 = vpop.permute.xlu0 %613
      %615 = vrot.lane.b32.xlu0 %v547, 8
      %v616 = vpop.permute.xlu0 %615
      %617 = vrot.lane.b32.xlu0 %v548, 8
      %v618 = vpop.permute.xlu0 %617
      %619 = vrot.lane.b32.xlu0 %v549, 8
      %v620 = vpop.permute.xlu0 %619
      %621 = vrot.lane.b32.xlu0 %v550, 8
      %v622 = vpop.permute.xlu0 %621
      %623 = vrot.lane.b32.xlu0 %v551, 8
      %v624 = vpop.permute.xlu0 %623
      %625 = vrot.lane.b32.xlu0 %v552, 8
      %v626 = vpop.permute.xlu0 %625
      %627 = vrot.lane.b32.xlu0 %v553, 8
      %v628 = vpop.permute.xlu0 %627
      %629 = vrot.lane.b32.xlu0 %v554, 8
      %v630 = vpop.permute.xlu0 %629
      %631 = vrot.lane.b32.xlu0 %v555, 8
      %v632 = vpop.permute.xlu0 %631
      %633 = vrot.lane.b32.xlu0 %v556, 8
      %v634 = vpop.permute.xlu0 %633
      %635 = vrot.lane.b32.xlu0 %v557, 8
      %v636 = vpop.permute.xlu0 %635
      %637 = vrot.lane.b32.xlu0 %v558, 8
      %v638 = vpop.permute.xlu0 %637
      %639 = vrot.lane.b32.xlu0 %v559, 8
      %v640 = vpop.permute.xlu0 %639
      %641 = vrot.lane.b32.xlu0 %v560, 8
      %v642 = vpop.permute.xlu0 %641
      %643 = vrot.lane.b32.xlu0 %v561, 8
      %v644 = vpop.permute.xlu0 %643
      %645 = vrot.lane.b32.xlu0 %v562, 8
      %v646 = vpop.permute.xlu0 %645
      %647 = vrot.lane.b32.xlu0 %v563, 8
      %v648 = vpop.permute.xlu0 %647
      %649 = vrot.lane.b32.xlu0 %v564, 8
      %v650 = vpop.permute.xlu0 %649
      %651 = vrot.lane.b32.xlu0 %v565, 8
      %v652 = vpop.permute.xlu0 %651
      %653 = vrot.lane.b32.xlu0 %v566, 8
      %v654 = vpop.permute.xlu0 %653
      %655 = vrot.lane.b32.xlu0 %v567, 8
      %v656 = vpop.permute.xlu0 %655
      %657 = vrot.lane.b32.xlu0 %v568, 8
      %v658 = vpop.permute.xlu0 %657
      %659 = vrot.lane.b32.xlu0 %v569, 8
      %v660 = vpop.permute.xlu0 %659
      %661 = vrot.lane.b32.xlu0 %v570, 8
      %v662 = vpop.permute.xlu0 %661
      %663 = vrot.lane.b32.xlu0 %v571, 8
      %v664 = vpop.permute.xlu0 %663
      %665 = vrot.lane.b32.xlu0 %v572, 8
      %v666 = vpop.permute.xlu0 %665
      %667 = vrot.lane.b32.xlu0 %v573, 8
      %v668 = vpop.permute.xlu0 %667
      %669 = vrot.lane.b32.xlu0 %v574, 8
      %v670 = vpop.permute.xlu0 %669
      %vm703 = vcmask 130112
      %704 = vst.msk [vmem:[#allocation3] sm:$0xff] %vm703, %v608
      %705 = vst.msk [vmem:[#allocation3 + $0x8] sm:$0xff] %vm703, %v610
      %706 = vst.msk [vmem:[#allocation3 + $0x10] sm:$0xff] %vm703, %v612
      %707 = vst.msk [vmem:[#allocation3 + $0x18] sm:$0xff] %vm703, %v614
      %708 = vst.msk [vmem:[#allocation3 + $0x20] sm:$0xff] %vm703, %v616
      %709 = vst.msk [vmem:[#allocation3 + $0x28] sm:$0xff] %vm703, %v618
      %710 = vst.msk [vmem:[#allocation3 + $0x30] sm:$0xff] %vm703, %v620
      %711 = vst.msk [vmem:[#allocation3 + $0x38] sm:$0xff] %vm703, %v622
      %712 = vst.msk [vmem:[#allocation3 + $0x40] sm:$0xff] %vm703, %v624
      %713 = vst.msk [vmem:[#allocation3 + $0x48] sm:$0xff] %vm703, %v626
      %714 = vst.msk [vmem:[#allocation3 + $0x50] sm:$0xff] %vm703, %v628
      %715 = vst.msk [vmem:[#allocation3 + $0x58] sm:$0xff] %vm703, %v630
      %716 = vst.msk [vmem:[#allocation3 + $0x60] sm:$0xff] %vm703, %v632
      %717 = vst.msk [vmem:[#allocation3 + $0x68] sm:$0xff] %vm703, %v634
      %718 = vst.msk [vmem:[#allocation3 + $0x70] sm:$0xff] %vm703, %v636
      %719 = vst.msk [vmem:[#allocation3 + $0x78] sm:$0xff] %vm703, %v638
      %720 = vst.msk [vmem:[#allocation3 + $0x80] sm:$0xff] %vm703, %v640
      %721 = vst.msk [vmem:[#allocation3 + $0x88] sm:$0xff] %vm703, %v642
      %722 = vst.msk [vmem:[#allocation3 + $0x90] sm:$0xff] %vm703, %v644
      %723 = vst.msk [vmem:[#allocation3 + $0x98] sm:$0xff] %vm703, %v646
      %724 = vst.msk [vmem:[#allocation3 + $0xa0] sm:$0xff] %vm703, %v648
      %725 = vst.msk [vmem:[#allocation3 + $0xa8] sm:$0xff] %vm703, %v650
      %726 = vst.msk [vmem:[#allocation3 + $0xb0] sm:$0xff] %vm703, %v652
      %727 = vst.msk [vmem:[#allocation3 + $0xb8] sm:$0xff] %vm703, %v654
      %728 = vst.msk [vmem:[#allocation3 + $0xc0] sm:$0xff] %vm703, %v656
      %729 = vst.msk [vmem:[#allocation3 + $0xc8] sm:$0xff] %vm703, %v658
      %730 = vst.msk [vmem:[#allocation3 + $0xd0] sm:$0xff] %vm703, %v660
      %731 = vst.msk [vmem:[#allocation3 + $0xd8] sm:$0xff] %vm703, %v662
      %732 = vst.msk [vmem:[#allocation3 + $0xe0] sm:$0xff] %vm703, %v664
      %733 = vst.msk [vmem:[#allocation3 + $0xe8] sm:$0xff] %vm703, %v666
      %734 = vst.msk [vmem:[#allocation3 + $0xf0] sm:$0xff] %vm703, %v668
      %735 = vst.msk [vmem:[#allocation3 + $0xf8] sm:$0xff] %vm703, %v670
      %v736 = vld [vmem:[#allocation2 + $0x2] sm:$0xff]
      %v737 = vld [vmem:[#allocation2 + $0xa] sm:$0xff]
      %v738 = vld [vmem:[#allocation2 + $0x1a] sm:$0xff]
      %v739 = vld [vmem:[#allocation2 + $0x22] sm:$0xff]
      %v740 = vld [vmem:[#allocation2 + $0x32] sm:$0xff]
      %v741 = vld [vmem:[#allocation2 + $0x3a] sm:$0xff]
      %v742 = vld [vmem:[#allocation2 + $0x4a] sm:$0xff]
      %v743 = vld [vmem:[#allocation2 + $0x52] sm:$0xff]
      %v744 = vld [vmem:[#allocation2 + $0x62] sm:$0xff]
      %v745 = vld [vmem:[#allocation2 + $0x6a] sm:$0xff]
      %v746 = vld [vmem:[#allocation2 + $0x7a] sm:$0xff]
      %v747 = vld [vmem:[#allocation2 + $0x82] sm:$0xff]
      %v748 = vld [vmem:[#allocation2 + $0x92] sm:$0xff]
      %v749 = vld [vmem:[#allocation2 + $0x9a] sm:$0xff]
      %v750 = vld [vmem:[#allocation2 + $0xaa] sm:$0xff]
      %v751 = vld [vmem:[#allocation2 + $0xb2] sm:$0xff]
      %v752 = vld [vmem:[#allocation2 + $0xc2] sm:$0xff]
      %v753 = vld [vmem:[#allocation2 + $0xca] sm:$0xff]
      %v754 = vld [vmem:[#allocation2 + $0xda] sm:$0xff]
      %v755 = vld [vmem:[#allocation2 + $0xe2] sm:$0xff]
      %v756 = vld [vmem:[#allocation2 + $0xf2] sm:$0xff]
      %v757 = vld [vmem:[#allocation2 + $0xfa] sm:$0xff]
      %v758 = vld [vmem:[#allocation2 + $0x10a] sm:$0xff]
      %v759 = vld [vmem:[#allocation2 + $0x112] sm:$0xff]
      %v760 = vld [vmem:[#allocation2 + $0x122] sm:$0xff]
      %v761 = vld [vmem:[#allocation2 + $0x12a] sm:$0xff]
      %v762 = vld [vmem:[#allocation2 + $0x13a] sm:$0xff]
      %v763 = vld [vmem:[#allocation2 + $0x142] sm:$0xff]
      %v764 = vld [vmem:[#allocation2 + $0x152] sm:$0xff]
      %v765 = vld [vmem:[#allocation2 + $0x15a] sm:$0xff]
      %v766 = vld [vmem:[#allocation2 + $0x16a] sm:$0xff]
      %v767 = vld [vmem:[#allocation2 + $0x172] sm:$0xff]
      %800 = vrot.lane.b32.xlu0 %v736, 16
      %v801 = vpop.permute.xlu0 %800
      %802 = vrot.lane.b32.xlu0 %v737, 16
      %v803 = vpop.permute.xlu0 %802
      %804 = vrot.lane.b32.xlu0 %v738, 16
      %v805 = vpop.permute.xlu0 %804
      %806 = vrot.lane.b32.xlu0 %v739, 16
      %v807 = vpop.permute.xlu0 %806
      %808 = vrot.lane.b32.xlu0 %v740, 16
      %v809 = vpop.permute.xlu0 %808
      %810 = vrot.lane.b32.xlu0 %v741, 16
      %v811 = vpop.permute.xlu0 %810
      %812 = vrot.lane.b32.xlu0 %v742, 16
      %v813 = vpop.permute.xlu0 %812
      %814 = vrot.lane.b32.xlu0 %v743, 16
      %v815 = vpop.permute.xlu0 %814
      %816 = vrot.lane.b32.xlu0 %v744, 16
      %v817 = vpop.permute.xlu0 %816
      %818 = vrot.lane.b32.xlu0 %v745, 16
      %v819 = vpop.permute.xlu0 %818
      %820 = vrot.lane.b32.xlu0 %v746, 16
      %v821 = vpop.permute.xlu0 %820
      %822 = vrot.lane.b32.xlu0 %v747, 16
      %v823 = vpop.permute.xlu0 %822
      %824 = vrot.lane.b32.xlu0 %v748, 16
      %v825 = vpop.permute.xlu0 %824
      %826 = vrot.lane.b32.xlu0 %v749, 16
      %v827 = vpop.permute.xlu0 %826
      %828 = vrot.lane.b32.xlu0 %v750, 16
      %v829 = vpop.permute.xlu0 %828
      %830 = vrot.lane.b32.xlu0 %v751, 16
      %v831 = vpop.permute.xlu0 %830
      %832 = vrot.lane.b32.xlu0 %v752, 16
      %v833 = vpop.permute.xlu0 %832
      %834 = vrot.lane.b32.xlu0 %v753, 16
      %v835 = vpop.permute.xlu0 %834
      %836 = vrot.lane.b32.xlu0 %v754, 16
      %v837 = vpop.permute.xlu0 %836
      %838 = vrot.lane.b32.xlu0 %v755, 16
      %v839 = vpop.permute.xlu0 %838
      %840 = vrot.lane.b32.xlu0 %v756, 16
      %v841 = vpop.permute.xlu0 %840
      %842 = vrot.lane.b32.xlu0 %v757, 16
      %v843 = vpop.permute.xlu0 %842
      %844 = vrot.lane.b32.xlu0 %v758, 16
      %v845 = vpop.permute.xlu0 %844
      %846 = vrot.lane.b32.xlu0 %v759, 16
      %v847 = vpop.permute.xlu0 %846
      %848 = vrot.lane.b32.xlu0 %v760, 16
      %v849 = vpop.permute.xlu0 %848
      %850 = vrot.lane.b32.xlu0 %v761, 16
      %v851 = vpop.permute.xlu0 %850
      %852 = vrot.lane.b32.xlu0 %v762, 16
      %v853 = vpop.permute.xlu0 %852
      %854 = vrot.lane.b32.xlu0 %v763, 16
      %v855 = vpop.permute.xlu0 %854
      %856 = vrot.lane.b32.xlu0 %v764, 16
      %v857 = vpop.permute.xlu0 %856
      %858 = vrot.lane.b32.xlu0 %v765, 16
      %v859 = vpop.permute.xlu0 %858
      %860 = vrot.lane.b32.xlu0 %v766, 16
      %v861 = vpop.permute.xlu0 %860
      %862 = vrot.lane.b32.xlu0 %v767, 16
      %v863 = vpop.permute.xlu0 %862
      %vm896 = vcmask 195712
      %897 = vst.msk [vmem:[#allocation3] sm:$0xff] %vm896, %v801
      %898 = vst.msk [vmem:[#allocation3 + $0x8] sm:$0xff] %vm896, %v803
      %899 = vst.msk [vmem:[#allocation3 + $0x10] sm:$0xff] %vm896, %v805
      %900 = vst.msk [vmem:[#allocation3 + $0x18] sm:$0xff] %vm896, %v807
      %901 = vst.msk [vmem:[#allocation3 + $0x20] sm:$0xff] %vm896, %v809
      %902 = vst.msk [vmem:[#allocation3 + $0x28] sm:$0xff] %vm896, %v811
      %903 = vst.msk [vmem:[#allocation3 + $0x30] sm:$0xff] %vm896, %v813
      %904 = vst.msk [vmem:[#allocation3 + $0x38] sm:$0xff] %vm896, %v815
      %905 = vst.msk [vmem:[#allocation3 + $0x40] sm:$0xff] %vm896, %v817
      %906 = vst.msk [vmem:[#allocation3 + $0x48] sm:$0xff] %vm896, %v819
      %907 = vst.msk [vmem:[#allocation3 + $0x50] sm:$0xff] %vm896, %v821
      %908 = vst.msk [vmem:[#allocation3 + $0x58] sm:$0xff] %vm896, %v823
      %909 = vst.msk [vmem:[#allocation3 + $0x60] sm:$0xff] %vm896, %v825
      %910 = vst.msk [vmem:[#allocation3 + $0x68] sm:$0xff] %vm896, %v827
      %911 = vst.msk [vmem:[#allocation3 + $0x70] sm:$0xff] %vm896, %v829
      %912 = vst.msk [vmem:[#allocation3 + $0x78] sm:$0xff] %vm896, %v831
      %913 = vst.msk [vmem:[#allocation3 + $0x80] sm:$0xff] %vm896, %v833
      %914 = vst.msk [vmem:[#allocation3 + $0x88] sm:$0xff] %vm896, %v835
      %915 = vst.msk [vmem:[#allocation3 + $0x90] sm:$0xff] %vm896, %v837
      %916 = vst.msk [vmem:[#allocation3 + $0x98] sm:$0xff] %vm896, %v839
      %917 = vst.msk [vmem:[#allocation3 + $0xa0] sm:$0xff] %vm896, %v841
      %918 = vst.msk [vmem:[#allocation3 + $0xa8] sm:$0xff] %vm896, %v843
      %919 = vst.msk [vmem:[#allocation3 + $0xb0] sm:$0xff] %vm896, %v845
      %920 = vst.msk [vmem:[#allocation3 + $0xb8] sm:$0xff] %vm896, %v847
      %921 = vst.msk [vmem:[#allocation3 + $0xc0] sm:$0xff] %vm896, %v849
      %922 = vst.msk [vmem:[#allocation3 + $0xc8] sm:$0xff] %vm896, %v851
      %923 = vst.msk [vmem:[#allocation3 + $0xd0] sm:$0xff] %vm896, %v853
      %924 = vst.msk [vmem:[#allocation3 + $0xd8] sm:$0xff] %vm896, %v855
      %925 = vst.msk [vmem:[#allocation3 + $0xe0] sm:$0xff] %vm896, %v857
      %926 = vst.msk [vmem:[#allocation3 + $0xe8] sm:$0xff] %vm896, %v859
      %927 = vst.msk [vmem:[#allocation3 + $0xf0] sm:$0xff] %vm896, %v861
      %928 = vst.msk [vmem:[#allocation3 + $0xf8] sm:$0xff] %vm896, %v863
      %v929 = vld [vmem:[%s446] sm:$0xff]
      %v930 = vld [vmem:[%s446 + $0x8] sm:$0xff]
      %v931 = vld [vmem:[%s446 + $0x18] sm:$0xff]
      %v932 = vld [vmem:[%s446 + $0x20] sm:$0xff]
      %v933 = vld [vmem:[%s446 + $0x30] sm:$0xff]
      %v934 = vld [vmem:[%s446 + $0x38] sm:$0xff]
      %v935 = vld [vmem:[%s446 + $0x48] sm:$0xff]
      %v936 = vld [vmem:[%s446 + $0x50] sm:$0xff]
      %v937 = vld [vmem:[%s446 + $0x60] sm:$0xff]
      %v938 = vld [vmem:[%s446 + $0x68] sm:$0xff]
      %v939 = vld [vmem:[%s446 + $0x78] sm:$0xff]
      %v940 = vld [vmem:[%s446 + $0x80] sm:$0xff]
      %v941 = vld [vmem:[%s446 + $0x90] sm:$0xff]
      %v942 = vld [vmem:[%s446 + $0x98] sm:$0xff]
      %v943 = vld [vmem:[%s446 + $0xa8] sm:$0xff]
      %v944 = vld [vmem:[%s446 + $0xb0] sm:$0xff]
      %v945 = vld [vmem:[%s446 + $0xc0] sm:$0xff]
      %v946 = vld [vmem:[%s446 + $0xc8] sm:$0xff]
      %v947 = vld [vmem:[%s446 + $0xd8] sm:$0xff]
      %v948 = vld [vmem:[%s446 + $0xe0] sm:$0xff]
      %v949 = vld [vmem:[%s446 + $0xf0] sm:$0xff]
      %v950 = vld [vmem:[%s446 + $0xf8] sm:$0xff]
      %v951 = vld [vmem:[%s446 + $0x108] sm:$0xff]
      %v952 = vld [vmem:[%s446 + $0x110] sm:$0xff]
      %v953 = vld [vmem:[%s446 + $0x120] sm:$0xff]
      %v954 = vld [vmem:[%s446 + $0x128] sm:$0xff]
      %v955 = vld [vmem:[%s446 + $0x138] sm:$0xff]
      %v956 = vld [vmem:[%s446 + $0x140] sm:$0xff]
      %v957 = vld [vmem:[%s446 + $0x150] sm:$0xff]
      %v958 = vld [vmem:[%s446 + $0x158] sm:$0xff]
      %v959 = vld [vmem:[%s446 + $0x168] sm:$0xff]
      %v960 = vld [vmem:[%s446 + $0x170] sm:$0xff]
      %993 = vrot.lane.b32.xlu0 %v929, 24
      %v994 = vpop.permute.xlu0 %993
      %995 = vrot.lane.b32.xlu0 %v930, 24
      %v996 = vpop.permute.xlu0 %995
      %997 = vrot.lane.b32.xlu0 %v931, 24
      %v998 = vpop.permute.xlu0 %997
      %999 = vrot.lane.b32.xlu0 %v932, 24
      %v1000 = vpop.permute.xlu0 %999
      %1001 = vrot.lane.b32.xlu0 %v933, 24
      %v1002 = vpop.permute.xlu0 %1001
      %1003 = vrot.lane.b32.xlu0 %v934, 24
      %v1004 = vpop.permute.xlu0 %1003
      %1005 = vrot.lane.b32.xlu0 %v935, 24
      %v1006 = vpop.permute.xlu0 %1005
      %1007 = vrot.lane.b32.xlu0 %v936, 24
      %v1008 = vpop.permute.xlu0 %1007
      %1009 = vrot.lane.b32.xlu0 %v937, 24
      %v1010 = vpop.permute.xlu0 %1009
      %1011 = vrot.lane.b32.xlu0 %v938, 24
      %v1012 = vpop.permute.xlu0 %1011
      %1013 = vrot.lane.b32.xlu0 %v939, 24
      %v1014 = vpop.permute.xlu0 %1013
      %1015 = vrot.lane.b32.xlu0 %v940, 24
      %v1016 = vpop.permute.xlu0 %1015
      %1017 = vrot.lane.b32.xlu0 %v941, 24
      %v1018 = vpop.permute.xlu0 %1017
      %1019 = vrot.lane.b32.xlu0 %v942, 24
      %v1020 = vpop.permute.xlu0 %1019
      %1021 = vrot.lane.b32.xlu0 %v943, 24
      %v1022 = vpop.permute.xlu0 %1021
      %1023 = vrot.lane.b32.xlu0 %v944, 24
      %v1024 = vpop.permute.xlu0 %1023
      %1025 = vrot.lane.b32.xlu0 %v945, 24
      %v1026 = vpop.permute.xlu0 %1025
      %1027 = vrot.lane.b32.xlu0 %v946, 24
      %v1028 = vpop.permute.xlu0 %1027
      %1029 = vrot.lane.b32.xlu0 %v947, 24
      %v1030 = vpop.permute.xlu0 %1029
      %1031 = vrot.lane.b32.xlu0 %v948, 24
      %v1032 = vpop.permute.xlu0 %1031
      %1033 = vrot.lane.b32.xlu0 %v949, 24
      %v1034 = vpop.permute.xlu0 %1033
      %1035 = vrot.lane.b32.xlu0 %v950, 24
      %v1036 = vpop.permute.xlu0 %1035
      %1037 = vrot.lane.b32.xlu0 %v951, 24
      %v1038 = vpop.permute.xlu0 %1037
      %1039 = vrot.lane.b32.xlu0 %v952, 24
      %v1040 = vpop.permute.xlu0 %1039
      %1041 = vrot.lane.b32.xlu0 %v953, 24
      %v1042 = vpop.permute.xlu0 %1041
      %1043 = vrot.lane.b32.xlu0 %v954, 24
      %v1044 = vpop.permute.xlu0 %1043
      %1045 = vrot.lane.b32.xlu0 %v955, 24
      %v1046 = vpop.permute.xlu0 %1045
      %1047 = vrot.lane.b32.xlu0 %v956, 24
      %v1048 = vpop.permute.xlu0 %1047
      %1049 = vrot.lane.b32.xlu0 %v957, 24
      %v1050 = vpop.permute.xlu0 %1049
      %1051 = vrot.lane.b32.xlu0 %v958, 24
      %v1052 = vpop.permute.xlu0 %1051
      %1053 = vrot.lane.b32.xlu0 %v959, 24
      %v1054 = vpop.permute.xlu0 %1053
      %1055 = vrot.lane.b32.xlu0 %v960, 24
      %v1056 = vpop.permute.xlu0 %1055
      %vm1089 = vcmask 261312
      %1090 = vst.msk [vmem:[#allocation3] sm:$0xff] %vm1089, %v994
      %1091 = vst.msk [vmem:[#allocation3 + $0x8] sm:$0xff] %vm1089, %v996
      %1092 = vst.msk [vmem:[#allocation3 + $0x10] sm:$0xff] %vm1089, %v998
      %1093 = vst.msk [vmem:[#allocation3 + $0x18] sm:$0xff] %vm1089, %v1000
      %1094 = vst.msk [vmem:[#allocation3 + $0x20] sm:$0xff] %vm1089, %v1002
      %1095 = vst.msk [vmem:[#allocation3 + $0x28] sm:$0xff] %vm1089, %v1004
      %1096 = vst.msk [vmem:[#allocation3 + $0x30] sm:$0xff] %vm1089, %v1006
      %1097 = vst.msk [vmem:[#allocation3 + $0x38] sm:$0xff] %vm1089, %v1008
      %1098 = vst.msk [vmem:[#allocation3 + $0x40] sm:$0xff] %vm1089, %v1010
      %1099 = vst.msk [vmem:[#allocation3 + $0x48] sm:$0xff] %vm1089, %v1012
      %1100 = vst.msk [vmem:[#allocation3 + $0x50] sm:$0xff] %vm1089, %v1014
      %1101 = vst.msk [vmem:[#allocation3 + $0x58] sm:$0xff] %vm1089, %v1016
      %1102 = vst.msk [vmem:[#allocation3 + $0x60] sm:$0xff] %vm1089, %v1018
      %1103 = vst.msk [vmem:[#allocation3 + $0x68] sm:$0xff] %vm1089, %v1020
      %1104 = vst.msk [vmem:[#allocation3 + $0x70] sm:$0xff] %vm1089, %v1022
      %1105 = vst.msk [vmem:[#allocation3 + $0x78] sm:$0xff] %vm1089, %v1024
      %1106 = vst.msk [vmem:[#allocation3 + $0x80] sm:$0xff] %vm1089, %v1026
      %1107 = vst.msk [vmem:[#allocation3 + $0x88] sm:$0xff] %vm1089, %v1028
      %1108 = vst.msk [vmem:[#allocation3 + $0x90] sm:$0xff] %vm1089, %v1030
      %1109 = vst.msk [vmem:[#allocation3 + $0x98] sm:$0xff] %vm1089, %v1032
      %1110 = vst.msk [vmem:[#allocation3 + $0xa0] sm:$0xff] %vm1089, %v1034
      %1111 = vst.msk [vmem:[#allocation3 + $0xa8] sm:$0xff] %vm1089, %v1036
      %1112 = vst.msk [vmem:[#allocation3 + $0xb0] sm:$0xff] %vm1089, %v1038
      %1113 = vst.msk [vmem:[#allocation3 + $0xb8] sm:$0xff] %vm1089, %v1040
      %1114 = vst.msk [vmem:[#allocation3 + $0xc0] sm:$0xff] %vm1089, %v1042
      %1115 = vst.msk [vmem:[#allocation3 + $0xc8] sm:$0xff] %vm1089, %v1044
      %1116 = vst.msk [vmem:[#allocation3 + $0xd0] sm:$0xff] %vm1089, %v1046
      %1117 = vst.msk [vmem:[#allocation3 + $0xd8] sm:$0xff] %vm1089, %v1048
      %1118 = vst.msk [vmem:[#allocation3 + $0xe0] sm:$0xff] %vm1089, %v1050
      %1119 = vst.msk [vmem:[#allocation3 + $0xe8] sm:$0xff] %vm1089, %v1052
      %1120 = vst.msk [vmem:[#allocation3 + $0xf0] sm:$0xff] %vm1089, %v1054
      %1121 = vst.msk [vmem:[#allocation3 + $0xf8] sm:$0xff] %vm1089, %v1056
      %v1122 = vld [vmem:[%s446 + $0x1] sm:$0xff]
      %v1123 = vld [vmem:[%s446 + $0x9] sm:$0xff]
      %v1124 = vld [vmem:[%s446 + $0x19] sm:$0xff]
      %v1125 = vld [vmem:[%s446 + $0x21] sm:$0xff]
      %v1126 = vld [vmem:[%s446 + $0x31] sm:$0xff]
      %v1127 = vld [vmem:[%s446 + $0x39] sm:$0xff]
      %v1128 = vld [vmem:[%s446 + $0x49] sm:$0xff]
      %v1129 = vld [vmem:[%s446 + $0x51] sm:$0xff]
      %v1130 = vld [vmem:[%s446 + $0x61] sm:$0xff]
      %v1131 = vld [vmem:[%s446 + $0x69] sm:$0xff]
      %v1132 = vld [vmem:[%s446 + $0x79] sm:$0xff]
      %v1133 = vld [vmem:[%s446 + $0x81] sm:$0xff]
      %v1134 = vld [vmem:[%s446 + $0x91] sm:$0xff]
      %v1135 = vld [vmem:[%s446 + $0x99] sm:$0xff]
      %v1136 = vld [vmem:[%s446 + $0xa9] sm:$0xff]
      %v1137 = vld [vmem:[%s446 + $0xb1] sm:$0xff]
      %v1138 = vld [vmem:[%s446 + $0xc1] sm:$0xff]
      %v1139 = vld [vmem:[%s446 + $0xc9] sm:$0xff]
      %v1140 = vld [vmem:[%s446 + $0xd9] sm:$0xff]
      %v1141 = vld [vmem:[%s446 + $0xe1] sm:$0xff]
      %v1142 = vld [vmem:[%s446 + $0xf1] sm:$0xff]
      %v1143 = vld [vmem:[%s446 + $0xf9] sm:$0xff]
      %v1144 = vld [vmem:[%s446 + $0x109] sm:$0xff]
      %v1145 = vld [vmem:[%s446 + $0x111] sm:$0xff]
      %v1146 = vld [vmem:[%s446 + $0x121] sm:$0xff]
      %v1147 = vld [vmem:[%s446 + $0x129] sm:$0xff]
      %v1148 = vld [vmem:[%s446 + $0x139] sm:$0xff]
      %v1149 = vld [vmem:[%s446 + $0x141] sm:$0xff]
      %v1150 = vld [vmem:[%s446 + $0x151] sm:$0xff]
      %v1151 = vld [vmem:[%s446 + $0x159] sm:$0xff]
      %v1152 = vld [vmem:[%s446 + $0x169] sm:$0xff]
      %v1153 = vld [vmem:[%s446 + $0x171] sm:$0xff]
      %1186 = vrot.lane.b32.xlu0 %v1122, 32
      %v1187 = vpop.permute.xlu0 %1186
      %1188 = vrot.lane.b32.xlu0 %v1123, 32
      %v1189 = vpop.permute.xlu0 %1188
      %1190 = vrot.lane.b32.xlu0 %v1124, 32
      %v1191 = vpop.permute.xlu0 %1190
      %1192 = vrot.lane.b32.xlu0 %v1125, 32
      %v1193 = vpop.permute.xlu0 %1192
      %1194 = vrot.lane.b32.xlu0 %v1126, 32
      %v1195 = vpop.permute.xlu0 %1194
      %1196 = vrot.lane.b32.xlu0 %v1127, 32
      %v1197 = vpop.permute.xlu0 %1196
      %1198 = vrot.lane.b32.xlu0 %v1128, 32
      %v1199 = vpop.permute.xlu0 %1198
      %1200 = vrot.lane.b32.xlu0 %v1129, 32
      %v1201 = vpop.permute.xlu0 %1200
      %1202 = vrot.lane.b32.xlu0 %v1130, 32
      %v1203 = vpop.permute.xlu0 %1202
      %1204 = vrot.lane.b32.xlu0 %v1131, 32
      %v1205 = vpop.permute.xlu0 %1204
      %1206 = vrot.lane.b32.xlu0 %v1132, 32
      %v1207 = vpop.permute.xlu0 %1206
      %1208 = vrot.lane.b32.xlu0 %v1133, 32
      %v1209 = vpop.permute.xlu0 %1208
      %1210 = vrot.lane.b32.xlu0 %v1134, 32
      %v1211 = vpop.permute.xlu0 %1210
      %1212 = vrot.lane.b32.xlu0 %v1135, 32
      %v1213 = vpop.permute.xlu0 %1212
      %1214 = vrot.lane.b32.xlu0 %v1136, 32
      %v1215 = vpop.permute.xlu0 %1214
      %1216 = vrot.lane.b32.xlu0 %v1137, 32
      %v1217 = vpop.permute.xlu0 %1216
      %1218 = vrot.lane.b32.xlu0 %v1138, 32
      %v1219 = vpop.permute.xlu0 %1218
      %1220 = vrot.lane.b32.xlu0 %v1139, 32
      %v1221 = vpop.permute.xlu0 %1220
      %1222 = vrot.lane.b32.xlu0 %v1140, 32
      %v1223 = vpop.permute.xlu0 %1222
      %1224 = vrot.lane.b32.xlu0 %v1141, 32
      %v1225 = vpop.permute.xlu0 %1224
      %1226 = vrot.lane.b32.xlu0 %v1142, 32
      %v1227 = vpop.permute.xlu0 %1226
      %1228 = vrot.lane.b32.xlu0 %v1143, 32
      %v1229 = vpop.permute.xlu0 %1228
      %1230 = vrot.lane.b32.xlu0 %v1144, 32
      %v1231 = vpop.permute.xlu0 %1230
      %1232 = vrot.lane.b32.xlu0 %v1145, 32
      %v1233 = vpop.permute.xlu0 %1232
      %1234 = vrot.lane.b32.xlu0 %v1146, 32
      %v1235 = vpop.permute.xlu0 %1234
      %1236 = vrot.lane.b32.xlu0 %v1147, 32
      %v1237 = vpop.permute.xlu0 %1236
      %1238 = vrot.lane.b32.xlu0 %v1148, 32
      %v1239 = vpop.permute.xlu0 %1238
      %1240 = vrot.lane.b32.xlu0 %v1149, 32
      %v1241 = vpop.permute.xlu0 %1240
      %1242 = vrot.lane.b32.xlu0 %v1150, 32
      %v1243 = vpop.permute.xlu0 %1242
      %1244 = vrot.lane.b32.xlu0 %v1151, 32
      %v1245 = vpop.permute.xlu0 %1244
      %1246 = vrot.lane.b32.xlu0 %v1152, 32
      %v1247 = vpop.permute.xlu0 %1246
      %1248 = vrot.lane.b32.xlu0 %v1153, 32
      %v1249 = vpop.permute.xlu0 %1248
      %vm1282 = vcmask 326912
      %1283 = vst.msk [vmem:[#allocation3] sm:$0xff] %vm1282, %v1187
      %1284 = vst.msk [vmem:[#allocation3 + $0x8] sm:$0xff] %vm1282, %v1189
      %1285 = vst.msk [vmem:[#allocation3 + $0x10] sm:$0xff] %vm1282, %v1191
      %1286 = vst.msk [vmem:[#allocation3 + $0x18] sm:$0xff] %vm1282, %v1193
      %1287 = vst.msk [vmem:[#allocation3 + $0x20] sm:$0xff] %vm1282, %v1195
      %1288 = vst.msk [vmem:[#allocation3 + $0x28] sm:$0xff] %vm1282, %v1197
      %1289 = vst.msk [vmem:[#allocation3 + $0x30] sm:$0xff] %vm1282, %v1199
      %1290 = vst.msk [vmem:[#allocation3 + $0x38] sm:$0xff] %vm1282, %v1201
      %1291 = vst.msk [vmem:[#allocation3 + $0x40] sm:$0xff] %vm1282, %v1203
      %1292 = vst.msk [vmem:[#allocation3 + $0x48] sm:$0xff] %vm1282, %v1205
      %1293 = vst.msk [vmem:[#allocation3 + $0x50] sm:$0xff] %vm1282, %v1207
      %1294 = vst.msk [vmem:[#allocation3 + $0x58] sm:$0xff] %vm1282, %v1209
      %1295 = vst.msk [vmem:[#allocation3 + $0x60] sm:$0xff] %vm1282, %v1211
      %1296 = vst.msk [vmem:[#allocation3 + $0x68] sm:$0xff] %vm1282, %v1213
      %1297 = vst.msk [vmem:[#allocation3 + $0x70] sm:$0xff] %vm1282, %v1215
      %1298 = vst.msk [vmem:[#allocation3 + $0x78] sm:$0xff] %vm1282, %v1217
      %1299 = vst.msk [vmem:[#allocation3 + $0x80] sm:$0xff] %vm1282, %v1219
      %1300 = vst.msk [vmem:[#allocation3 + $0x88] sm:$0xff] %vm1282, %v1221
      %1301 = vst.msk [vmem:[#allocation3 + $0x90] sm:$0xff] %vm1282, %v1223
      %1302 = vst.msk [vmem:[#allocation3 + $0x98] sm:$0xff] %vm1282, %v1225
      %1303 = vst.msk [vmem:[#allocation3 + $0xa0] sm:$0xff] %vm1282, %v1227
      %1304 = vst.msk [vmem:[#allocation3 + $0xa8] sm:$0xff] %vm1282, %v1229
      %1305 = vst.msk [vmem:[#allocation3 + $0xb0] sm:$0xff] %vm1282, %v1231
      %1306 = vst.msk [vmem:[#allocation3 + $0xb8] sm:$0xff] %vm1282, %v1233
      %1307 = vst.msk [vmem:[#allocation3 + $0xc0] sm:$0xff] %vm1282, %v1235
      %1308 = vst.msk [vmem:[#allocation3 + $0xc8] sm:$0xff] %vm1282, %v1237
      %1309 = vst.msk [vmem:[#allocation3 + $0xd0] sm:$0xff] %vm1282, %v1239
      %1310 = vst.msk [vmem:[#allocation3 + $0xd8] sm:$0xff] %vm1282, %v1241
      %1311 = vst.msk [vmem:[#allocation3 + $0xe0] sm:$0xff] %vm1282, %v1243
      %1312 = vst.msk [vmem:[#allocation3 + $0xe8] sm:$0xff] %vm1282, %v1245
      %1313 = vst.msk [vmem:[#allocation3 + $0xf0] sm:$0xff] %vm1282, %v1247
      %1314 = vst.msk [vmem:[#allocation3 + $0xf8] sm:$0xff] %vm1282, %v1249
      %v1315 = vld [vmem:[%s446 + $0x2] sm:$0xff]
      %v1316 = vld [vmem:[%s446 + $0xa] sm:$0xff]
      %v1317 = vld [vmem:[%s446 + $0x1a] sm:$0xff]
      %v1318 = vld [vmem:[%s446 + $0x22] sm:$0xff]
      %v1319 = vld [vmem:[%s446 + $0x32] sm:$0xff]
      %v1320 = vld [vmem:[%s446 + $0x3a] sm:$0xff]
      %v1321 = vld [vmem:[%s446 + $0x4a] sm:$0xff]
      %v1322 = vld [vmem:[%s446 + $0x52] sm:$0xff]
      %v1323 = vld [vmem:[%s446 + $0x62] sm:$0xff]
      %v1324 = vld [vmem:[%s446 + $0x6a] sm:$0xff]
      %v1325 = vld [vmem:[%s446 + $0x7a] sm:$0xff]
      %v1326 = vld [vmem:[%s446 + $0x82] sm:$0xff]
      %v1327 = vld [vmem:[%s446 + $0x92] sm:$0xff]
      %v1328 = vld [vmem:[%s446 + $0x9a] sm:$0xff]
      %v1329 = vld [vmem:[%s446 + $0xaa] sm:$0xff]
      %v1330 = vld [vmem:[%s446 + $0xb2] sm:$0xff]
      %v1331 = vld [vmem:[%s446 + $0xc2] sm:$0xff]
      %v1332 = vld [vmem:[%s446 + $0xca] sm:$0xff]
      %v1333 = vld [vmem:[%s446 + $0xda] sm:$0xff]
      %v1334 = vld [vmem:[%s446 + $0xe2] sm:$0xff]
      %v1335 = vld [vmem:[%s446 + $0xf2] sm:$0xff]
      %v1336 = vld [vmem:[%s446 + $0xfa] sm:$0xff]
      %v1337 = vld [vmem:[%s446 + $0x10a] sm:$0xff]
      %v1338 = vld [vmem:[%s446 + $0x112] sm:$0xff]
      %v1339 = vld [vmem:[%s446 + $0x122] sm:$0xff]
      %v1340 = vld [vmem:[%s446 + $0x12a] sm:$0xff]
      %v1341 = vld [vmem:[%s446 + $0x13a] sm:$0xff]
      %v1342 = vld [vmem:[%s446 + $0x142] sm:$0xff]
      %v1343 = vld [vmem:[%s446 + $0x152] sm:$0xff]
      %v1344 = vld [vmem:[%s446 + $0x15a] sm:$0xff]
      %v1345 = vld [vmem:[%s446 + $0x16a] sm:$0xff]
      %v1346 = vld [vmem:[%s446 + $0x172] sm:$0xff]
      %1379 = vrot.lane.b32.xlu0 %v1315, 40
      %v1380 = vpop.permute.xlu0 %1379
      %1381 = vrot.lane.b32.xlu0 %v1316, 40
      %v1382 = vpop.permute.xlu0 %1381
      %1383 = vrot.lane.b32.xlu0 %v1317, 40
      %v1384 = vpop.permute.xlu0 %1383
      %1385 = vrot.lane.b32.xlu0 %v1318, 40
      %v1386 = vpop.permute.xlu0 %1385
      %1387 = vrot.lane.b32.xlu0 %v1319, 40
      %v1388 = vpop.permute.xlu0 %1387
      %1389 = vrot.lane.b32.xlu0 %v1320, 40
      %v1390 = vpop.permute.xlu0 %1389
      %1391 = vrot.lane.b32.xlu0 %v1321, 40
      %v1392 = vpop.permute.xlu0 %1391
      %1393 = vrot.lane.b32.xlu0 %v1322, 40
      %v1394 = vpop.permute.xlu0 %1393
      %1395 = vrot.lane.b32.xlu0 %v1323, 40
      %v1396 = vpop.permute.xlu0 %1395
      %1397 = vrot.lane.b32.xlu0 %v1324, 40
      %v1398 = vpop.permute.xlu0 %1397
      %1399 = vrot.lane.b32.xlu0 %v1325, 40
      %v1400 = vpop.permute.xlu0 %1399
      %1401 = vrot.lane.b32.xlu0 %v1326, 40
      %v1402 = vpop.permute.xlu0 %1401
      %1403 = vrot.lane.b32.xlu0 %v1327, 40
      %v1404 = vpop.permute.xlu0 %1403
      %1405 = vrot.lane.b32.xlu0 %v1328, 40
      %v1406 = vpop.permute.xlu0 %1405
      %1407 = vrot.lane.b32.xlu0 %v1329, 40
      %v1408 = vpop.permute.xlu0 %1407
      %1409 = vrot.lane.b32.xlu0 %v1330, 40
      %v1410 = vpop.permute.xlu0 %1409
      %1411 = vrot.lane.b32.xlu0 %v1331, 40
      %v1412 = vpop.permute.xlu0 %1411
      %1413 = vrot.lane.b32.xlu0 %v1332, 40
      %v1414 = vpop.permute.xlu0 %1413
      %1415 = vrot.lane.b32.xlu0 %v1333, 40
      %v1416 = vpop.permute.xlu0 %1415
      %1417 = vrot.lane.b32.xlu0 %v1334, 40
      %v1418 = vpop.permute.xlu0 %1417
      %1419 = vrot.lane.b32.xlu0 %v1335, 40
      %v1420 = vpop.permute.xlu0 %1419
      %1421 = vrot.lane.b32.xlu0 %v1336, 40
      %v1422 = vpop.permute.xlu0 %1421
      %1423 = vrot.lane.b32.xlu0 %v1337, 40
      %v1424 = vpop.permute.xlu0 %1423
      %1425 = vrot.lane.b32.xlu0 %v1338, 40
      %v1426 = vpop.permute.xlu0 %1425
      %1427 = vrot.lane.b32.xlu0 %v1339, 40
      %v1428 = vpop.permute.xlu0 %1427
      %1429 = vrot.lane.b32.xlu0 %v1340, 40
      %v1430 = vpop.permute.xlu0 %1429
      %1431 = vrot.lane.b32.xlu0 %v1341, 40
      %v1432 = vpop.permute.xlu0 %1431
      %1433 = vrot.lane.b32.xlu0 %v1342, 40
      %v1434 = vpop.permute.xlu0 %1433
      %1435 = vrot.lane.b32.xlu0 %v1343, 40
      %v1436 = vpop.permute.xlu0 %1435
      %1437 = vrot.lane.b32.xlu0 %v1344, 40
      %v1438 = vpop.permute.xlu0 %1437
      %1439 = vrot.lane.b32.xlu0 %v1345, 40
      %v1440 = vpop.permute.xlu0 %1439
      %1441 = vrot.lane.b32.xlu0 %v1346, 40
      %v1442 = vpop.permute.xlu0 %1441
      %vm1475 = vcmask 392512
      %1476 = vst.msk [vmem:[#allocation3] sm:$0xff] %vm1475, %v1380
      %1477 = vst.msk [vmem:[#allocation3 + $0x8] sm:$0xff] %vm1475, %v1382
      %1478 = vst.msk [vmem:[#allocation3 + $0x10] sm:$0xff] %vm1475, %v1384
      %1479 = vst.msk [vmem:[#allocation3 + $0x18] sm:$0xff] %vm1475, %v1386
      %1480 = vst.msk [vmem:[#allocation3 + $0x20] sm:$0xff] %vm1475, %v1388
      %1481 = vst.msk [vmem:[#allocation3 + $0x28] sm:$0xff] %vm1475, %v1390
      %1482 = vst.msk [vmem:[#allocation3 + $0x30] sm:$0xff] %vm1475, %v1392
      %1483 = vst.msk [vmem:[#allocation3 + $0x38] sm:$0xff] %vm1475, %v1394
      %1484 = vst.msk [vmem:[#allocation3 + $0x40] sm:$0xff] %vm1475, %v1396
      %1485 = vst.msk [vmem:[#allocation3 + $0x48] sm:$0xff] %vm1475, %v1398
      %1486 = vst.msk [vmem:[#allocation3 + $0x50] sm:$0xff] %vm1475, %v1400
      %1487 = vst.msk [vmem:[#allocation3 + $0x58] sm:$0xff] %vm1475, %v1402
      %1488 = vst.msk [vmem:[#allocation3 + $0x60] sm:$0xff] %vm1475, %v1404
      %1489 = vst.msk [vmem:[#allocation3 + $0x68] sm:$0xff] %vm1475, %v1406
      %1490 = vst.msk [vmem:[#allocation3 + $0x70] sm:$0xff] %vm1475, %v1408
      %1491 = vst.msk [vmem:[#allocation3 + $0x78] sm:$0xff] %vm1475, %v1410
      %1492 = vst.msk [vmem:[#allocation3 + $0x80] sm:$0xff] %vm1475, %v1412
      %1493 = vst.msk [vmem:[#allocation3 + $0x88] sm:$0xff] %vm1475, %v1414
      %1494 = vst.msk [vmem:[#allocation3 + $0x90] sm:$0xff] %vm1475, %v1416
      %1495 = vst.msk [vmem:[#allocation3 + $0x98] sm:$0xff] %vm1475, %v1418
      %1496 = vst.msk [vmem:[#allocation3 + $0xa0] sm:$0xff] %vm1475, %v1420
      %1497 = vst.msk [vmem:[#allocation3 + $0xa8] sm:$0xff] %vm1475, %v1422
      %1498 = vst.msk [vmem:[#allocation3 + $0xb0] sm:$0xff] %vm1475, %v1424
      %1499 = vst.msk [vmem:[#allocation3 + $0xb8] sm:$0xff] %vm1475, %v1426
      %1500 = vst.msk [vmem:[#allocation3 + $0xc0] sm:$0xff] %vm1475, %v1428
      %1501 = vst.msk [vmem:[#allocation3 + $0xc8] sm:$0xff] %vm1475, %v1430
      %1502 = vst.msk [vmem:[#allocation3 + $0xd0] sm:$0xff] %vm1475, %v1432
      %1503 = vst.msk [vmem:[#allocation3 + $0xd8] sm:$0xff] %vm1475, %v1434
      %1504 = vst.msk [vmem:[#allocation3 + $0xe0] sm:$0xff] %vm1475, %v1436
      %1505 = vst.msk [vmem:[#allocation3 + $0xe8] sm:$0xff] %vm1475, %v1438
      %1506 = vst.msk [vmem:[#allocation3 + $0xf0] sm:$0xff] %vm1475, %v1440
      %1507 = vst.msk [vmem:[#allocation3 + $0xf8] sm:$0xff] %vm1475, %v1442
      %s1508 = scalar_lea.vmem [#allocation2], 48
      %v1509 = vld [vmem:[%s1508] sm:$0xff]
      %v1510 = vld [vmem:[%s1508 + $0x8] sm:$0xff]
      %v1511 = vld [vmem:[%s1508 + $0x18] sm:$0xff]
      %v1512 = vld [vmem:[%s1508 + $0x20] sm:$0xff]
      %v1513 = vld [vmem:[%s1508 + $0x30] sm:$0xff]
      %v1514 = vld [vmem:[%s1508 + $0x38] sm:$0xff]
      %v1515 = vld [vmem:[%s1508 + $0x48] sm:$0xff]
      %v1516 = vld [vmem:[%s1508 + $0x50] sm:$0xff]
      %v1517 = vld [vmem:[%s1508 + $0x60] sm:$0xff]
      %v1518 = vld [vmem:[%s1508 + $0x68] sm:$0xff]
      %v1519 = vld [vmem:[%s1508 + $0x78] sm:$0xff]
      %v1520 = vld [vmem:[%s1508 + $0x80] sm:$0xff]
      %v1521 = vld [vmem:[%s1508 + $0x90] sm:$0xff]
      %v1522 = vld [vmem:[%s1508 + $0x98] sm:$0xff]
      %v1523 = vld [vmem:[%s1508 + $0xa8] sm:$0xff]
      %v1524 = vld [vmem:[%s1508 + $0xb0] sm:$0xff]
      %v1525 = vld [vmem:[%s1508 + $0xc0] sm:$0xff]
      %v1526 = vld [vmem:[%s1508 + $0xc8] sm:$0xff]
      %v1527 = vld [vmem:[%s1508 + $0xd8] sm:$0xff]
      %v1528 = vld [vmem:[%s1508 + $0xe0] sm:$0xff]
      %v1529 = vld [vmem:[%s1508 + $0xf0] sm:$0xff]
      %v1530 = vld [vmem:[%s1508 + $0xf8] sm:$0xff]
      %v1531 = vld [vmem:[%s1508 + $0x108] sm:$0xff]
      %v1532 = vld [vmem:[%s1508 + $0x110] sm:$0xff]
      %v1533 = vld [vmem:[%s1508 + $0x120] sm:$0xff]
      %v1534 = vld [vmem:[%s1508 + $0x128] sm:$0xff]
      %v1535 = vld [vmem:[%s1508 + $0x138] sm:$0xff]
      %v1536 = vld [vmem:[%s1508 + $0x140] sm:$0xff]
      %v1537 = vld [vmem:[%s1508 + $0x150] sm:$0xff]
      %v1538 = vld [vmem:[%s1508 + $0x158] sm:$0xff]
      %v1539 = vld [vmem:[%s1508 + $0x168] sm:$0xff]
      %v1540 = vld [vmem:[%s1508 + $0x170] sm:$0xff]
      %1573 = vrot.lane.b32.xlu0 %v1509, 48
      %v1574 = vpop.permute.xlu0 %1573
      %1575 = vrot.lane.b32.xlu0 %v1510, 48
      %v1576 = vpop.permute.xlu0 %1575
      %1577 = vrot.lane.b32.xlu0 %v1511, 48
      %v1578 = vpop.permute.xlu0 %1577
      %1579 = vrot.lane.b32.xlu0 %v1512, 48
      %v1580 = vpop.permute.xlu0 %1579
      %1581 = vrot.lane.b32.xlu0 %v1513, 48
      %v1582 = vpop.permute.xlu0 %1581
      %1583 = vrot.lane.b32.xlu0 %v1514, 48
      %v1584 = vpop.permute.xlu0 %1583
      %1585 = vrot.lane.b32.xlu0 %v1515, 48
      %v1586 = vpop.permute.xlu0 %1585
      %1587 = vrot.lane.b32.xlu0 %v1516, 48
      %v1588 = vpop.permute.xlu0 %1587
      %1589 = vrot.lane.b32.xlu0 %v1517, 48
      %v1590 = vpop.permute.xlu0 %1589
      %1591 = vrot.lane.b32.xlu0 %v1518, 48
      %v1592 = vpop.permute.xlu0 %1591
      %1593 = vrot.lane.b32.xlu0 %v1519, 48
      %v1594 = vpop.permute.xlu0 %1593
      %1595 = vrot.lane.b32.xlu0 %v1520, 48
      %v1596 = vpop.permute.xlu0 %1595
      %1597 = vrot.lane.b32.xlu0 %v1521, 48
      %v1598 = vpop.permute.xlu0 %1597
      %1599 = vrot.lane.b32.xlu0 %v1522, 48
      %v1600 = vpop.permute.xlu0 %1599
      %1601 = vrot.lane.b32.xlu0 %v1523, 48
      %v1602 = vpop.permute.xlu0 %1601
      %1603 = vrot.lane.b32.xlu0 %v1524, 48
      %v1604 = vpop.permute.xlu0 %1603
      %1605 = vrot.lane.b32.xlu0 %v1525, 48
      %v1606 = vpop.permute.xlu0 %1605
      %1607 = vrot.lane.b32.xlu0 %v1526, 48
      %v1608 = vpop.permute.xlu0 %1607
      %1609 = vrot.lane.b32.xlu0 %v1527, 48
      %v1610 = vpop.permute.xlu0 %1609
      %1611 = vrot.lane.b32.xlu0 %v1528, 48
      %v1612 = vpop.permute.xlu0 %1611
      %1613 = vrot.lane.b32.xlu0 %v1529, 48
      %v1614 = vpop.permute.xlu0 %1613
      %1615 = vrot.lane.b32.xlu0 %v1530, 48
      %v1616 = vpop.permute.xlu0 %1615
      %1617 = vrot.lane.b32.xlu0 %v1531, 48
      %v1618 = vpop.permute.xlu0 %1617
      %1619 = vrot.lane.b32.xlu0 %v1532, 48
      %v1620 = vpop.permute.xlu0 %1619
      %1621 = vrot.lane.b32.xlu0 %v1533, 48
      %v1622 = vpop.permute.xlu0 %1621
      %1623 = vrot.lane.b32.xlu0 %v1534, 48
      %v1624 = vpop.permute.xlu0 %1623
      %1625 = vrot.lane.b32.xlu0 %v1535, 48
      %v1626 = vpop.permute.xlu0 %1625
      %1627 = vrot.lane.b32.xlu0 %v1536, 48
      %v1628 = vpop.permute.xlu0 %1627
      %1629 = vrot.lane.b32.xlu0 %v1537, 48
      %v1630 = vpop.permute.xlu0 %1629
      %1631 = vrot.lane.b32.xlu0 %v1538, 48
      %v1632 = vpop.permute.xlu0 %1631
      %1633 = vrot.lane.b32.xlu0 %v1539, 48
      %v1634 = vpop.permute.xlu0 %1633
      %1635 = vrot.lane.b32.xlu0 %v1540, 48
      %v1636 = vpop.permute.xlu0 %1635
      %vm1669 = vcmask 458112
      %1670 = vst.msk [vmem:[#allocation3] sm:$0xff] %vm1669, %v1574
      %1671 = vst.msk [vmem:[#allocation3 + $0x8] sm:$0xff] %vm1669, %v1576
      %1672 = vst.msk [vmem:[#allocation3 + $0x10] sm:$0xff] %vm1669, %v1578
      %1673 = vst.msk [vmem:[#allocation3 + $0x18] sm:$0xff] %vm1669, %v1580
      %1674 = vst.msk [vmem:[#allocation3 + $0x20] sm:$0xff] %vm1669, %v1582
      %1675 = vst.msk [vmem:[#allocation3 + $0x28] sm:$0xff] %vm1669, %v1584
      %1676 = vst.msk [vmem:[#allocation3 + $0x30] sm:$0xff] %vm1669, %v1586
      %1677 = vst.msk [vmem:[#allocation3 + $0x38] sm:$0xff] %vm1669, %v1588
      %1678 = vst.msk [vmem:[#allocation3 + $0x40] sm:$0xff] %vm1669, %v1590
      %1679 = vst.msk [vmem:[#allocation3 + $0x48] sm:$0xff] %vm1669, %v1592
      %1680 = vst.msk [vmem:[#allocation3 + $0x50] sm:$0xff] %vm1669, %v1594
      %1681 = vst.msk [vmem:[#allocation3 + $0x58] sm:$0xff] %vm1669, %v1596
      %1682 = vst.msk [vmem:[#allocation3 + $0x60] sm:$0xff] %vm1669, %v1598
      %1683 = vst.msk [vmem:[#allocation3 + $0x68] sm:$0xff] %vm1669, %v1600
      %1684 = vst.msk [vmem:[#allocation3 + $0x70] sm:$0xff] %vm1669, %v1602
      %1685 = vst.msk [vmem:[#allocation3 + $0x78] sm:$0xff] %vm1669, %v1604
      %1686 = vst.msk [vmem:[#allocation3 + $0x80] sm:$0xff] %vm1669, %v1606
      %1687 = vst.msk [vmem:[#allocation3 + $0x88] sm:$0xff] %vm1669, %v1608
      %1688 = vst.msk [vmem:[#allocation3 + $0x90] sm:$0xff] %vm1669, %v1610
      %1689 = vst.msk [vmem:[#allocation3 + $0x98] sm:$0xff] %vm1669, %v1612
      %1690 = vst.msk [vmem:[#allocation3 + $0xa0] sm:$0xff] %vm1669, %v1614
      %1691 = vst.msk [vmem:[#allocation3 + $0xa8] sm:$0xff] %vm1669, %v1616
      %1692 = vst.msk [vmem:[#allocation3 + $0xb0] sm:$0xff] %vm1669, %v1618
      %1693 = vst.msk [vmem:[#allocation3 + $0xb8] sm:$0xff] %vm1669, %v1620
      %1694 = vst.msk [vmem:[#allocation3 + $0xc0] sm:$0xff] %vm1669, %v1622
      %1695 = vst.msk [vmem:[#allocation3 + $0xc8] sm:$0xff] %vm1669, %v1624
      %1696 = vst.msk [vmem:[#allocation3 + $0xd0] sm:$0xff] %vm1669, %v1626
      %1697 = vst.msk [vmem:[#allocation3 + $0xd8] sm:$0xff] %vm1669, %v1628
      %1698 = vst.msk [vmem:[#allocation3 + $0xe0] sm:$0xff] %vm1669, %v1630
      %1699 = vst.msk [vmem:[#allocation3 + $0xe8] sm:$0xff] %vm1669, %v1632
      %1700 = vst.msk [vmem:[#allocation3 + $0xf0] sm:$0xff] %vm1669, %v1634
      %1701 = vst.msk [vmem:[#allocation3 + $0xf8] sm:$0xff] %vm1669, %v1636
      %v1702 = vld [vmem:[%s1508 + $0x1] sm:$0xff]
      %v1703 = vld [vmem:[%s1508 + $0x9] sm:$0xff]
      %v1704 = vld [vmem:[%s1508 + $0x19] sm:$0xff]
      %v1705 = vld [vmem:[%s1508 + $0x21] sm:$0xff]
      %v1706 = vld [vmem:[%s1508 + $0x31] sm:$0xff]
      %v1707 = vld [vmem:[%s1508 + $0x39] sm:$0xff]
      %v1708 = vld [vmem:[%s1508 + $0x49] sm:$0xff]
      %v1709 = vld [vmem:[%s1508 + $0x51] sm:$0xff]
      %v1710 = vld [vmem:[%s1508 + $0x61] sm:$0xff]
      %v1711 = vld [vmem:[%s1508 + $0x69] sm:$0xff]
      %v1712 = vld [vmem:[%s1508 + $0x79] sm:$0xff]
      %v1713 = vld [vmem:[%s1508 + $0x81] sm:$0xff]
      %v1714 = vld [vmem:[%s1508 + $0x91] sm:$0xff]
      %v1715 = vld [vmem:[%s1508 + $0x99] sm:$0xff]
      %v1716 = vld [vmem:[%s1508 + $0xa9] sm:$0xff]
      %v1717 = vld [vmem:[%s1508 + $0xb1] sm:$0xff]
      %v1718 = vld [vmem:[%s1508 + $0xc1] sm:$0xff]
      %v1719 = vld [vmem:[%s1508 + $0xc9] sm:$0xff]
      %v1720 = vld [vmem:[%s1508 + $0xd9] sm:$0xff]
      %v1721 = vld [vmem:[%s1508 + $0xe1] sm:$0xff]
      %v1722 = vld [vmem:[%s1508 + $0xf1] sm:$0xff]
      %v1723 = vld [vmem:[%s1508 + $0xf9] sm:$0xff]
      %v1724 = vld [vmem:[%s1508 + $0x109] sm:$0xff]
      %v1725 = vld [vmem:[%s1508 + $0x111] sm:$0xff]
      %v1726 = vld [vmem:[%s1508 + $0x121] sm:$0xff]
      %v1727 = vld [vmem:[%s1508 + $0x129] sm:$0xff]
      %v1728 = vld [vmem:[%s1508 + $0x139] sm:$0xff]
      %v1729 = vld [vmem:[%s1508 + $0x141] sm:$0xff]
      %v1730 = vld [vmem:[%s1508 + $0x151] sm:$0xff]
      %v1731 = vld [vmem:[%s1508 + $0x159] sm:$0xff]
      %v1732 = vld [vmem:[%s1508 + $0x169] sm:$0xff]
      %v1733 = vld [vmem:[%s1508 + $0x171] sm:$0xff]
      %1766 = vrot.lane.b32.xlu0 %v1702, 56
      %v1767 = vpop.permute.xlu0 %1766
      %1768 = vrot.lane.b32.xlu0 %v1703, 56
      %v1769 = vpop.permute.xlu0 %1768
      %1770 = vrot.lane.b32.xlu0 %v1704, 56
      %v1771 = vpop.permute.xlu0 %1770
      %1772 = vrot.lane.b32.xlu0 %v1705, 56
      %v1773 = vpop.permute.xlu0 %1772
      %1774 = vrot.lane.b32.xlu0 %v1706, 56
      %v1775 = vpop.permute.xlu0 %1774
      %1776 = vrot.lane.b32.xlu0 %v1707, 56
      %v1777 = vpop.permute.xlu0 %1776
      %1778 = vrot.lane.b32.xlu0 %v1708, 56
      %v1779 = vpop.permute.xlu0 %1778
      %1780 = vrot.lane.b32.xlu0 %v1709, 56
      %v1781 = vpop.permute.xlu0 %1780
      %1782 = vrot.lane.b32.xlu0 %v1710, 56
      %v1783 = vpop.permute.xlu0 %1782
      %1784 = vrot.lane.b32.xlu0 %v1711, 56
      %v1785 = vpop.permute.xlu0 %1784
      %1786 = vrot.lane.b32.xlu0 %v1712, 56
      %v1787 = vpop.permute.xlu0 %1786
      %1788 = vrot.lane.b32.xlu0 %v1713, 56
      %v1789 = vpop.permute.xlu0 %1788
      %1790 = vrot.lane.b32.xlu0 %v1714, 56
      %v1791 = vpop.permute.xlu0 %1790
      %1792 = vrot.lane.b32.xlu0 %v1715, 56
      %v1793 = vpop.permute.xlu0 %1792
      %1794 = vrot.lane.b32.xlu0 %v1716, 56
      %v1795 = vpop.permute.xlu0 %1794
      %1796 = vrot.lane.b32.xlu0 %v1717, 56
      %v1797 = vpop.permute.xlu0 %1796
      %1798 = vrot.lane.b32.xlu0 %v1718, 56
      %v1799 = vpop.permute.xlu0 %1798
      %1800 = vrot.lane.b32.xlu0 %v1719, 56
      %v1801 = vpop.permute.xlu0 %1800
      %1802 = vrot.lane.b32.xlu0 %v1720, 56
      %v1803 = vpop.permute.xlu0 %1802
      %1804 = vrot.lane.b32.xlu0 %v1721, 56
      %v1805 = vpop.permute.xlu0 %1804
      %1806 = vrot.lane.b32.xlu0 %v1722, 56
      %v1807 = vpop.permute.xlu0 %1806
      %1808 = vrot.lane.b32.xlu0 %v1723, 56
      %v1809 = vpop.permute.xlu0 %1808
      %1810 = vrot.lane.b32.xlu0 %v1724, 56
      %v1811 = vpop.permute.xlu0 %1810
      %1812 = vrot.lane.b32.xlu0 %v1725, 56
      %v1813 = vpop.permute.xlu0 %1812
      %1814 = vrot.lane.b32.xlu0 %v1726, 56
      %v1815 = vpop.permute.xlu0 %1814
      %1816 = vrot.lane.b32.xlu0 %v1727, 56
      %v1817 = vpop.permute.xlu0 %1816
      %1818 = vrot.lane.b32.xlu0 %v1728, 56
      %v1819 = vpop.permute.xlu0 %1818
      %1820 = vrot.lane.b32.xlu0 %v1729, 56
      %v1821 = vpop.permute.xlu0 %1820
      %1822 = vrot.lane.b32.xlu0 %v1730, 56
      %v1823 = vpop.permute.xlu0 %1822
      %1824 = vrot.lane.b32.xlu0 %v1731, 56
      %v1825 = vpop.permute.xlu0 %1824
      %1826 = vrot.lane.b32.xlu0 %v1732, 56
      %v1827 = vpop.permute.xlu0 %1826
      %1828 = vrot.lane.b32.xlu0 %v1733, 56
      %v1829 = vpop.permute.xlu0 %1828
      %vm1862 = vcmask 523712
      %1863 = vst.msk [vmem:[#allocation3] sm:$0xff] %vm1862, %v1767
      %1864 = vst.msk [vmem:[#allocation3 + $0x8] sm:$0xff] %vm1862, %v1769
      %1865 = vst.msk [vmem:[#allocation3 + $0x10] sm:$0xff] %vm1862, %v1771
      %1866 = vst.msk [vmem:[#allocation3 + $0x18] sm:$0xff] %vm1862, %v1773
      %1867 = vst.msk [vmem:[#allocation3 + $0x20] sm:$0xff] %vm1862, %v1775
      %1868 = vst.msk [vmem:[#allocation3 + $0x28] sm:$0xff] %vm1862, %v1777
      %1869 = vst.msk [vmem:[#allocation3 + $0x30] sm:$0xff] %vm1862, %v1779
      %1870 = vst.msk [vmem:[#allocation3 + $0x38] sm:$0xff] %vm1862, %v1781
      %1871 = vst.msk [vmem:[#allocation3 + $0x40] sm:$0xff] %vm1862, %v1783
      %1872 = vst.msk [vmem:[#allocation3 + $0x48] sm:$0xff] %vm1862, %v1785
      %1873 = vst.msk [vmem:[#allocation3 + $0x50] sm:$0xff] %vm1862, %v1787
      %1874 = vst.msk [vmem:[#allocation3 + $0x58] sm:$0xff] %vm1862, %v1789
      %1875 = vst.msk [vmem:[#allocation3 + $0x60] sm:$0xff] %vm1862, %v1791
      %1876 = vst.msk [vmem:[#allocation3 + $0x68] sm:$0xff] %vm1862, %v1793
      %1877 = vst.msk [vmem:[#allocation3 + $0x70] sm:$0xff] %vm1862, %v1795
      %1878 = vst.msk [vmem:[#allocation3 + $0x78] sm:$0xff] %vm1862, %v1797
      %1879 = vst.msk [vmem:[#allocation3 + $0x80] sm:$0xff] %vm1862, %v1799
      %1880 = vst.msk [vmem:[#allocation3 + $0x88] sm:$0xff] %vm1862, %v1801
      %1881 = vst.msk [vmem:[#allocation3 + $0x90] sm:$0xff] %vm1862, %v1803
      %1882 = vst.msk [vmem:[#allocation3 + $0x98] sm:$0xff] %vm1862, %v1805
      %1883 = vst.msk [vmem:[#allocation3 + $0xa0] sm:$0xff] %vm1862, %v1807
      %1884 = vst.msk [vmem:[#allocation3 + $0xa8] sm:$0xff] %vm1862, %v1809
      %1885 = vst.msk [vmem:[#allocation3 + $0xb0] sm:$0xff] %vm1862, %v1811
      %1886 = vst.msk [vmem:[#allocation3 + $0xb8] sm:$0xff] %vm1862, %v1813
      %1887 = vst.msk [vmem:[#allocation3 + $0xc0] sm:$0xff] %vm1862, %v1815
      %1888 = vst.msk [vmem:[#allocation3 + $0xc8] sm:$0xff] %vm1862, %v1817
      %1889 = vst.msk [vmem:[#allocation3 + $0xd0] sm:$0xff] %vm1862, %v1819
      %1890 = vst.msk [vmem:[#allocation3 + $0xd8] sm:$0xff] %vm1862, %v1821
      %1891 = vst.msk [vmem:[#allocation3 + $0xe0] sm:$0xff] %vm1862, %v1823
      %1892 = vst.msk [vmem:[#allocation3 + $0xe8] sm:$0xff] %vm1862, %v1825
      %1893 = vst.msk [vmem:[#allocation3 + $0xf0] sm:$0xff] %vm1862, %v1827
      %1894 = vst.msk [vmem:[#allocation3 + $0xf8] sm:$0xff] %vm1862, %v1829
      %v1895 = vld [vmem:[%s1508 + $0x2] sm:$0xff]
      %v1896 = vld [vmem:[%s1508 + $0xa] sm:$0xff]
      %v1897 = vld [vmem:[%s1508 + $0x1a] sm:$0xff]
      %v1898 = vld [vmem:[%s1508 + $0x22] sm:$0xff]
      %v1899 = vld [vmem:[%s1508 + $0x32] sm:$0xff]
      %v1900 = vld [vmem:[%s1508 + $0x3a] sm:$0xff]
      %v1901 = vld [vmem:[%s1508 + $0x4a] sm:$0xff]
      %v1902 = vld [vmem:[%s1508 + $0x52] sm:$0xff]
      %v1903 = vld [vmem:[%s1508 + $0x62] sm:$0xff]
      %v1904 = vld [vmem:[%s1508 + $0x6a] sm:$0xff]
      %v1905 = vld [vmem:[%s1508 + $0x7a] sm:$0xff]
      %v1906 = vld [vmem:[%s1508 + $0x82] sm:$0xff]
      %v1907 = vld [vmem:[%s1508 + $0x92] sm:$0xff]
      %v1908 = vld [vmem:[%s1508 + $0x9a] sm:$0xff]
      %v1909 = vld [vmem:[%s1508 + $0xaa] sm:$0xff]
      %v1910 = vld [vmem:[%s1508 + $0xb2] sm:$0xff]
      %v1911 = vld [vmem:[%s1508 + $0xc2] sm:$0xff]
      %v1912 = vld [vmem:[%s1508 + $0xca] sm:$0xff]
      %v1913 = vld [vmem:[%s1508 + $0xda] sm:$0xff]
      %v1914 = vld [vmem:[%s1508 + $0xe2] sm:$0xff]
      %v1915 = vld [vmem:[%s1508 + $0xf2] sm:$0xff]
      %v1916 = vld [vmem:[%s1508 + $0xfa] sm:$0xff]
      %v1917 = vld [vmem:[%s1508 + $0x10a] sm:$0xff]
      %v1918 = vld [vmem:[%s1508 + $0x112] sm:$0xff]
      %v1919 = vld [vmem:[%s1508 + $0x122] sm:$0xff]
      %v1920 = vld [vmem:[%s1508 + $0x12a] sm:$0xff]
      %v1921 = vld [vmem:[%s1508 + $0x13a] sm:$0xff]
      %v1922 = vld [vmem:[%s1508 + $0x142] sm:$0xff]
      %v1923 = vld [vmem:[%s1508 + $0x152] sm:$0xff]
      %v1924 = vld [vmem:[%s1508 + $0x15a] sm:$0xff]
      %v1925 = vld [vmem:[%s1508 + $0x16a] sm:$0xff]
      %v1926 = vld [vmem:[%s1508 + $0x172] sm:$0xff]
      %1959 = vrot.lane.b32.xlu0 %v1895, 64
      %v1960 = vpop.permute.xlu0 %1959
      %1961 = vrot.lane.b32.xlu0 %v1896, 64
      %v1962 = vpop.permute.xlu0 %1961
      %1963 = vrot.lane.b32.xlu0 %v1897, 64
      %v1964 = vpop.permute.xlu0 %1963
      %1965 = vrot.lane.b32.xlu0 %v1898, 64
      %v1966 = vpop.permute.xlu0 %1965
      %1967 = vrot.lane.b32.xlu0 %v1899, 64
      %v1968 = vpop.permute.xlu0 %1967
      %1969 = vrot.lane.b32.xlu0 %v1900, 64
      %v1970 = vpop.permute.xlu0 %1969
      %1971 = vrot.lane.b32.xlu0 %v1901, 64
      %v1972 = vpop.permute.xlu0 %1971
      %1973 = vrot.lane.b32.xlu0 %v1902, 64
      %v1974 = vpop.permute.xlu0 %1973
      %1975 = vrot.lane.b32.xlu0 %v1903, 64
      %v1976 = vpop.permute.xlu0 %1975
      %1977 = vrot.lane.b32.xlu0 %v1904, 64
      %v1978 = vpop.permute.xlu0 %1977
      %1979 = vrot.lane.b32.xlu0 %v1905, 64
      %v1980 = vpop.permute.xlu0 %1979
      %1981 = vrot.lane.b32.xlu0 %v1906, 64
      %v1982 = vpop.permute.xlu0 %1981
      %1983 = vrot.lane.b32.xlu0 %v1907, 64
      %v1984 = vpop.permute.xlu0 %1983
      %1985 = vrot.lane.b32.xlu0 %v1908, 64
      %v1986 = vpop.permute.xlu0 %1985
      %1987 = vrot.lane.b32.xlu0 %v1909, 64
      %v1988 = vpop.permute.xlu0 %1987
      %1989 = vrot.lane.b32.xlu0 %v1910, 64
      %v1990 = vpop.permute.xlu0 %1989
      %1991 = vrot.lane.b32.xlu0 %v1911, 64
      %v1992 = vpop.permute.xlu0 %1991
      %1993 = vrot.lane.b32.xlu0 %v1912, 64
      %v1994 = vpop.permute.xlu0 %1993
      %1995 = vrot.lane.b32.xlu0 %v1913, 64
      %v1996 = vpop.permute.xlu0 %1995
      %1997 = vrot.lane.b32.xlu0 %v1914, 64
      %v1998 = vpop.permute.xlu0 %1997
      %1999 = vrot.lane.b32.xlu0 %v1915, 64
      %v2000 = vpop.permute.xlu0 %1999
      %2001 = vrot.lane.b32.xlu0 %v1916, 64
      %v2002 = vpop.permute.xlu0 %2001
      %2003 = vrot.lane.b32.xlu0 %v1917, 64
      %v2004 = vpop.permute.xlu0 %2003
      %2005 = vrot.lane.b32.xlu0 %v1918, 64
      %v2006 = vpop.permute.xlu0 %2005
      %2007 = vrot.lane.b32.xlu0 %v1919, 64
      %v2008 = vpop.permute.xlu0 %2007
      %2009 = vrot.lane.b32.xlu0 %v1920, 64
      %v2010 = vpop.permute.xlu0 %2009
      %2011 = vrot.lane.b32.xlu0 %v1921, 64
      %v2012 = vpop.permute.xlu0 %2011
      %2013 = vrot.lane.b32.xlu0 %v1922, 64
      %v2014 = vpop.permute.xlu0 %2013
      %2015 = vrot.lane.b32.xlu0 %v1923, 64
      %v2016 = vpop.permute.xlu0 %2015
      %2017 = vrot.lane.b32.xlu0 %v1924, 64
      %v2018 = vpop.permute.xlu0 %2017
      %2019 = vrot.lane.b32.xlu0 %v1925, 64
      %v2020 = vpop.permute.xlu0 %2019
      %2021 = vrot.lane.b32.xlu0 %v1926, 64
      %v2022 = vpop.permute.xlu0 %2021
      %vm2055 = vcmask 589312
      %2056 = vst.msk [vmem:[#allocation3] sm:$0xff] %vm2055, %v1960
      %2057 = vst.msk [vmem:[#allocation3 + $0x8] sm:$0xff] %vm2055, %v1962
      %2058 = vst.msk [vmem:[#allocation3 + $0x10] sm:$0xff] %vm2055, %v1964
      %2059 = vst.msk [vmem:[#allocation3 + $0x18] sm:$0xff] %vm2055, %v1966
      %2060 = vst.msk [vmem:[#allocation3 + $0x20] sm:$0xff] %vm2055, %v1968
      %2061 = vst.msk [vmem:[#allocation3 + $0x28] sm:$0xff] %vm2055, %v1970
      %2062 = vst.msk [vmem:[#allocation3 + $0x30] sm:$0xff] %vm2055, %v1972
      %2063 = vst.msk [vmem:[#allocation3 + $0x38] sm:$0xff] %vm2055, %v1974
      %2064 = vst.msk [vmem:[#allocation3 + $0x40] sm:$0xff] %vm2055, %v1976
      %2065 = vst.msk [vmem:[#allocation3 + $0x48] sm:$0xff] %vm2055, %v1978
      %2066 = vst.msk [vmem:[#allocation3 + $0x50] sm:$0xff] %vm2055, %v1980
      %2067 = vst.msk [vmem:[#allocation3 + $0x58] sm:$0xff] %vm2055, %v1982
      %2068 = vst.msk [vmem:[#allocation3 + $0x60] sm:$0xff] %vm2055, %v1984
      %2069 = vst.msk [vmem:[#allocation3 + $0x68] sm:$0xff] %vm2055, %v1986
      %2070 = vst.msk [vmem:[#allocation3 + $0x70] sm:$0xff] %vm2055, %v1988
      %2071 = vst.msk [vmem:[#allocation3 + $0x78] sm:$0xff] %vm2055, %v1990
      %2072 = vst.msk [vmem:[#allocation3 + $0x80] sm:$0xff] %vm2055, %v1992
      %2073 = vst.msk [vmem:[#allocation3 + $0x88] sm:$0xff] %vm2055, %v1994
      %2074 = vst.msk [vmem:[#allocation3 + $0x90] sm:$0xff] %vm2055, %v1996
      %2075 = vst.msk [vmem:[#allocation3 + $0x98] sm:$0xff] %vm2055, %v1998
      %2076 = vst.msk [vmem:[#allocation3 + $0xa0] sm:$0xff] %vm2055, %v2000
      %2077 = vst.msk [vmem:[#allocation3 + $0xa8] sm:$0xff] %vm2055, %v2002
      %2078 = vst.msk [vmem:[#allocation3 + $0xb0] sm:$0xff] %vm2055, %v2004
      %2079 = vst.msk [vmem:[#allocation3 + $0xb8] sm:$0xff] %vm2055, %v2006
      %2080 = vst.msk [vmem:[#allocation3 + $0xc0] sm:$0xff] %vm2055, %v2008
      %2081 = vst.msk [vmem:[#allocation3 + $0xc8] sm:$0xff] %vm2055, %v2010
      %2082 = vst.msk [vmem:[#allocation3 + $0xd0] sm:$0xff] %vm2055, %v2012
      %2083 = vst.msk [vmem:[#allocation3 + $0xd8] sm:$0xff] %vm2055, %v2014
      %2084 = vst.msk [vmem:[#allocation3 + $0xe0] sm:$0xff] %vm2055, %v2016
      %2085 = vst.msk [vmem:[#allocation3 + $0xe8] sm:$0xff] %vm2055, %v2018
      %2086 = vst.msk [vmem:[#allocation3 + $0xf0] sm:$0xff] %vm2055, %v2020
      %2087 = vst.msk [vmem:[#allocation3 + $0xf8] sm:$0xff] %vm2055, %v2022
      %v2088 = vld [vmem:[#allocation3] sm:$0xff]
      %v2089 = vld [vmem:[#allocation3 + $0x8] sm:$0xff]
      %v2090 = vld [vmem:[#allocation3 + $0x10] sm:$0xff]
      %v2091 = vld [vmem:[#allocation3 + $0x18] sm:$0xff]
      %v2092 = vld [vmem:[#allocation3 + $0x20] sm:$0xff]
      %v2093 = vld [vmem:[#allocation3 + $0x28] sm:$0xff]
      %v2094 = vld [vmem:[#allocation3 + $0x30] sm:$0xff]
      %v2095 = vld [vmem:[#allocation3 + $0x38] sm:$0xff]
      %v2096 = vld [vmem:[#allocation3 + $0x40] sm:$0xff]
      %v2097 = vld [vmem:[#allocation3 + $0x48] sm:$0xff]
      %v2098 = vld [vmem:[#allocation3 + $0x50] sm:$0xff]
      %v2099 = vld [vmem:[#allocation3 + $0x58] sm:$0xff]
      %v2100 = vld [vmem:[#allocation3 + $0x60] sm:$0xff]
      %v2101 = vld [vmem:[#allocation3 + $0x68] sm:$0xff]
      %v2102 = vld [vmem:[#allocation3 + $0x70] sm:$0xff]
      %v2103 = vld [vmem:[#allocation3 + $0x78] sm:$0xff]
      %v2104 = vld [vmem:[#allocation3 + $0x80] sm:$0xff]
      %v2105 = vld [vmem:[#allocation3 + $0x88] sm:$0xff]
      %v2106 = vld [vmem:[#allocation3 + $0x90] sm:$0xff]
      %v2107 = vld [vmem:[#allocation3 + $0x98] sm:$0xff]
      %v2108 = vld [vmem:[#allocation3 + $0xa0] sm:$0xff]
      %v2109 = vld [vmem:[#allocation3 + $0xa8] sm:$0xff]
      %v2110 = vld [vmem:[#allocation3 + $0xb0] sm:$0xff]
      %v2111 = vld [vmem:[#allocation3 + $0xb8] sm:$0xff]
      %v2112 = vld [vmem:[#allocation3 + $0xc0] sm:$0xff]
      %v2113 = vld [vmem:[#allocation3 + $0xc8] sm:$0xff]
      %v2114 = vld [vmem:[#allocation3 + $0xd0] sm:$0xff]
      %v2115 = vld [vmem:[#allocation3 + $0xd8] sm:$0xff]
      %v2116 = vld [vmem:[#allocation3 + $0xe0] sm:$0xff]
      %v2117 = vld [vmem:[#allocation3 + $0xe8] sm:$0xff]
      %v2118 = vld [vmem:[#allocation3 + $0xf0] sm:$0xff]
      %v2119 = vld [vmem:[#allocation3 + $0xf8] sm:$0xff]
      %v2120 = vld [vmem:[%s3] sm:$0xff]
      %v2121 = vld [vmem:[%s3 + $0x8] sm:$0xff]
      %v2122 = vld [vmem:[%s3 + $0x10] sm:$0xff]
      %v2123 = vld [vmem:[%s3 + $0x18] sm:$0xff]
      %v2124 = vld [vmem:[%s3 + $0x20] sm:$0xff]
      %v2125 = vld [vmem:[%s3 + $0x28] sm:$0xff]
      %v2126 = vld [vmem:[%s3 + $0x30] sm:$0xff]
      %v2127 = vld [vmem:[%s3 + $0x38] sm:$0xff]
      %v2128 = vld [vmem:[%s3 + $0x40] sm:$0xff]
      %v2129 = vld [vmem:[%s4] sm:$0x1]
      %v2131 = vperm.slane %v2129, 0
      %vm2133 = vcmask 588800
      %v2135 = vsel %vm2133, %v2088, 0
      %v2138 = vsel %vm2133, %v2089, 0
      %v2141 = vsel %vm2133, %v2090, 0
      %v2144 = vsel %vm2133, %v2091, 0
      %v2147 = vsel %vm2133, %v2092, 0
      %v2150 = vsel %vm2133, %v2093, 0
      %v2153 = vsel %vm2133, %v2094, 0
      %v2156 = vsel %vm2133, %v2095, 0
      %v2159 = vsel %vm2133, %v2096, 0
      %v2162 = vsel %vm2133, %v2097, 0
      %v2165 = vsel %vm2133, %v2098, 0
      %v2168 = vsel %vm2133, %v2099, 0
      %v2171 = vsel %vm2133, %v2100, 0
      %v2174 = vsel %vm2133, %v2101, 0
      %v2177 = vsel %vm2133, %v2102, 0
      %v2180 = vsel %vm2133, %v2103, 0
      %v2183 = vsel %vm2133, %v2104, 0
      %v2186 = vsel %vm2133, %v2105, 0
      %v2189 = vsel %vm2133, %v2106, 0
      %v2192 = vsel %vm2133, %v2107, 0
      %v2195 = vsel %vm2133, %v2108, 0
      %v2198 = vsel %vm2133, %v2109, 0
      %v2201 = vsel %vm2133, %v2110, 0
      %v2204 = vsel %vm2133, %v2111, 0
      %v2207 = vsel %vm2133, %v2112, 0
      %v2210 = vsel %vm2133, %v2113, 0
      %v2213 = vsel %vm2133, %v2114, 0
      %v2216 = vsel %vm2133, %v2115, 0
      %v2219 = vsel %vm2133, %v2116, 0
      %v2222 = vsel %vm2133, %v2117, 0
      %v2225 = vsel %vm2133, %v2118, 0
      %v2228 = vsel %vm2133, %v2119, 0
      %2230 = vmatpush.msra.mxu0 0.0
      %2231 = vmatpush.msra.mxu0 0.0
      %2232 = vmatpush.msra.mxu0 0.0
      %2233 = vmatpush.msra.mxu0 0.0
      %2234 = vmatpush.msra.mxu0 0.0
      %2235 = vmatpush.msra.mxu0 0.0
      %2236 = vmatpush.msra.mxu0 0.0
      %2237 = vmatpush.msra.mxu0 %v2128
      %2238 = vmatpush.msra.mxu0 %v2127
      %2239 = vmatpush.msra.mxu0 %v2126
      %2240 = vmatpush.msra.mxu0 %v2125
      %2241 = vmatpush.msra.mxu0 %v2124
      %2242 = vmatpush.msra.mxu0 %v2123
      %2243 = vmatpush.msra.mxu0 %v2122
      %2244 = vmatpush.msra.mxu0 %v2121
      %2245 = vmatpush.msra.mxu0 %v2120
      %2246 = vmatmul.f32.gmra.mxu0 %v2135
      %v2247 = vpop.f32.mrf.mxu0
      %v2248 = vadd.f32 %v2131, %v2247
      %2249 = vmatmul.f32.gmra.mxu0 %v2138
      %v2250 = vpop.f32.mrf.mxu0
      %v2251 = vadd.f32 %v2131, %v2250
      %2252 = vmatmul.f32.gmra.mxu0 %v2141
      %v2253 = vpop.f32.mrf.mxu0
      %v2254 = vadd.f32 %v2131, %v2253
      %2255 = vmatmul.f32.gmra.mxu0 %v2144
      %v2256 = vpop.f32.mrf.mxu0
      %v2257 = vadd.f32 %v2131, %v2256
      %2258 = vmatmul.f32.gmra.mxu0 %v2147
      %v2259 = vpop.f32.mrf.mxu0
      %v2260 = vadd.f32 %v2131, %v2259
      %2261 = vmatmul.f32.gmra.mxu0 %v2150
      %v2262 = vpop.f32.mrf.mxu0
      %v2263 = vadd.f32 %v2131, %v2262
      %2264 = vmatmul.f32.gmra.mxu0 %v2153
      %v2265 = vpop.f32.mrf.mxu0
      %v2266 = vadd.f32 %v2131, %v2265
      %2267 = vmatmul.f32.gmra.mxu0 %v2156
      %v2268 = vpop.f32.mrf.mxu0
      %v2269 = vadd.f32 %v2131, %v2268
      %2270 = vmatmul.f32.gmra.mxu0 %v2159
      %v2271 = vpop.f32.mrf.mxu0
      %v2272 = vadd.f32 %v2131, %v2271
      %2273 = vmatmul.f32.gmra.mxu0 %v2162
      %v2274 = vpop.f32.mrf.mxu0
      %v2275 = vadd.f32 %v2131, %v2274
      %2276 = vmatmul.f32.gmra.mxu0 %v2165
      %v2277 = vpop.f32.mrf.mxu0
      %v2278 = vadd.f32 %v2131, %v2277
      %2279 = vmatmul.f32.gmra.mxu0 %v2168
      %v2280 = vpop.f32.mrf.mxu0
      %v2281 = vadd.f32 %v2131, %v2280
      %2282 = vmatmul.f32.gmra.mxu0 %v2171
      %v2283 = vpop.f32.mrf.mxu0
      %v2284 = vadd.f32 %v2131, %v2283
      %2285 = vmatmul.f32.gmra.mxu0 %v2174
      %v2286 = vpop.f32.mrf.mxu0
      %v2287 = vadd.f32 %v2131, %v2286
      %2288 = vmatmul.f32.gmra.mxu0 %v2177
      %v2289 = vpop.f32.mrf.mxu0
      %v2290 = vadd.f32 %v2131, %v2289
      %2291 = vmatmul.f32.gmra.mxu0 %v2180
      %v2292 = vpop.f32.mrf.mxu0
      %v2293 = vadd.f32 %v2131, %v2292
      %2294 = vmatmul.f32.gmra.mxu0 %v2183
      %v2295 = vpop.f32.mrf.mxu0
      %v2296 = vadd.f32 %v2131, %v2295
      %2297 = vmatmul.f32.gmra.mxu0 %v2186
      %v2298 = vpop.f32.mrf.mxu0
      %v2299 = vadd.f32 %v2131, %v2298
      %2300 = vmatmul.f32.gmra.mxu0 %v2189
      %v2301 = vpop.f32.mrf.mxu0
      %v2302 = vadd.f32 %v2131, %v2301
      %2303 = vmatmul.f32.gmra.mxu0 %v2192
      %v2304 = vpop.f32.mrf.mxu0
      %v2305 = vadd.f32 %v2131, %v2304
      %2306 = vmatmul.f32.gmra.mxu0 %v2195
      %v2307 = vpop.f32.mrf.mxu0
      %v2308 = vadd.f32 %v2131, %v2307
      %2309 = vmatmul.f32.gmra.mxu0 %v2198
      %v2310 = vpop.f32.mrf.mxu0
      %v2311 = vadd.f32 %v2131, %v2310
      %2312 = vmatmul.f32.gmra.mxu0 %v2201
      %v2313 = vpop.f32.mrf.mxu0
      %v2314 = vadd.f32 %v2131, %v2313
      %2315 = vmatmul.f32.gmra.mxu0 %v2204
      %v2316 = vpop.f32.mrf.mxu0
      %v2317 = vadd.f32 %v2131, %v2316
      %2318 = vmatmul.f32.gmra.mxu0 %v2207
      %v2319 = vpop.f32.mrf.mxu0
      %v2320 = vadd.f32 %v2131, %v2319
      %2321 = vmatmul.f32.gmra.mxu0 %v2210
      %v2322 = vpop.f32.mrf.mxu0
      %v2323 = vadd.f32 %v2131, %v2322
      %2324 = vmatmul.f32.gmra.mxu0 %v2213
      %v2325 = vpop.f32.mrf.mxu0
      %v2326 = vadd.f32 %v2131, %v2325
      %2327 = vmatmul.f32.gmra.mxu0 %v2216
      %v2328 = vpop.f32.mrf.mxu0
      %v2329 = vadd.f32 %v2131, %v2328
      %2330 = vmatmul.f32.gmra.mxu0 %v2219
      %v2331 = vpop.f32.mrf.mxu0
      %v2332 = vadd.f32 %v2131, %v2331
      %2333 = vmatmul.f32.gmra.mxu0 %v2222
      %v2334 = vpop.f32.mrf.mxu0
      %v2335 = vadd.f32 %v2131, %v2334
      %2336 = vmatmul.f32.gmra.mxu0 %v2225
      %v2337 = vpop.f32.mrf.mxu0
      %v2338 = vadd.f32 %v2131, %v2337
      %2339 = vmatmul.f32.gmra.mxu0 %v2228
      %v2340 = vpop.f32.mrf.mxu0
      %v2341 = vadd.f32 %v2131, %v2340
      %2342 = vdwg.mxu0
      %v2343 = vmax.f32 %v2248, 0.0
      %v2344 = vmax.f32 %v2251, 0.0
      %v2345 = vmax.f32 %v2254, 0.0
      %v2346 = vmax.f32 %v2257, 0.0
      %v2347 = vmax.f32 %v2260, 0.0
      %v2348 = vmax.f32 %v2263, 0.0
      %v2349 = vmax.f32 %v2266, 0.0
      %v2350 = vmax.f32 %v2269, 0.0
      %v2351 = vmax.f32 %v2272, 0.0
      %v2352 = vmax.f32 %v2275, 0.0
      %v2353 = vmax.f32 %v2278, 0.0
      %v2354 = vmax.f32 %v2281, 0.0
      %v2355 = vmax.f32 %v2284, 0.0
      %v2356 = vmax.f32 %v2287, 0.0
      %v2357 = vmax.f32 %v2290, 0.0
      %v2358 = vmax.f32 %v2293, 0.0
      %v2359 = vmax.f32 %v2296, 0.0
      %v2360 = vmax.f32 %v2299, 0.0
      %v2361 = vmax.f32 %v2302, 0.0
      %v2362 = vmax.f32 %v2305, 0.0
      %v2363 = vmax.f32 %v2308, 0.0
      %v2364 = vmax.f32 %v2311, 0.0
      %v2365 = vmax.f32 %v2314, 0.0
      %v2366 = vmax.f32 %v2317, 0.0
      %v2367 = vmax.f32 %v2320, 0.0
      %v2368 = vmax.f32 %v2323, 0.0
      %v2369 = vmax.f32 %v2326, 0.0
      %v2370 = vmax.f32 %v2329, 0.0
      %v2371 = vmax.f32 %v2332, 0.0
      %v2372 = vmax.f32 %v2335, 0.0
      %v2373 = vmax.f32 %v2338, 0.0
      %v2374 = vmax.f32 %v2341, 0.0
      %2375 = vst.msk [vmem:[%s289] sm:$0xff] %vm296, %v2343
      %2376 = vst.msk [vmem:[%s289 + $0x8] sm:$0xff] %vm296, %v2344
      %2377 = vst.msk [vmem:[%s289 + $0x10] sm:$0xff] %vm296, %v2345
      %2378 = vst.msk [vmem:[%s289 + $0x18] sm:$0xff] %vm296, %v2346
      %2379 = vst.msk [vmem:[%s289 + $0x20] sm:$0xff] %vm296, %v2347
      %2380 = vst.msk [vmem:[%s289 + $0x28] sm:$0xff] %vm296, %v2348
      %2381 = vst.msk [vmem:[%s289 + $0x30] sm:$0xff] %vm296, %v2349
      %2382 = vst.msk [vmem:[%s289 + $0x38] sm:$0xff] %vm296, %v2350
      %2383 = vst.msk [vmem:[%s289 + $0x40] sm:$0xff] %vm296, %v2351
      %2384 = vst.msk [vmem:[%s289 + $0x48] sm:$0xff] %vm296, %v2352
      %2385 = vst.msk [vmem:[%s289 + $0x50] sm:$0xff] %vm296, %v2353
      %2386 = vst.msk [vmem:[%s289 + $0x58] sm:$0xff] %vm296, %v2354
      %2387 = vst.msk [vmem:[%s289 + $0x60] sm:$0xff] %vm296, %v2355
      %2388 = vst.msk [vmem:[%s289 + $0x68] sm:$0xff] %vm296, %v2356
      %2389 = vst.msk [vmem:[%s289 + $0x70] sm:$0xff] %vm296, %v2357
      %2390 = vst.msk [vmem:[%s289 + $0x78] sm:$0xff] %vm296, %v2358
      %2391 = vst.msk [vmem:[%s289 + $0x80] sm:$0xff] %vm296, %v2359
      %2392 = vst.msk [vmem:[%s289 + $0x88] sm:$0xff] %vm296, %v2360
      %2393 = vst.msk [vmem:[%s289 + $0x90] sm:$0xff] %vm296, %v2361
      %2394 = vst.msk [vmem:[%s289 + $0x98] sm:$0xff] %vm296, %v2362
      %2395 = vst.msk [vmem:[%s289 + $0xa0] sm:$0xff] %vm296, %v2363
      %2396 = vst.msk [vmem:[%s289 + $0xa8] sm:$0xff] %vm296, %v2364
      %2397 = vst.msk [vmem:[%s289 + $0xb0] sm:$0xff] %vm296, %v2365
      %2398 = vst.msk [vmem:[%s289 + $0xb8] sm:$0xff] %vm296, %v2366
      %2399 = vst.msk [vmem:[%s289 + $0xc0] sm:$0xff] %vm296, %v2367
      %2400 = vst.msk [vmem:[%s289 + $0xc8] sm:$0xff] %vm296, %v2368
      %2401 = vst.msk [vmem:[%s289 + $0xd0] sm:$0xff] %vm296, %v2369
      %2402 = vst.msk [vmem:[%s289 + $0xd8] sm:$0xff] %vm296, %v2370
      %2403 = vst.msk [vmem:[%s289 + $0xe0] sm:$0xff] %vm296, %v2371
      %2404 = vst.msk [vmem:[%s289 + $0xe8] sm:$0xff] %vm296, %v2372
      %2405 = vst.msk [vmem:[%s289 + $0xf0] sm:$0xff] %vm296, %v2373
      %2406 = vst.msk [vmem:[%s289 + $0xf8] sm:$0xff] %vm296, %v2374
      %v2407 = vsel %vm296, %v2343, 0.0
      %v2408 = vsel %vm296, %v2344, 0.0
      %v2409 = vadd.f32 %v2407, %v2408
      %v2410 = vsel %vm296, %v2345, 0.0
      %v2411 = vadd.f32 %v2409, %v2410
      %v2412 = vsel %vm296, %v2346, 0.0
      %v2413 = vadd.f32 %v2411, %v2412
      %v2414 = vsel %vm296, %v2347, 0.0
      %v2415 = vadd.f32 %v2413, %v2414
      %v2416 = vsel %vm296, %v2348, 0.0
      %v2417 = vadd.f32 %v2415, %v2416
      %v2418 = vsel %vm296, %v2349, 0.0
      %v2419 = vadd.f32 %v2417, %v2418
      %v2420 = vsel %vm296, %v2350, 0.0
      %v2421 = vadd.f32 %v2419, %v2420
      %v2422 = vsel %vm296, %v2351, 0.0
      %v2423 = vadd.f32 %v2421, %v2422
      %v2424 = vsel %vm296, %v2352, 0.0
      %v2425 = vadd.f32 %v2423, %v2424
      %v2426 = vsel %vm296, %v2353, 0.0
      %v2427 = vadd.f32 %v2425, %v2426
      %v2428 = vsel %vm296, %v2354, 0.0
      %v2429 = vadd.f32 %v2427, %v2428
      %v2430 = vsel %vm296, %v2355, 0.0
      %v2431 = vadd.f32 %v2429, %v2430
      %v2432 = vsel %vm296, %v2356, 0.0
      %v2433 = vadd.f32 %v2431, %v2432
      %v2434 = vsel %vm296, %v2357, 0.0
      %v2435 = vadd.f32 %v2433, %v2434
      %v2436 = vsel %vm296, %v2358, 0.0
      %v2437 = vadd.f32 %v2435, %v2436
      %v2438 = vsel %vm296, %v2359, 0.0
      %v2439 = vadd.f32 %v2437, %v2438
      %v2440 = vsel %vm296, %v2360, 0.0
      %v2441 = vadd.f32 %v2439, %v2440
      %v2442 = vsel %vm296, %v2361, 0.0
      %v2443 = vadd.f32 %v2441, %v2442
      %v2444 = vsel %vm296, %v2362, 0.0
      %v2445 = vadd.f32 %v2443, %v2444
      %v2446 = vsel %vm296, %v2363, 0.0
      %v2447 = vadd.f32 %v2445, %v2446
      %v2448 = vsel %vm296, %v2364, 0.0
      %v2449 = vadd.f32 %v2447, %v2448
      %v2450 = vsel %vm296, %v2365, 0.0
      %v2451 = vadd.f32 %v2449, %v2450
      %v2452 = vsel %vm296, %v2366, 0.0
      %v2453 = vadd.f32 %v2451, %v2452
      %v2454 = vsel %vm296, %v2367, 0.0
      %v2455 = vadd.f32 %v2453, %v2454
      %v2456 = vsel %vm296, %v2368, 0.0
      %v2457 = vadd.f32 %v2455, %v2456
      %v2458 = vsel %vm296, %v2369, 0.0
      %v2459 = vadd.f32 %v2457, %v2458
      %v2460 = vsel %vm296, %v2370, 0.0
      %v2461 = vadd.f32 %v2459, %v2460
      %v2462 = vsel %vm296, %v2371, 0.0
      %v2463 = vadd.f32 %v2461, %v2462
      %v2464 = vsel %vm296, %v2372, 0.0
      %v2465 = vadd.f32 %v2463, %v2464
      %v2466 = vsel %vm296, %v2373, 0.0
      %v2467 = vadd.f32 %v2465, %v2466
      %v2468 = vsel %vm296, %v2374, 0.0
      %v2469 = vadd.f32 %v2467, %v2468
      %v2470 = vrot.slane %v2469, 4
      %v2471 = vadd.f32 %v2469, %v2470
      %v2472 = vrot.slane %v2471, 2
      %v2473 = vadd.f32 %v2471, %v2472
      %v2474 = vrot.slane %v2473, 1
      %v2475 = vadd.f32 %v2473, %v2474
      %2476 = vst.msk [vmem:[%s292] sm:$0x1] %vm305, %v2475
      %v2477 = vmul.f32 %v2343, %v2343
      %v2478 = vmul.f32 %v2344, %v2344
      %v2479 = vmul.f32 %v2345, %v2345
      %v2480 = vmul.f32 %v2346, %v2346
      %v2481 = vmul.f32 %v2347, %v2347
      %v2482 = vmul.f32 %v2348, %v2348
      %v2483 = vmul.f32 %v2349, %v2349
      %v2484 = vmul.f32 %v2350, %v2350
      %v2485 = vmul.f32 %v2351, %v2351
      %v2486 = vmul.f32 %v2352, %v2352
      %v2487 = vmul.f32 %v2353, %v2353
      %v2488 = vmul.f32 %v2354, %v2354
      %v2489 = vmul.f32 %v2355, %v2355
      %v2490 = vmul.f32 %v2356, %v2356
      %v2491 = vmul.f32 %v2357, %v2357
      %v2492 = vmul.f32 %v2358, %v2358
      %v2493 = vmul.f32 %v2359, %v2359
      %v2494 = vmul.f32 %v2360, %v2360
      %v2495 = vmul.f32 %v2361, %v2361
      %v2496 = vmul.f32 %v2362, %v2362
      %v2497 = vmul.f32 %v2363, %v2363
      %v2498 = vmul.f32 %v2364, %v2364
      %v2499 = vmul.f32 %v2365, %v2365
      %v2500 = vmul.f32 %v2366, %v2366
      %v2501 = vmul.f32 %v2367, %v2367
      %v2502 = vmul.f32 %v2368, %v2368
      %v2503 = vmul.f32 %v2369, %v2369
      %v2504 = vmul.f32 %v2370, %v2370
      %v2505 = vmul.f32 %v2371, %v2371
      %v2506 = vmul.f32 %v2372, %v2372
      %v2507 = vmul.f32 %v2373, %v2373
      %v2508 = vmul.f32 %v2374, %v2374
      %v2509 = vsel %vm296, %v2477, 0.0
      %v2510 = vsel %vm296, %v2478, 0.0
      %v2511 = vadd.f32 %v2509, %v2510
      %v2512 = vsel %vm296, %v2479, 0.0
      %v2513 = vadd.f32 %v2511, %v2512
      %v2514 = vsel %vm296, %v2480, 0.0
      %v2515 = vadd.f32 %v2513, %v2514
      %v2516 = vsel %vm296, %v2481, 0.0
      %v2517 = vadd.f32 %v2515, %v2516
      %v2518 = vsel %vm296, %v2482, 0.0
      %v2519 = vadd.f32 %v2517, %v2518
      %v2520 = vsel %vm296, %v2483, 0.0
      %v2521 = vadd.f32 %v2519, %v2520
      %v2522 = vsel %vm296, %v2484, 0.0
      %v2523 = vadd.f32 %v2521, %v2522
      %v2524 = vsel %vm296, %v2485, 0.0
      %v2525 = vadd.f32 %v2523, %v2524
      %v2526 = vsel %vm296, %v2486, 0.0
      %v2527 = vadd.f32 %v2525, %v2526
      %v2528 = vsel %vm296, %v2487, 0.0
      %v2529 = vadd.f32 %v2527, %v2528
      %v2530 = vsel %vm296, %v2488, 0.0
      %v2531 = vadd.f32 %v2529, %v2530
      %v2532 = vsel %vm296, %v2489, 0.0
      %v2533 = vadd.f32 %v2531, %v2532
      %v2534 = vsel %vm296, %v2490, 0.0
      %v2535 = vadd.f32 %v2533, %v2534
      %v2536 = vsel %vm296, %v2491, 0.0
      %v2537 = vadd.f32 %v2535, %v2536
      %v2538 = vsel %vm296, %v2492, 0.0
      %v2539 = vadd.f32 %v2537, %v2538
      %v2540 = vsel %vm296, %v2493, 0.0
      %v2541 = vadd.f32 %v2539, %v2540
      %v2542 = vsel %vm296, %v2494, 0.0
      %v2543 = vadd.f32 %v2541, %v2542
      %v2544 = vsel %vm296, %v2495, 0.0
      %v2545 = vadd.f32 %v2543, %v2544
      %v2546 = vsel %vm296, %v2496, 0.0
      %v2547 = vadd.f32 %v2545, %v2546
      %v2548 = vsel %vm296, %v2497, 0.0
      %v2549 = vadd.f32 %v2547, %v2548
      %v2550 = vsel %vm296, %v2498, 0.0
      %v2551 = vadd.f32 %v2549, %v2550
      %v2552 = vsel %vm296, %v2499, 0.0
      %v2553 = vadd.f32 %v2551, %v2552
      %v2554 = vsel %vm296, %v2500, 0.0
      %v2555 = vadd.f32 %v2553, %v2554
      %v2556 = vsel %vm296, %v2501, 0.0
      %v2557 = vadd.f32 %v2555, %v2556
      %v2558 = vsel %vm296, %v2502, 0.0
      %v2559 = vadd.f32 %v2557, %v2558
      %v2560 = vsel %vm296, %v2503, 0.0
      %v2561 = vadd.f32 %v2559, %v2560
      %v2562 = vsel %vm296, %v2504, 0.0
      %v2563 = vadd.f32 %v2561, %v2562
      %v2564 = vsel %vm296, %v2505, 0.0
      %v2565 = vadd.f32 %v2563, %v2564
      %v2566 = vsel %vm296, %v2506, 0.0
      %v2567 = vadd.f32 %v2565, %v2566
      %v2568 = vsel %vm296, %v2507, 0.0
      %v2569 = vadd.f32 %v2567, %v2568
      %v2570 = vsel %vm296, %v2508, 0.0
      %v2571 = vadd.f32 %v2569, %v2570
      %v2572 = vrot.slane %v2571, 4
      %v2573 = vadd.f32 %v2571, %v2572
      %v2574 = vrot.slane %v2573, 2
      %v2575 = vadd.f32 %v2573, %v2574
      %v2576 = vrot.slane %v2575, 1
      %v2577 = vadd.f32 %v2575, %v2576
      %2578 = vst.msk [vmem:[%s295] sm:$0x1] %vm305, %v2577
      %p2579 = scmp.lt.s32.totalorder %s19, 1
      %s2580 = scalar_select %p2579, %s19, 1
      %s2581 = smul.addr %s2580, 32
      %s2582 = smul.addr %s2581, 8
      %s2583 = scalar_lea.vmem %s5, %s2582
      %p2584 = scmp.lt.s32.totalorder %s19, 1
      %s2585 = scalar_select %p2584, %s19, 1
      %s2586 = scalar_lea.vmem %s6, %s2585
      %p2587 = scmp.lt.s32.totalorder %s19, 1
      %s2588 = scalar_select %p2587, %s19, 1
      %s2589 = scalar_lea.vmem %s7, %s2588
      // Predicated region
      $region41: #{block_forward.4} parent=39 // pred_check
        %p2590 = pneg %p147
      $region42: #{block_forward.4} parent=39 // pred_check_branch
        %2592 = sbr.rel (%p2590) target = $region44
      $region43: #{block_forward.4} parent=39 // pred_region
        _
      $region44: #{block_forward.4} parent=39 // pred_fallthru
        _
      // Predicated region
      $region45: #{block_forward.4} parent=39 // pred_check
        %p2593 = pneg %p173
      $region46: #{block_forward.4} parent=39 // pred_check_branch
        %2595 = sbr.rel (%p2593) target = $region48
      $region47: #{block_forward.4} parent=39 // pred_region
        _
      $region48: #{block_forward.4} parent=39 // pred_fallthru
        _
      // Predicated region
      $region49: #{block_forward.4} parent=39 // pred_check
        %p2596 = pneg %p199
      $region50: #{block_forward.4} parent=39 // pred_check_branch
        %2598 = sbr.rel (%p2596) target = $region52
      $region51: #{block_forward.4} parent=39 // pred_region
        _
      $region52: #{block_forward.4} parent=39 // pred_fallthru
        _
    $region40: #{block_forward.4} parent=5 // pred_fallthru
      _
    %p2599 = scmp.le.s32.totalorder 2, %s14
    // Predicated region
    $region53: #{block_forward.4} parent=5 // pred_check
      %p2600 = pneg %p2599
    $region54: #{block_forward.4} parent=5 // pred_check_branch
      %2602 = sbr.rel (%p2600) target = $region56
    $region55: #{block_forward.4} parent=5 // pred_region
      %s2603 = ssub.s32 %s14, 2
      // Predicated region
      $region57: #{block_forward.4} parent=55 // pred_check
        %p2604 = pneg %p153
      $region58: #{block_forward.4} parent=55 // pred_check_branch
        %2606 = sbr.rel (%p2604) target = $region60
      $region59: #{block_forward.4} parent=55 // pred_region
        %p2607 = scmp.lt.s32.totalorder %s20, 1
        %s2608 = scalar_select %p2607, %s20, 1
        %s2609 = smul.addr %s2608, 32
        %s2610 = smul.addr %s2609, 8
        %s2611 = scalar_lea.vmem %s5, %s2610
      $region60: #{block_forward.4} parent=55 // pred_fallthru
        _
      // Predicated region
      $region61: #{block_forward.4} parent=55 // pred_check
        %p2612 = pneg %p179
      $region62: #{block_forward.4} parent=55 // pred_check_branch
        %2614 = sbr.rel (%p2612) target = $region64
      $region63: #{block_forward.4} parent=55 // pred_region
        %p2615 = scmp.lt.s32.totalorder %s20, 1
        %s2616 = scalar_select %p2615, %s20, 1
        %s2617 = scalar_lea.vmem %s6, %s2616
      $region64: #{block_forward.4} parent=55 // pred_fallthru
        _
      // Predicated region
      $region65: #{block_forward.4} parent=55 // pred_check
        %p2618 = pneg %p205
      $region66: #{block_forward.4} parent=55 // pred_check_branch
        %2620 = sbr.rel (%p2618) target = $region68
      $region67: #{block_forward.4} parent=55 // pred_region
        %p2621 = scmp.lt.s32.totalorder %s20, 1
        %s2622 = scalar_select %p2621, %s20, 1
        %s2623 = scalar_lea.vmem %s7, %s2622
      $region68: #{block_forward.4} parent=55 // pred_fallthru
        _
    $region56: #{block_forward.4} parent=5 // pred_fallthru
      _
  $region6: #{block_forward.4} parent=0 // loop_footer
    %s18 = sadd.s32 1, %s14
  $region7: #{block_forward.4} parent=0 // loop_footer_branch
    %13 = sbr.rel target = $region3
  $region8: #{block_forward.4} parent=0 // loop_exit
    _

</llo_original>
